<compile_context>
chip_gen: v6e
topology: v6e:2x2x1
jax: 0.10.0
libtpu: 0.0.40
codegen_flags: <defaults>
</compile_context>

<pallas_src>
import functools
import math

import jax
import jax.numpy as jnp
from jax import lax
from jax.experimental import pallas as pl
from jax.experimental.pallas import tpu as pltpu


# ---------------------------------------------------------------------------
# Helpers
# ---------------------------------------------------------------------------

def _pick_row_tile(n, target=256):
    """Largest multiple-of-8 row tile <= target dividing n; prefer >=2 grid
    steps (v7x has 2 TensorCores sharded over parallel grid axes)."""
    if n <= 8 or n % 8:
        return n                         # tiny / awkward n -> one full block
    t = min(target, n)
    t -= t % 8
    while n % t:
        t -= 8
    if n // t == 1 and n >= 16:
        half = (n // 2) - ((n // 2) % 8)
        if half >= 8 and n % half == 0:
            t = half
    return t


def _layernorm(x, a, b, eps):
    # torch.std: unbiased (divide by D-1); eps added to std (not variance).
    d = x.shape[-1]
    mean = jnp.mean(x, axis=-1, keepdims=True)
    diff = x - mean
    std = jnp.sqrt(jnp.sum(diff * diff, axis=-1, keepdims=True) / (d - 1))
    return diff * (a / (std + eps)) + b


# ---------------------------------------------------------------------------
# Kernels
# ---------------------------------------------------------------------------

def _ln_qkv_kernel(x_ref, ab_ref, wq_ref, bq_ref, wk_ref, bk_ref, wv_ref, bv_ref,
                   q_ref, k_ref, v_ref, *, eps):
    # LN on the row tile in VMEM, then three MXU dots (bf16 in, f32 accum).
    xn = _layernorm(x_ref[...], ab_ref[0], ab_ref[1], eps).astype(jnp.bfloat16)
    q_ref[...] = jnp.dot(xn, wq_ref[...], preferred_element_type=jnp.float32) + bq_ref[...]
    k_ref[...] = jnp.dot(xn, wk_ref[...], preferred_element_type=jnp.float32) + bk_ref[...]
    v_ref[...] = jnp.dot(xn, wv_ref[...], preferred_element_type=jnp.float32) + bv_ref[...]


def _ln_linear_kernel(x_ref, ab_ref, w_ref, b_ref, o_ref, *, eps, relu):
    xn = _layernorm(x_ref[...], ab_ref[0], ab_ref[1], eps).astype(jnp.bfloat16)
    y = jnp.dot(xn, w_ref[...], preferred_element_type=jnp.float32) + b_ref[...]
    if relu:
        y = jnp.maximum(y, 0.0)
    o_ref[...] = y


def _kv_proj_kernel(x_ref, wk_ref, bk_ref, wv_ref, bv_ref, k_ref, v_ref):
    xb = x_ref[...].astype(jnp.bfloat16)
    k_ref[...] = jnp.dot(xb, wk_ref[...], preferred_element_type=jnp.float32) + bk_ref[...]
    v_ref[...] = jnp.dot(xb, wv_ref[...], preferred_element_type=jnp.float32) + bv_ref[...]


def _linear_residual_kernel(x_ref, w_ref, b_ref, r_ref, o_ref):
    y = jnp.dot(x_ref[...].astype(jnp.bfloat16), w_ref[...],
                preferred_element_type=jnp.float32) + b_ref[...]
    o_ref[...] = y + r_ref[...]


def _attention_kernel(q_ref, k_ref, v_ref, m_ref, o_ref, *, h, dk, scale):
    # q_ref: (1, Sq, d); k/v_ref: (1, Sk, d); m_ref: (1, 1, mq, Sk), mq in {1, Sq}.
    masked = m_ref[0, 0] == 0                      # (mq, Sk) -> broadcasts over heads/rows
    neg = jnp.float32(-1e9)
    for head in range(h):                          # unrolled; all heads stay in VMEM
        sl = slice(head * dk, (head + 1) * dk)
        q = (q_ref[0, :, sl] * scale).astype(jnp.bfloat16)   # scale folded into q
        k = k_ref[0, :, sl].astype(jnp.bfloat16)
        v = v_ref[0, :, sl].astype(jnp.bfloat16)
        s = lax.dot_general(q, k, (((1,), (1,)), ((), ())),  # q @ k^T, f32 accum
                            preferred_element_type=jnp.float32)
        s = jnp.where(masked, neg, s)
        s = s - jnp.max(s, axis=-1, keepdims=True)
        p = jnp.exp(s)
        inv = pl.reciprocal(jnp.sum(p, axis=-1, keepdims=True))
        ctx = jnp.dot(p.astype(jnp.bfloat16), v, preferred_element_type=jnp.float32)
        o_ref[0, :, sl] = ctx * inv


# ---------------------------------------------------------------------------
# Wrappers
# ---------------------------------------------------------------------------

_PARALLEL_1D = pltpu.CompilerParams(dimension_semantics=("parallel",))


def ln_qkv_projection(x2d, alpha, beta, p, *, eps=1e-6, row_tile=256):
    n, d = x2d.shape
    tm = _pick_row_tile(n, row_tile)
    ab = jnp.concatenate([jnp.ravel(alpha), jnp.ravel(beta)]).astype(jnp.float32)
    row_in = pl.BlockSpec((tm, d), lambda i: (i, 0))
    w_spec = pl.BlockSpec((d, d), lambda i: (0, 0))      # resident across row tiles
    b_spec = pl.BlockSpec((1, d), lambda i: (0, 0))
    out_sd = jax.ShapeDtypeStruct((n, d), jnp.float32)
    return pl.pallas_call(
        functools.partial(_ln_qkv_kernel, eps=eps),
        out_shape=(out_sd, out_sd, out_sd),
        grid=(n // tm,),
        in_specs=[row_in,
                  pl.BlockSpec(memory_space=pltpu.MemorySpace.SMEM),
                  w_spec, b_spec, w_spec, b_spec, w_spec, b_spec],
        out_specs=(row_in, row_in, row_in),
        compiler_params=_PARALLEL_1D,
    )(x2d, ab,
      p["wq"].astype(jnp.bfloat16), p["bq"].reshape(1, d).astype(jnp.float32),
      p["wk"].astype(jnp.bfloat16), p["bk"].reshape(1, d).astype(jnp.float32),
      p["wv"].astype(jnp.bfloat16), p["bv"].reshape(1, d).astype(jnp.float32))


def ln_linear(x2d, alpha, beta, w, b, *, relu=False, eps=1e-6, row_tile=256):
    n, d_in = x2d.shape
    d_out = w.shape[1]
    tm = _pick_row_tile(n, row_tile)
    ab = jnp.concatenate([jnp.ravel(alpha), jnp.ravel(beta)]).astype(jnp.float32)
    return pl.pallas_call(
        functools.partial(_ln_linear_kernel, eps=eps, relu=relu),
        out_shape=jax.ShapeDtypeStruct((n, d_out), jnp.float32),
        grid=(n // tm,),
        in_specs=[pl.BlockSpec((tm, d_in), lambda i: (i, 0)),
                  pl.BlockSpec(memory_space=pltpu.MemorySpace.SMEM),
                  pl.BlockSpec((d_in, d_out), lambda i: (0, 0)),
                  pl.BlockSpec((1, d_out), lambda i: (0, 0))],
        out_specs=pl.BlockSpec((tm, d_out), lambda i: (i, 0)),
        compiler_params=_PARALLEL_1D,
    )(x2d, ab, w.astype(jnp.bfloat16), b.reshape(1, d_out).astype(jnp.float32))


def kv_projection(x2d, wk, bk, wv, bv, *, row_tile=256):
    n, d_in = x2d.shape
    d_out = wk.shape[1]
    tm = _pick_row_tile(n, row_tile)
    w_spec = pl.BlockSpec((d_in, d_out), lambda i: (0, 0))
    b_spec = pl.BlockSpec((1, d_out), lambda i: (0, 0))
    row_out = pl.BlockSpec((tm, d_out), lambda i: (i, 0))
    out_sd = jax.ShapeDtypeStruct((n, d_out), jnp.float32)
    return pl.pallas_call(
        _kv_proj_kernel,
        out_shape=(out_sd, out_sd),
        grid=(n // tm,),
        in_specs=[pl.BlockSpec((tm, d_in), lambda i: (i, 0)),
                  w_spec, b_spec, w_spec, b_spec],
        out_specs=(row_out, row_out),
        compiler_params=_PARALLEL_1D,
    )(x2d, wk.astype(jnp.bfloat16), bk.reshape(1, d_out).astype(jnp.float32),
      wv.astype(jnp.bfloat16), bv.reshape(1, d_out).astype(jnp.float32))


def linear_residual(x2d, w, b, residual2d, *, row_tile=256):
    n, d_in = x2d.shape
    d_out = w.shape[1]
    tm = _pick_row_tile(n, row_tile)
    return pl.pallas_call(
        _linear_residual_kernel,
        out_shape=jax.ShapeDtypeStruct((n, d_out), jnp.float32),
        grid=(n // tm,),
        in_specs=[pl.BlockSpec((tm, d_in), lambda i: (i, 0)),
                  pl.BlockSpec((d_in, d_out), lambda i: (0, 0)),
                  pl.BlockSpec((1, d_out), lambda i: (0, 0)),
                  pl.BlockSpec((tm, d_out), lambda i: (i, 0))],
        out_specs=pl.BlockSpec((tm, d_out), lambda i: (i, 0)),
        compiler_params=_PARALLEL_1D,
    )(x2d, w.astype(jnp.bfloat16), b.reshape(1, d_out).astype(jnp.float32), residual2d)


def attention(q3, k3, v3, mask, *, h):
    b, sq, d = q3.shape
    sk = k3.shape[1]
    dk = d // h
    if mask is None:
        mask = jnp.ones((1, 1, 1, sk), jnp.int32)
    mask = mask.astype(jnp.int32)
    mb, mh, mq, mk = mask.shape
    assert mh == 1 and mk == sk and mq in (1, sq) and mb in (1, b), mask.shape
    # Broadcast axes collapsed via index_map; (B*h, Sq, Sk) mask never materialized.
    mask_map = (lambda i: (i, 0, 0, 0)) if mb == b else (lambda i: (0, 0, 0, 0))
    return pl.pallas_call(
        functools.partial(_attention_kernel, h=h, dk=dk, scale=1.0 / math.sqrt(dk)),
        out_shape=jax.ShapeDtypeStruct((b, sq, d), jnp.float32),
        grid=(b,),
        in_specs=[pl.BlockSpec((1, sq, d), lambda i: (i, 0, 0)),
                  pl.BlockSpec((1, sk, d), lambda i: (i, 0, 0)),
                  pl.BlockSpec((1, sk, d), lambda i: (i, 0, 0)),
                  pl.BlockSpec((1, 1, mq, sk), mask_map)],
        out_specs=pl.BlockSpec((1, sq, d), lambda i: (i, 0, 0)),
        compiler_params=pltpu.CompilerParams(dimension_semantics=("parallel",)),
    )(q3, k3, v3, mask)


def decoder_block(x, enc_out, enc_mask, dec_mask, params, *, h):
    b, s, d = x.shape
    s_enc = enc_out.shape[1]
    n = b * s
    x2 = x.reshape(n, d).astype(jnp.float32)
    enc2 = enc_out.reshape(b * s_enc, d).astype(jnp.float32)

    # 1) x = x + SelfAttention(LN1(x), dec_mask)
    sa = params["self_attn"]
    q, k, v = ln_qkv_projection(x2, params["ln1_alpha"], params["ln1_beta"], sa)
    ctx = attention(q.reshape(b, s, d), k.reshape(b, s, d), v.reshape(b, s, d),
                    dec_mask, h=h)
    x2 = linear_residual(ctx.reshape(n, d), sa["wo"], sa["bo"], x2)

    # 2) x = x + CrossAttention(LN2(x), enc_out, enc_mask)
    ca = params["cross_attn"]
    qc = ln_linear(x2, params["ln2_alpha"], params["ln2_beta"], ca["wq"], ca["bq"])
    kc, vc = kv_projection(enc2, ca["wk"], ca["bk"], ca["wv"], ca["bv"])
    ctx = attention(qc.reshape(b, s, d), kc.reshape(b, s_enc, d),
                    vc.reshape(b, s_enc, d), enc_mask, h=h)
    x2 = linear_residual(ctx.reshape(n, d), ca["wo"], ca["bo"], x2)

    # 3) x = x + FeedForward(LN3(x))
    f = params["ffn"]
    hdn = ln_linear(x2, params["ln3_alpha"], params["ln3_beta"],
                    f["w1"], f["b1"], relu=True)
    x2 = linear_residual(hdn, f["w2"], f["b2"], x2)
    return x2.reshape(b, s, d)


# ---------------------------------------------------------------------------
# Pure-JAX reference (mirrors the PyTorch math, f32/HIGHEST precision)
# ---------------------------------------------------------------------------

_P = lax.Precision.HIGHEST


def _ref_layernorm(x, alpha, beta, eps=1e-6):
    mean = x.mean(axis=-1, keepdims=True)
    std = jnp.sqrt(((x - mean) ** 2).sum(axis=-1, keepdims=True) / (x.shape[-1] - 1))
    return alpha * (x - mean) / (std + eps) + beta


def _ref_mha(q, k, v, mask, p, h):
    b, sq, d = q.shape
    sk = k.shape[1]
    dk = d // h
    lin = lambda a, w, bias: jnp.matmul(a, w, precision=_P) + bias
    qh = jnp.transpose(lin(q, p["wq"], p["bq"]).reshape(b, sq, h, dk), (0, 2, 1, 3))
    kh = jnp.transpose(lin(k, p["wk"], p["bk"]).reshape(b, sk, h, dk), (0, 2, 1, 3))
    vh = jnp.transpose(lin(v, p["wv"], p["bv"]).reshape(b, sk, h, dk), (0, 2, 1, 3))
    s = jnp.matmul(qh, jnp.swapaxes(kh, -1, -2), precision=_P) / math.sqrt(dk)
    s = jnp.where(mask == 0, -1e9, s)
    a = jax.nn.softmax(s, axis=-1)
    ctx = jnp.transpose(jnp.matmul(a, vh, precision=_P), (0, 2, 1, 3)).reshape(b, sq, d)
    return lin(ctx, p["wo"], p["bo"])


def _ref_decoder_block(x, enc_out, enc_mask, dec_mask, params, h):
    n1 = _ref_layernorm(x, params["ln1_alpha"], params["ln1_beta"])
    x = x + _ref_mha(n1, n1, n1, dec_mask, params["self_attn"], h)
    n2 = _ref_layernorm(x, params["ln2_alpha"], params["ln2_beta"])
    x = x + _ref_mha(n2, enc_out, enc_out, enc_mask, params["cross_attn"], h)
    n3 = _ref_layernorm(x, params["ln3_alpha"], params["ln3_beta"])
    f = params["ffn"]
    hid = jnp.maximum(jnp.matmul(n3, f["w1"], precision=_P) + f["b1"], 0.0)
    return x + jnp.matmul(hid, f["w2"], precision=_P) + f["b2"]


# ---------------------------------------------------------------------------
# Demo / correctness check
# ---------------------------------------------------------------------------

if __name__ == "__main__":
    B, S_dec, S_enc = 2, 8, 8
    d_model, d_ff, h = 64, 128, 4

    keys = list(jax.random.split(jax.random.PRNGKey(0), 40))
    _kit = iter(keys)
    nk = lambda: next(_kit)

    def make_linear(din, dout):
        w = jax.random.normal(nk(), (din, dout), jnp.float32) / math.sqrt(din)
        b = jax.random.normal(nk(), (dout,), jnp.float32) * 0.02
        return w, b

    def make_attn():
        wq, bq = make_linear(d_model, d_model)
        wk, bk = make_linear(d_model, d_model)
        wv, bv = make_linear(d_model, d_model)
        wo, bo = make_linear(d_model, d_model)
        return dict(wq=wq, bq=bq, wk=wk, bk=bk, wv=wv, bv=bv, wo=wo, bo=bo)

    def make_ln():
        alpha = 1.0 + 0.1 * jax.random.normal(nk(), (1,), jnp.float32)
        beta = 0.1 * jax.random.normal(nk(), (1,), jnp.float32)
        return alpha, beta

    w1, b1 = make_linear(d_model, d_ff)
    w2, b2 = make_linear(d_ff, d_model)
    ln1a, ln1b = make_ln()
    ln2a, ln2b = make_ln()
    ln3a, ln3b = make_ln()

    params = {
        "ln1_alpha": ln1a, "ln1_beta": ln1b,
        "ln2_alpha": ln2a, "ln2_beta": ln2b,
        "ln3_alpha": ln3a, "ln3_beta": ln3b,
        "self_attn": make_attn(),
        "cross_attn": make_attn(),
        "ffn": dict(w1=w1, b1=b1, w2=w2, b2=b2),
    }

    x = jax.random.normal(nk(), (B, S_dec, d_model), jnp.float32)
    enc_out = jax.random.normal(nk(), (B, S_enc, d_model), jnp.float32)

    # Causal decoder mask (1,1,Sq,Sq) and encoder padding mask (B,1,1,Sk).
    dec_mask = jnp.tril(jnp.ones((S_dec, S_dec), jnp.int32))[None, None]
    enc_lens = jnp.array([S_enc, S_enc - 3], jnp.int32)
    enc_mask = (jnp.arange(S_enc)[None, :] < enc_lens[:, None]
                ).astype(jnp.int32)[:, None, None, :]

    fwd = jax.jit(functools.partial(decoder_block, h=h))
    out = jax.block_until_ready(fwd(x, enc_out, enc_mask, dec_mask, params))

    ref = _ref_decoder_block(x, enc_out, enc_mask, dec_mask, params, h)

    assert out.shape == (B, S_dec, d_model)
    assert out.dtype == jnp.float32
    # Kernels use bf16 MXU inputs with f32 accumulation; compare against the
    # full-f32 reference with a relative-L2 tolerance.
    rel = float(jnp.linalg.norm(out - ref) / jnp.linalg.norm(ref))
    max_abs = float(jnp.max(jnp.abs(out - ref)))
    assert rel < 5e-2, (rel, max_abs)

    print("KERNEL_OK")
</pallas_src>

<mosaic_0001>
module attributes {stable_mosaic.version = 11 : i64} {
  func.func @_ln_qkv_kernel(%arg0: i32, %arg1: memref<8x64xf32, #tpu.memory_space<vmem>>, %arg2: memref<2xf32, #tpu.memory_space<smem>>, %arg3: memref<64x64xbf16, #tpu.memory_space<vmem>>, %arg4: memref<1x64xf32, #tpu.memory_space<vmem>>, %arg5: memref<64x64xbf16, #tpu.memory_space<vmem>>, %arg6: memref<1x64xf32, #tpu.memory_space<vmem>>, %arg7: memref<64x64xbf16, #tpu.memory_space<vmem>>, %arg8: memref<1x64xf32, #tpu.memory_space<vmem>>, %arg9: memref<8x64xf32, #tpu.memory_space<vmem>>, %arg10: memref<8x64xf32, #tpu.memory_space<vmem>>, %arg11: memref<8x64xf32, #tpu.memory_space<vmem>>) attributes {dimension_semantics = [#tpu.dimension_semantics<parallel>], iteration_bounds = array<i64: 2>, scalar_prefetch = 0 : i64, scratch_operands = 0 : i64, tpu.core_type = #tpu.core_type<tc>, window_params = [{transform_indices = @transform_0, window_bounds = array<i64: 8, 64>}, {transform_indices = @transform_1, window_bounds = array<i64: 2>}, {pipeline_mode = #tpu.pipeline_mode<synchronous>, transform_indices = @transform_2, window_bounds = array<i64: 64, 64>}, {pipeline_mode = #tpu.pipeline_mode<synchronous>, transform_indices = @transform_3, window_bounds = array<i64: 1, 64>}, {pipeline_mode = #tpu.pipeline_mode<synchronous>, transform_indices = @transform_4, window_bounds = array<i64: 64, 64>}, {pipeline_mode = #tpu.pipeline_mode<synchronous>, transform_indices = @transform_5, window_bounds = array<i64: 1, 64>}, {pipeline_mode = #tpu.pipeline_mode<synchronous>, transform_indices = @transform_6, window_bounds = array<i64: 64, 64>}, {pipeline_mode = #tpu.pipeline_mode<synchronous>, transform_indices = @transform_7, window_bounds = array<i64: 1, 64>}, {transform_indices = @transform_8, window_bounds = array<i64: 8, 64>}, {transform_indices = @transform_9, window_bounds = array<i64: 8, 64>}, {transform_indices = @transform_10, window_bounds = array<i64: 8, 64>}]} {
    %c0 = arith.constant 0 : index
    %c0_0 = arith.constant 0 : index
    %0 = vector.load %arg1[%c0, %c0_0] : memref<8x64xf32, #tpu.memory_space<vmem>>, vector<8x64xf32>
    %c0_1 = arith.constant 0 : index
    %1 = memref.load %arg2[%c0_1] : memref<2xf32, #tpu.memory_space<smem>>
    %c1 = arith.constant 1 : index
    %2 = memref.load %arg2[%c1] : memref<2xf32, #tpu.memory_space<smem>>
    %cst = arith.constant dense<0.000000e+00> : vector<8xf32>
    %3 = vector.multi_reduction <add>, %0, %cst [1] : vector<8x64xf32> to vector<8xf32>
    %4 = vector.shape_cast %3 : vector<8xf32> to vector<8x1xf32>
    %cst_2 = arith.constant 6.400000e+01 : f32
    %5 = vector.broadcast %cst_2 : f32 to vector<8x1xf32>
    %6 = arith.divf %4, %5 : vector<8x1xf32>
    %7 = vector.broadcast %6 : vector<8x1xf32> to vector<8x64xf32>
    %8 = arith.subf %0, %7 : vector<8x64xf32>
    %9 = arith.mulf %8, %8 : vector<8x64xf32>
    %cst_3 = arith.constant dense<0.000000e+00> : vector<8xf32>
    %10 = vector.multi_reduction <add>, %9, %cst_3 [1] : vector<8x64xf32> to vector<8xf32>
    %11 = vector.shape_cast %10 : vector<8xf32> to vector<8x1xf32>
    %cst_4 = arith.constant 6.300000e+01 : f32
    %12 = vector.broadcast %cst_4 : f32 to vector<8x1xf32>
    %13 = arith.divf %11, %12 : vector<8x1xf32>
    %14 = math.sqrt %13 : vector<8x1xf32>
    %cst_5 = arith.constant 9.99999997E-7 : f32
    %15 = vector.broadcast %cst_5 : f32 to vector<8x1xf32>
    %16 = arith.addf %14, %15 : vector<8x1xf32>
    %17 = vector.broadcast %1 : f32 to vector<8x1xf32>
    %18 = arith.divf %17, %16 : vector<8x1xf32>
    %19 = vector.broadcast %18 : vector<8x1xf32> to vector<8x64xf32>
    %20 = arith.mulf %8, %19 : vector<8x64xf32>
    %21 = vector.broadcast %2 : f32 to vector<8x64xf32>
    %22 = arith.addf %20, %21 : vector<8x64xf32>
    %23 = arith.truncf %22 : vector<8x64xf32> to vector<8x64xbf16>
    %c0_6 = arith.constant 0 : index
    %c0_7 = arith.constant 0 : index
    %24 = vector.load %arg3[%c0_6, %c0_7] : memref<64x64xbf16, #tpu.memory_space<vmem>>, vector<64x64xbf16>
    %cst_8 = arith.constant dense<0.000000e+00> : vector<8x64xf32>
    %25 = tpu.matmul %23, %24, %cst_8 {dimension_numbers = #tpu.dot_dimension_numbers<[1], [0], [0], [1], [0, 0, 1, 1], [], []>} : vector<8x64xbf16>, vector<64x64xbf16>, vector<8x64xf32> -> vector<8x64xf32>
    %c0_9 = arith.constant 0 : index
    %c0_10 = arith.constant 0 : index
    %26 = vector.load %arg4[%c0_9, %c0_10] : memref<1x64xf32, #tpu.memory_space<vmem>>, vector<1x64xf32>
    %27 = vector.broadcast %26 : vector<1x64xf32> to vector<8x64xf32>
    %28 = arith.addf %25, %27 : vector<8x64xf32>
    %c0_11 = arith.constant 0 : index
    %c0_12 = arith.constant 0 : index
    %29 = vector.load %arg9[%c0_11, %c0_12] : memref<8x64xf32, #tpu.memory_space<vmem>>, vector<8x64xf32>
    tpu.vector_store %arg9[%c0_11, %c0_12], %28 {strides = array<i32>} : memref<8x64xf32, #tpu.memory_space<vmem>>, vector<8x64xf32>,
    %c0_13 = arith.constant 0 : index
    %c0_14 = arith.constant 0 : index
    %30 = vector.load %arg5[%c0_13, %c0_14] : memref<64x64xbf16, #tpu.memory_space<vmem>>, vector<64x64xbf16>
    %cst_15 = arith.constant dense<0.000000e+00> : vector<8x64xf32>
    %31 = tpu.matmul %23, %30, %cst_15 {dimension_numbers = #tpu.dot_dimension_numbers<[1], [0], [0], [1], [0, 0, 1, 1], [], []>} : vector<8x64xbf16>, vector<64x64xbf16>, vector<8x64xf32> -> vector<8x64xf32>
    %c0_16 = arith.constant 0 : index
    %c0_17 = arith.constant 0 : index
    %32 = vector.load %arg6[%c0_16, %c0_17] : memref<1x64xf32, #tpu.memory_space<vmem>>, vector<1x64xf32>
    %33 = vector.broadcast %32 : vector<1x64xf32> to vector<8x64xf32>
    %34 = arith.addf %31, %33 : vector<8x64xf32>
    %c0_18 = arith.constant 0 : index
    %c0_19 = arith.constant 0 : index
    %35 = vector.load %arg10[%c0_18, %c0_19] : memref<8x64xf32, #tpu.memory_space<vmem>>, vector<8x64xf32>
    tpu.vector_store %arg10[%c0_18, %c0_19], %34 {strides = array<i32>} : memref<8x64xf32, #tpu.memory_space<vmem>>, vector<8x64xf32>,
    %c0_20 = arith.constant 0 : index
    %c0_21 = arith.constant 0 : index
    %36 = vector.load %arg7[%c0_20, %c0_21] : memref<64x64xbf16, #tpu.memory_space<vmem>>, vector<64x64xbf16>
    %cst_22 = arith.constant dense<0.000000e+00> : vector<8x64xf32>
    %37 = tpu.matmul %23, %36, %cst_22 {dimension_numbers = #tpu.dot_dimension_numbers<[1], [0], [0], [1], [0, 0, 1, 1], [], []>} : vector<8x64xbf16>, vector<64x64xbf16>, vector<8x64xf32> -> vector<8x64xf32>
    %c0_23 = arith.constant 0 : index
    %c0_24 = arith.constant 0 : index
    %38 = vector.load %arg8[%c0_23, %c0_24] : memref<1x64xf32, #tpu.memory_space<vmem>>, vector<1x64xf32>
    %39 = vector.broadcast %38 : vector<1x64xf32> to vector<8x64xf32>
    %40 = arith.addf %37, %39 : vector<8x64xf32>
    %c0_25 = arith.constant 0 : index
    %c0_26 = arith.constant 0 : index
    %41 = vector.load %arg11[%c0_25, %c0_26] : memref<8x64xf32, #tpu.memory_space<vmem>>, vector<8x64xf32>
    tpu.vector_store %arg11[%c0_25, %c0_26], %40 {strides = array<i32>} : memref<8x64xf32, #tpu.memory_space<vmem>>, vector<8x64xf32>,
    return
  }
  func.func @transform_0(%arg0: i32) -> (i32, i32) {
    %c0_i32 = arith.constant 0 : i32
    %c0_i32_0 = arith.constant 0 : i32
    return %arg0, %c0_i32 : i32, i32
  }
  func.func @transform_1(%arg0: i32) -> i32 {
    %c0_i32 = arith.constant 0 : i32
    %c0_i32_0 = arith.constant 0 : i32
    return %c0_i32 : i32
  }
  func.func @transform_2(%arg0: i32) -> (i32, i32) {
    %c0_i32 = arith.constant 0 : i32
    %c0_i32_0 = arith.constant 0 : i32
    %c0_i32_1 = arith.constant 0 : i32
    return %c0_i32, %c0_i32_0 : i32, i32
  }
  func.func @transform_3(%arg0: i32) -> (i32, i32) {
    %c0_i32 = arith.constant 0 : i32
    %c0_i32_0 = arith.constant 0 : i32
    %c0_i32_1 = arith.constant 0 : i32
    return %c0_i32, %c0_i32_0 : i32, i32
  }
  func.func @transform_4(%arg0: i32) -> (i32, i32) {
    %c0_i32 = arith.constant 0 : i32
    %c0_i32_0 = arith.constant 0 : i32
    %c0_i32_1 = arith.constant 0 : i32
    return %c0_i32, %c0_i32_0 : i32, i32
  }
  func.func @transform_5(%arg0: i32) -> (i32, i32) {
    %c0_i32 = arith.constant 0 : i32
    %c0_i32_0 = arith.constant 0 : i32
    %c0_i32_1 = arith.constant 0 : i32
    return %c0_i32, %c0_i32_0 : i32, i32
  }
  func.func @transform_6(%arg0: i32) -> (i32, i32) {
    %c0_i32 = arith.constant 0 : i32
    %c0_i32_0 = arith.constant 0 : i32
    %c0_i32_1 = arith.constant 0 : i32
    return %c0_i32, %c0_i32_0 : i32, i32
  }
  func.func @transform_7(%arg0: i32) -> (i32, i32) {
    %c0_i32 = arith.constant 0 : i32
    %c0_i32_0 = arith.constant 0 : i32
    %c0_i32_1 = arith.constant 0 : i32
    return %c0_i32, %c0_i32_0 : i32, i32
  }
  func.func @transform_8(%arg0: i32) -> (i32, i32) {
    %c0_i32 = arith.constant 0 : i32
    %c0_i32_0 = arith.constant 0 : i32
    return %arg0, %c0_i32 : i32, i32
  }
  func.func @transform_9(%arg0: i32) -> (i32, i32) {
    %c0_i32 = arith.constant 0 : i32
    %c0_i32_0 = arith.constant 0 : i32
    return %arg0, %c0_i32 : i32, i32
  }
  func.func @transform_10(%arg0: i32) -> (i32, i32) {
    %c0_i32 = arith.constant 0 : i32
    %c0_i32_0 = arith.constant 0 : i32
    return %arg0, %c0_i32 : i32, i32
  }
}

module attributes {stable_mosaic.version = 11 : i64} {
  func.func @_attention_kernel(%arg0: i32, %arg1: memref<1x8x64xf32, #tpu.memory_space<vmem>>, %arg2: memref<1x8x64xf32, #tpu.memory_space<vmem>>, %arg3: memref<1x8x64xf32, #tpu.memory_space<vmem>>, %arg4: memref<1x1x8x8xi32, #tpu.memory_space<vmem>>, %arg5: memref<1x8x64xf32, #tpu.memory_space<vmem>>) attributes {dimension_semantics = [#tpu.dimension_semantics<parallel>], iteration_bounds = array<i64: 2>, scalar_prefetch = 0 : i64, scratch_operands = 0 : i64, tpu.core_type = #tpu.core_type<tc>, window_params = [{transform_indices = @transform_0, window_bounds = array<i64: 1, 8, 64>}, {transform_indices = @transform_1, window_bounds = array<i64: 1, 8, 64>}, {transform_indices = @transform_2, window_bounds = array<i64: 1, 8, 64>}, {pipeline_mode = #tpu.pipeline_mode<synchronous>, transform_indices = @transform_3, window_bounds = array<i64: 1, 1, 8, 8>}, {transform_indices = @transform_4, window_bounds = array<i64: 1, 8, 64>}]} {
    %c0 = arith.constant 0 : index
    %c0_0 = arith.constant 0 : index
    %c0_1 = arith.constant 0 : index
    %c0_2 = arith.constant 0 : index
    %0 = vector.load %arg4[%c0, %c0_0, %c0_1, %c0_2] : memref<1x1x8x8xi32, #tpu.memory_space<vmem>>, vector<1x1x8x8xi32>
    %1 = vector.shape_cast %0 : vector<1x1x8x8xi32> to vector<8x8xi32>
    %c0_i32 = arith.constant 0 : i32
    %2 = vector.broadcast %c0_i32 : i32 to vector<8x8xi32>
    %3 = arith.cmpi eq, %1, %2 : vector<8x8xi32>
    %c0_3 = arith.constant 0 : index
    %c0_4 = arith.constant 0 : index
    %c0_5 = arith.constant 0 : index
    %4 = vector.load %arg1[%c0_3, %c0_4, %c0_5] : memref<1x8x64xf32, #tpu.memory_space<vmem>>, vector<1x8x16xf32>
    %5 = vector.shape_cast %4 : vector<1x8x16xf32> to vector<8x16xf32>
    %cst = arith.constant 2.500000e-01 : f32
    %6 = vector.broadcast %cst : f32 to vector<8x16xf32>
    %7 = arith.mulf %5, %6 : vector<8x16xf32>
    %8 = arith.truncf %7 : vector<8x16xf32> to vector<8x16xbf16>
    %c0_6 = arith.constant 0 : index
    %c0_7 = arith.constant 0 : index
    %c0_8 = arith.constant 0 : index
    %9 = vector.load %arg2[%c0_6, %c0_7, %c0_8] : memref<1x8x64xf32, #tpu.memory_space<vmem>>, vector<1x8x16xf32>
    %10 = vector.shape_cast %9 : vector<1x8x16xf32> to vector<8x16xf32>
    %11 = arith.truncf %10 : vector<8x16xf32> to vector<8x16xbf16>
    %c0_9 = arith.constant 0 : index
    %c0_10 = arith.constant 0 : index
    %c0_11 = arith.constant 0 : index
    %12 = vector.load %arg3[%c0_9, %c0_10, %c0_11] : memref<1x8x64xf32, #tpu.memory_space<vmem>>, vector<1x8x16xf32>
    %13 = vector.shape_cast %12 : vector<1x8x16xf32> to vector<8x16xf32>
    %14 = arith.truncf %13 : vector<8x16xf32> to vector<8x16xbf16>
    %cst_12 = arith.constant dense<0.000000e+00> : vector<8x8xf32>
    %15 = tpu.matmul %8, %11, %cst_12 {dimension_numbers = #tpu.dot_dimension_numbers<[1], [1], [0], [0], [0, 0, 1, 0], [], []>} : vector<8x16xbf16>, vector<8x16xbf16>, vector<8x8xf32> -> vector<8x8xf32>
    %cst_13 = arith.constant -1.000000e+09 : f32
    %16 = vector.broadcast %cst_13 : f32 to vector<8x8xf32>
    %17 = arith.select %3, %16, %15 : vector<8x8xi1>, vector<8x8xf32>
    %cst_14 = arith.constant dense<0xFF800000> : vector<8xf32>
    %18 = vector.multi_reduction <maximumf>, %17, %cst_14 [1] : vector<8x8xf32> to vector<8xf32>
    %19 = vector.shape_cast %18 : vector<8xf32> to vector<8x1xf32>
    %20 = vector.broadcast %19 : vector<8x1xf32> to vector<8x8xf32>
    %21 = arith.subf %17, %20 : vector<8x8xf32>
    %22 = math.exp %21 : vector<8x8xf32>
    %cst_15 = arith.constant dense<0.000000e+00> : vector<8xf32>
    %23 = vector.multi_reduction <add>, %22, %cst_15 [1] : vector<8x8xf32> to vector<8xf32>
    %24 = vector.shape_cast %23 : vector<8xf32> to vector<8x1xf32>
    %25 = tpu.reciprocal %24 : vector<8x1xf32> -> vector<8x1xf32>
    %26 = arith.truncf %22 : vector<8x8xf32> to vector<8x8xbf16>
    %cst_16 = arith.constant dense<0.000000e+00> : vector<8x16xf32>
    %27 = tpu.matmul %26, %14, %cst_16 {dimension_numbers = #tpu.dot_dimension_numbers<[1], [0], [0], [1], [0, 0, 1, 1], [], []>} : vector<8x8xbf16>, vector<8x16xbf16>, vector<8x16xf32> -> vector<8x16xf32>
    %28 = vector.broadcast %25 : vector<8x1xf32> to vector<8x16xf32>
    %29 = arith.mulf %27, %28 : vector<8x16xf32>
    %c0_17 = arith.constant 0 : index
    %c0_18 = arith.constant 0 : index
    %c0_19 = arith.constant 0 : index
    %30 = vector.load %arg5[%c0_17, %c0_18, %c0_19] : memref<1x8x64xf32, #tpu.memory_space<vmem>>, vector<1x8x16xf32>
    %31 = vector.shape_cast %30 : vector<1x8x16xf32> to vector<8x16xf32>
    %32 = vector.shape_cast %29 : vector<8x16xf32> to vector<1x8x16xf32>
    tpu.vector_store %arg5[%c0_17, %c0_18, %c0_19], %32 {strides = array<i32>} : memref<1x8x64xf32, #tpu.memory_space<vmem>>, vector<1x8x16xf32>,
    %c0_20 = arith.constant 0 : index
    %c0_21 = arith.constant 0 : index
    %c16 = arith.constant 16 : index
    %33 = vector.load %arg1[%c0_20, %c0_21, %c16] : memref<1x8x64xf32, #tpu.memory_space<vmem>>, vector<1x8x16xf32>
    %34 = vector.shape_cast %33 : vector<1x8x16xf32> to vector<8x16xf32>
    %cst_22 = arith.constant 2.500000e-01 : f32
    %35 = vector.broadcast %cst_22 : f32 to vector<8x16xf32>
    %36 = arith.mulf %34, %35 : vector<8x16xf32>
    %37 = arith.truncf %36 : vector<8x16xf32> to vector<8x16xbf16>
    %c0_23 = arith.constant 0 : index
    %c0_24 = arith.constant 0 : index
    %c16_25 = arith.constant 16 : index
    %38 = vector.load %arg2[%c0_23, %c0_24, %c16_25] : memref<1x8x64xf32, #tpu.memory_space<vmem>>, vector<1x8x16xf32>
    %39 = vector.shape_cast %38 : vector<1x8x16xf32> to vector<8x16xf32>
    %40 = arith.truncf %39 : vector<8x16xf32> to vector<8x16xbf16>
    %c0_26 = arith.constant 0 : index
    %c0_27 = arith.constant 0 : index
    %c16_28 = arith.constant 16 : index
    %41 = vector.load %arg3[%c0_26, %c0_27, %c16_28] : memref<1x8x64xf32, #tpu.memory_space<vmem>>, vector<1x8x16xf32>
    %42 = vector.shape_cast %41 : vector<1x8x16xf32> to vector<8x16xf32>
    %43 = arith.truncf %42 : vector<8x16xf32> to vector<8x16xbf16>
    %cst_29 = arith.constant dense<0.000000e+00> : vector<8x8xf32>
    %44 = tpu.matmul %37, %40, %cst_29 {dimension_numbers = #tpu.dot_dimension_numbers<[1], [1], [0], [0], [0, 0, 1, 0], [], []>} : vector<8x16xbf16>, vector<8x16xbf16>, vector<8x8xf32> -> vector<8x8xf32>
    %cst_30 = arith.constant -1.000000e+09 : f32
    %45 = vector.broadcast %cst_30 : f32 to vector<8x8xf32>
    %46 = arith.select %3, %45, %44 : vector<8x8xi1>, vector<8x8xf32>
    %cst_31 = arith.constant dense<0xFF800000> : vector<8xf32>
    %47 = vector.multi_reduction <maximumf>, %46, %cst_31 [1] : vector<8x8xf32> to vector<8xf32>
    %48 = vector.shape_cast %47 : vector<8xf32> to vector<8x1xf32>
    %49 = vector.broadcast %48 : vector<8x1xf32> to vector<8x8xf32>
    %50 = arith.subf %46, %49 : vector<8x8xf32>
    %51 = math.exp %50 : vector<8x8xf32>
    %cst_32 = arith.constant dense<0.000000e+00> : vector<8xf32>
    %52 = vector.multi_reduction <add>, %51, %cst_32 [1] : vector<8x8xf32> to vector<8xf32>
    %53 = vector.shape_cast %52 : vector<8xf32> to vector<8x1xf32>
    %54 = tpu.reciprocal %53 : vector<8x1xf32> -> vector<8x1xf32>
    %55 = arith.truncf %51 : vector<8x8xf32> to vector<8x8xbf16>
    %cst_33 = arith.constant dense<0.000000e+00> : vector<8x16xf32>
    %56 = tpu.matmul %55, %43, %cst_33 {dimension_numbers = #tpu.dot_dimension_numbers<[1], [0], [0], [1], [0, 0, 1, 1], [], []>} : vector<8x8xbf16>, vector<8x16xbf16>, vector<8x16xf32> -> vector<8x16xf32>
    %57 = vector.broadcast %54 : vector<8x1xf32> to vector<8x16xf32>
    %58 = arith.mulf %56, %57 : vector<8x16xf32>
    %c0_34 = arith.constant 0 : index
    %c0_35 = arith.constant 0 : index
    %c16_36 = arith.constant 16 : index
    %59 = vector.load %arg5[%c0_34, %c0_35, %c16_36] : memref<1x8x64xf32, #tpu.memory_space<vmem>>, vector<1x8x16xf32>
    %60 = vector.shape_cast %59 : vector<1x8x16xf32> to vector<8x16xf32>
    %61 = vector.shape_cast %58 : vector<8x16xf32> to vector<1x8x16xf32>
    tpu.vector_store %arg5[%c0_34, %c0_35, %c16_36], %61 {strides = array<i32>} : memref<1x8x64xf32, #tpu.memory_space<vmem>>, vector<1x8x16xf32>,
    %c0_37 = arith.constant 0 : index
    %c0_38 = arith.constant 0 : index
    %c32 = arith.constant 32 : index
    %62 = vector.load %arg1[%c0_37, %c0_38, %c32] : memref<1x8x64xf32, #tpu.memory_space<vmem>>, vector<1x8x16xf32>
    %63 = vector.shape_cast %62 : vector<1x8x16xf32> to vector<8x16xf32>
    %cst_39 = arith.constant 2.500000e-01 : f32
    %64 = vector.broadcast %cst_39 : f32 to vector<8x16xf32>
    %65 = arith.mulf %63, %64 : vector<8x16xf32>
    %66 = arith.truncf %65 : vector<8x16xf32> to vector<8x16xbf16>
    %c0_40 = arith.constant 0 : index
    %c0_41 = arith.constant 0 : index
    %c32_42 = arith.constant 32 : index
    %67 = vector.load %arg2[%c0_40, %c0_41, %c32_42] : memref<1x8x64xf32, #tpu.memory_space<vmem>>, vector<1x8x16xf32>
    %68 = vector.shape_cast %67 : vector<1x8x16xf32> to vector<8x16xf32>
    %69 = arith.truncf %68 : vector<8x16xf32> to vector<8x16xbf16>
    %c0_43 = arith.constant 0 : index
    %c0_44 = arith.constant 0 : index
    %c32_45 = arith.constant 32 : index
    %70 = vector.load %arg3[%c0_43, %c0_44, %c32_45] : memref<1x8x64xf32, #tpu.memory_space<vmem>>, vector<1x8x16xf32>
    %71 = vector.shape_cast %70 : vector<1x8x16xf32> to vector<8x16xf32>
    %72 = arith.truncf %71 : vector<8x16xf32> to vector<8x16xbf16>
    %cst_46 = arith.constant dense<0.000000e+00> : vector<8x8xf32>
    %73 = tpu.matmul %66, %69, %cst_46 {dimension_numbers = #tpu.dot_dimension_numbers<[1], [1], [0], [0], [0, 0, 1, 0], [], []>} : vector<8x16xbf16>, vector<8x16xbf16>, vector<8x8xf32> -> vector<8x8xf32>
    %cst_47 = arith.constant -1.000000e+09 : f32
    %74 = vector.broadcast %cst_47 : f32 to vector<8x8xf32>
    %75 = arith.select %3, %74, %73 : vector<8x8xi1>, vector<8x8xf32>
    %cst_48 = arith.constant dense<0xFF800000> : vector<8xf32>
    %76 = vector.multi_reduction <maximumf>, %75, %cst_48 [1] : vector<8x8xf32> to vector<8xf32>
    %77 = vector.shape_cast %76 : vector<8xf32> to vector<8x1xf32>
    %78 = vector.broadcast %77 : vector<8x1xf32> to vector<8x8xf32>
    %79 = arith.subf %75, %78 : vector<8x8xf32>
    %80 = math.exp %79 : vector<8x8xf32>
    %cst_49 = arith.constant dense<0.000000e+00> : vector<8xf32>
    %81 = vector.multi_reduction <add>, %80, %cst_49 [1] : vector<8x8xf32> to vector<8xf32>
    %82 = vector.shape_cast %81 : vector<8xf32> to vector<8x1xf32>
    %83 = tpu.reciprocal %82 : vector<8x1xf32> -> vector<8x1xf32>
    %84 = arith.truncf %80 : vector<8x8xf32> to vector<8x8xbf16>
    %cst_50 = arith.constant dense<0.000000e+00> : vector<8x16xf32>
    %85 = tpu.matmul %84, %72, %cst_50 {dimension_numbers = #tpu.dot_dimension_numbers<[1], [0], [0], [1], [0, 0, 1, 1], [], []>} : vector<8x8xbf16>, vector<8x16xbf16>, vector<8x16xf32> -> vector<8x16xf32>
    %86 = vector.broadcast %83 : vector<8x1xf32> to vector<8x16xf32>
    %87 = arith.mulf %85, %86 : vector<8x16xf32>
    %c0_51 = arith.constant 0 : index
    %c0_52 = arith.constant 0 : index
    %c32_53 = arith.constant 32 : index
    %88 = vector.load %arg5[%c0_51, %c0_52, %c32_53] : memref<1x8x64xf32, #tpu.memory_space<vmem>>, vector<1x8x16xf32>
    %89 = vector.shape_cast %88 : vector<1x8x16xf32> to vector<8x16xf32>
    %90 = vector.shape_cast %87 : vector<8x16xf32> to vector<1x8x16xf32>
    tpu.vector_store %arg5[%c0_51, %c0_52, %c32_53], %90 {strides = array<i32>} : memref<1x8x64xf32, #tpu.memory_space<vmem>>, vector<1x8x16xf32>,
    %c0_54 = arith.constant 0 : index
    %c0_55 = arith.constant 0 : index
    %c48 = arith.constant 48 : index
    %91 = vector.load %arg1[%c0_54, %c0_55, %c48] : memref<1x8x64xf32, #tpu.memory_space<vmem>>, vector<1x8x16xf32>
    %92 = vector.shape_cast %91 : vector<1x8x16xf32> to vector<8x16xf32>
    %cst_56 = arith.constant 2.500000e-01 : f32
    %93 = vector.broadcast %cst_56 : f32 to vector<8x16xf32>
    %94 = arith.mulf %92, %93 : vector<8x16xf32>
    %95 = arith.truncf %94 : vector<8x16xf32> to vector<8x16xbf16>
    %c0_57 = arith.constant 0 : index
    %c0_58 = arith.constant 0 : index
    %c48_59 = arith.constant 48 : index
    %96 = vector.load %arg2[%c0_57, %c0_58, %c48_59] : memref<1x8x64xf32, #tpu.memory_space<vmem>>, vector<1x8x16xf32>
    %97 = vector.shape_cast %96 : vector<1x8x16xf32> to vector<8x16xf32>
    %98 = arith.truncf %97 : vector<8x16xf32> to vector<8x16xbf16>
    %c0_60 = arith.constant 0 : index
    %c0_61 = arith.constant 0 : index
    %c48_62 = arith.constant 48 : index
    %99 = vector.load %arg3[%c0_60, %c0_61, %c48_62] : memref<1x8x64xf32, #tpu.memory_space<vmem>>, vector<1x8x16xf32>
    %100 = vector.shape_cast %99 : vector<1x8x16xf32> to vector<8x16xf32>
    %101 = arith.truncf %100 : vector<8x16xf32> to vector<8x16xbf16>
    %cst_63 = arith.constant dense<0.000000e+00> : vector<8x8xf32>
    %102 = tpu.matmul %95, %98, %cst_63 {dimension_numbers = #tpu.dot_dimension_numbers<[1], [1], [0], [0], [0, 0, 1, 0], [], []>} : vector<8x16xbf16>, vector<8x16xbf16>, vector<8x8xf32> -> vector<8x8xf32>
    %cst_64 = arith.constant -1.000000e+09 : f32
    %103 = vector.broadcast %cst_64 : f32 to vector<8x8xf32>
    %104 = arith.select %3, %103, %102 : vector<8x8xi1>, vector<8x8xf32>
    %cst_65 = arith.constant dense<0xFF800000> : vector<8xf32>
    %105 = vector.multi_reduction <maximumf>, %104, %cst_65 [1] : vector<8x8xf32> to vector<8xf32>
    %106 = vector.shape_cast %105 : vector<8xf32> to vector<8x1xf32>
    %107 = vector.broadcast %106 : vector<8x1xf32> to vector<8x8xf32>
    %108 = arith.subf %104, %107 : vector<8x8xf32>
    %109 = math.exp %108 : vector<8x8xf32>
    %cst_66 = arith.constant dense<0.000000e+00> : vector<8xf32>
    %110 = vector.multi_reduction <add>, %109, %cst_66 [1] : vector<8x8xf32> to vector<8xf32>
    %111 = vector.shape_cast %110 : vector<8xf32> to vector<8x1xf32>
    %112 = tpu.reciprocal %111 : vector<8x1xf32> -> vector<8x1xf32>
    %113 = arith.truncf %109 : vector<8x8xf32> to vector<8x8xbf16>
    %cst_67 = arith.constant dense<0.000000e+00> : vector<8x16xf32>
    %114 = tpu.matmul %113, %101, %cst_67 {dimension_numbers = #tpu.dot_dimension_numbers<[1], [0], [0], [1], [0, 0, 1, 1], [], []>} : vector<8x8xbf16>, vector<8x16xbf16>, vector<8x16xf32> -> vector<8x16xf32>
    %115 = vector.broadcast %112 : vector<8x1xf32> to vector<8x16xf32>
    %116 = arith.mulf %114, %115 : vector<8x16xf32>
    %c0_68 = arith.constant 0 : index
    %c0_69 = arith.constant 0 : index
    %c48_70 = arith.constant 48 : index
    %117 = vector.load %arg5[%c0_68, %c0_69, %c48_70] : memref<1x8x64xf32, #tpu.memory_space<vmem>>, vector<1x8x16xf32>
    %118 = vector.shape_cast %117 : vector<1x8x16xf32> to vector<8x16xf32>
    %119 = vector.shape_cast %116 : vector<8x16xf32> to vector<1x8x16xf32>
    tpu.vector_store %arg5[%c0_68, %c0_69, %c48_70], %119 {strides = array<i32>} : memref<1x8x64xf32, #tpu.memory_space<vmem>>, vector<1x8x16xf32>,
    return
  }
  func.func @transform_0(%arg0: i32) -> (i32, i32, i32) {
    %c0_i32 = arith.constant 0 : i32
    %c0_i32_0 = arith.constant 0 : i32
    %c0_i32_1 = arith.constant 0 : i32
    return %arg0, %c0_i32, %c0_i32_0 : i32, i32, i32
  }
  func.func @transform_1(%arg0: i32) -> (i32, i32, i32) {
    %c0_i32 = arith.constant 0 : i32
    %c0_i32_0 = arith.constant 0 : i32
    %c0_i32_1 = arith.constant 0 : i32
    return %arg0, %c0_i32, %c0_i32_0 : i32, i32, i32
  }
  func.func @transform_2(%arg0: i32) -> (i32, i32, i32) {
    %c0_i32 = arith.constant 0 : i32
    %c0_i32_0 = arith.constant 0 : i32
    %c0_i32_1 = arith.constant 0 : i32
    return %arg0, %c0_i32, %c0_i32_0 : i32, i32, i32
  }
  func.func @transform_3(%arg0: i32) -> (i32, i32, i32, i32) {
    %c0_i32 = arith.constant 0 : i32
    %c0_i32_0 = arith.constant 0 : i32
    %c0_i32_1 = arith.constant 0 : i32
    %c0_i32_2 = arith.constant 0 : i32
    %c0_i32_3 = arith.constant 0 : i32
    return %c0_i32, %c0_i32_0, %c0_i32_1, %c0_i32_2 : i32, i32, i32, i32
  }
  func.func @transform_4(%arg0: i32) -> (i32, i32, i32) {
    %c0_i32 = arith.constant 0 : i32
    %c0_i32_0 = arith.constant 0 : i32
    %c0_i32_1 = arith.constant 0 : i32
    return %arg0, %c0_i32, %c0_i32_0 : i32, i32, i32
  }
}

module attributes {stable_mosaic.version = 11 : i64} {
  func.func @_linear_residual_kernel(%arg0: i32, %arg1: memref<8x64xf32, #tpu.memory_space<vmem>>, %arg2: memref<64x64xbf16, #tpu.memory_space<vmem>>, %arg3: memref<1x64xf32, #tpu.memory_space<vmem>>, %arg4: memref<8x64xf32, #tpu.memory_space<vmem>>, %arg5: memref<8x64xf32, #tpu.memory_space<vmem>>) attributes {dimension_semantics = [#tpu.dimension_semantics<parallel>], iteration_bounds = array<i64: 2>, scalar_prefetch = 0 : i64, scratch_operands = 0 : i64, tpu.core_type = #tpu.core_type<tc>, window_params = [{transform_indices = @transform_0, window_bounds = array<i64: 8, 64>}, {pipeline_mode = #tpu.pipeline_mode<synchronous>, transform_indices = @transform_1, window_bounds = array<i64: 64, 64>}, {pipeline_mode = #tpu.pipeline_mode<synchronous>, transform_indices = @transform_2, window_bounds = array<i64: 1, 64>}, {transform_indices = @transform_3, window_bounds = array<i64: 8, 64>}, {transform_indices = @transform_4, window_bounds = array<i64: 8, 64>}]} {
    %c0 = arith.constant 0 : index
    %c0_0 = arith.constant 0 : index
    %0 = vector.load %arg1[%c0, %c0_0] : memref<8x64xf32, #tpu.memory_space<vmem>>, vector<8x64xf32>
    %1 = arith.truncf %0 : vector<8x64xf32> to vector<8x64xbf16>
    %c0_1 = arith.constant 0 : index
    %c0_2 = arith.constant 0 : index
    %2 = vector.load %arg2[%c0_1, %c0_2] : memref<64x64xbf16, #tpu.memory_space<vmem>>, vector<64x64xbf16>
    %cst = arith.constant dense<0.000000e+00> : vector<8x64xf32>
    %3 = tpu.matmul %1, %2, %cst {dimension_numbers = #tpu.dot_dimension_numbers<[1], [0], [0], [1], [0, 0, 1, 1], [], []>} : vector<8x64xbf16>, vector<64x64xbf16>, vector<8x64xf32> -> vector<8x64xf32>
    %c0_3 = arith.constant 0 : index
    %c0_4 = arith.constant 0 : index
    %4 = vector.load %arg3[%c0_3, %c0_4] : memref<1x64xf32, #tpu.memory_space<vmem>>, vector<1x64xf32>
    %5 = vector.broadcast %4 : vector<1x64xf32> to vector<8x64xf32>
    %6 = arith.addf %3, %5 : vector<8x64xf32>
    %c0_5 = arith.constant 0 : index
    %c0_6 = arith.constant 0 : index
    %7 = vector.load %arg4[%c0_5, %c0_6] : memref<8x64xf32, #tpu.memory_space<vmem>>, vector<8x64xf32>
    %8 = arith.addf %6, %7 : vector<8x64xf32>
    %c0_7 = arith.constant 0 : index
    %c0_8 = arith.constant 0 : index
    %9 = vector.load %arg5[%c0_7, %c0_8] : memref<8x64xf32, #tpu.memory_space<vmem>>, vector<8x64xf32>
    tpu.vector_store %arg5[%c0_7, %c0_8], %8 {strides = array<i32>} : memref<8x64xf32, #tpu.memory_space<vmem>>, vector<8x64xf32>,
    return
  }
  func.func @transform_0(%arg0: i32) -> (i32, i32) {
    %c0_i32 = arith.constant 0 : i32
    %c0_i32_0 = arith.constant 0 : i32
    return %arg0, %c0_i32 : i32, i32
  }
  func.func @transform_1(%arg0: i32) -> (i32, i32) {
    %c0_i32 = arith.constant 0 : i32
    %c0_i32_0 = arith.constant 0 : i32
    %c0_i32_1 = arith.constant 0 : i32
    return %c0_i32, %c0_i32_0 : i32, i32
  }
  func.func @transform_2(%arg0: i32) -> (i32, i32) {
    %c0_i32 = arith.constant 0 : i32
    %c0_i32_0 = arith.constant 0 : i32
    %c0_i32_1 = arith.constant 0 : i32
    return %c0_i32, %c0_i32_0 : i32, i32
  }
  func.func @transform_3(%arg0: i32) -> (i32, i32) {
    %c0_i32 = arith.constant 0 : i32
    %c0_i32_0 = arith.constant 0 : i32
    return %arg0, %c0_i32 : i32, i32
  }
  func.func @transform_4(%arg0: i32) -> (i32, i32) {
    %c0_i32 = arith.constant 0 : i32
    %c0_i32_0 = arith.constant 0 : i32
    return %arg0, %c0_i32 : i32, i32
  }
}

module attributes {stable_mosaic.version = 11 : i64} {
  func.func @_ln_linear_kernel(%arg0: i32, %arg1: memref<8x64xf32, #tpu.memory_space<vmem>>, %arg2: memref<2xf32, #tpu.memory_space<smem>>, %arg3: memref<64x64xbf16, #tpu.memory_space<vmem>>, %arg4: memref<1x64xf32, #tpu.memory_space<vmem>>, %arg5: memref<8x64xf32, #tpu.memory_space<vmem>>) attributes {dimension_semantics = [#tpu.dimension_semantics<parallel>], iteration_bounds = array<i64: 2>, scalar_prefetch = 0 : i64, scratch_operands = 0 : i64, tpu.core_type = #tpu.core_type<tc>, window_params = [{transform_indices = @transform_0, window_bounds = array<i64: 8, 64>}, {transform_indices = @transform_1, window_bounds = array<i64: 2>}, {pipeline_mode = #tpu.pipeline_mode<synchronous>, transform_indices = @transform_2, window_bounds = array<i64: 64, 64>}, {pipeline_mode = #tpu.pipeline_mode<synchronous>, transform_indices = @transform_3, window_bounds = array<i64: 1, 64>}, {transform_indices = @transform_4, window_bounds = array<i64: 8, 64>}]} {
    %c0 = arith.constant 0 : index
    %c0_0 = arith.constant 0 : index
    %0 = vector.load %arg1[%c0, %c0_0] : memref<8x64xf32, #tpu.memory_space<vmem>>, vector<8x64xf32>
    %c0_1 = arith.constant 0 : index
    %1 = memref.load %arg2[%c0_1] : memref<2xf32, #tpu.memory_space<smem>>
    %c1 = arith.constant 1 : index
    %2 = memref.load %arg2[%c1] : memref<2xf32, #tpu.memory_space<smem>>
    %cst = arith.constant dense<0.000000e+00> : vector<8xf32>
    %3 = vector.multi_reduction <add>, %0, %cst [1] : vector<8x64xf32> to vector<8xf32>
    %4 = vector.shape_cast %3 : vector<8xf32> to vector<8x1xf32>
    %cst_2 = arith.constant 6.400000e+01 : f32
    %5 = vector.broadcast %cst_2 : f32 to vector<8x1xf32>
    %6 = arith.divf %4, %5 : vector<8x1xf32>
    %7 = vector.broadcast %6 : vector<8x1xf32> to vector<8x64xf32>
    %8 = arith.subf %0, %7 : vector<8x64xf32>
    %9 = arith.mulf %8, %8 : vector<8x64xf32>
    %cst_3 = arith.constant dense<0.000000e+00> : vector<8xf32>
    %10 = vector.multi_reduction <add>, %9, %cst_3 [1] : vector<8x64xf32> to vector<8xf32>
    %11 = vector.shape_cast %10 : vector<8xf32> to vector<8x1xf32>
    %cst_4 = arith.constant 6.300000e+01 : f32
    %12 = vector.broadcast %cst_4 : f32 to vector<8x1xf32>
    %13 = arith.divf %11, %12 : vector<8x1xf32>
    %14 = math.sqrt %13 : vector<8x1xf32>
    %cst_5 = arith.constant 9.99999997E-7 : f32
    %15 = vector.broadcast %cst_5 : f32 to vector<8x1xf32>
    %16 = arith.addf %14, %15 : vector<8x1xf32>
    %17 = vector.broadcast %1 : f32 to vector<8x1xf32>
    %18 = arith.divf %17, %16 : vector<8x1xf32>
    %19 = vector.broadcast %18 : vector<8x1xf32> to vector<8x64xf32>
    %20 = arith.mulf %8, %19 : vector<8x64xf32>
    %21 = vector.broadcast %2 : f32 to vector<8x64xf32>
    %22 = arith.addf %20, %21 : vector<8x64xf32>
    %23 = arith.truncf %22 : vector<8x64xf32> to vector<8x64xbf16>
    %c0_6 = arith.constant 0 : index
    %c0_7 = arith.constant 0 : index
    %24 = vector.load %arg3[%c0_6, %c0_7] : memref<64x64xbf16, #tpu.memory_space<vmem>>, vector<64x64xbf16>
    %cst_8 = arith.constant dense<0.000000e+00> : vector<8x64xf32>
    %25 = tpu.matmul %23, %24, %cst_8 {dimension_numbers = #tpu.dot_dimension_numbers<[1], [0], [0], [1], [0, 0, 1, 1], [], []>} : vector<8x64xbf16>, vector<64x64xbf16>, vector<8x64xf32> -> vector<8x64xf32>
    %c0_9 = arith.constant 0 : index
    %c0_10 = arith.constant 0 : index
    %26 = vector.load %arg4[%c0_9, %c0_10] : memref<1x64xf32, #tpu.memory_space<vmem>>, vector<1x64xf32>
    %27 = vector.broadcast %26 : vector<1x64xf32> to vector<8x64xf32>
    %28 = arith.addf %25, %27 : vector<8x64xf32>
    %c0_11 = arith.constant 0 : index
    %c0_12 = arith.constant 0 : index
    %29 = vector.load %arg5[%c0_11, %c0_12] : memref<8x64xf32, #tpu.memory_space<vmem>>, vector<8x64xf32>
    tpu.vector_store %arg5[%c0_11, %c0_12], %28 {strides = array<i32>} : memref<8x64xf32, #tpu.memory_space<vmem>>, vector<8x64xf32>,
    return
  }
  func.func @transform_0(%arg0: i32) -> (i32, i32) {
    %c0_i32 = arith.constant 0 : i32
    %c0_i32_0 = arith.constant 0 : i32
    return %arg0, %c0_i32 : i32, i32
  }
  func.func @transform_1(%arg0: i32) -> i32 {
    %c0_i32 = arith.constant 0 : i32
    %c0_i32_0 = arith.constant 0 : i32
    return %c0_i32 : i32
  }
  func.func @transform_2(%arg0: i32) -> (i32, i32) {
    %c0_i32 = arith.constant 0 : i32
    %c0_i32_0 = arith.constant 0 : i32
    %c0_i32_1 = arith.constant 0 : i32
    return %c0_i32, %c0_i32_0 : i32, i32
  }
  func.func @transform_3(%arg0: i32) -> (i32, i32) {
    %c0_i32 = arith.constant 0 : i32
    %c0_i32_0 = arith.constant 0 : i32
    %c0_i32_1 = arith.constant 0 : i32
    return %c0_i32, %c0_i32_0 : i32, i32
  }
  func.func @transform_4(%arg0: i32) -> (i32, i32) {
    %c0_i32 = arith.constant 0 : i32
    %c0_i32_0 = arith.constant 0 : i32
    return %arg0, %c0_i32 : i32, i32
  }
}

module attributes {stable_mosaic.version = 11 : i64} {
  func.func @_kv_proj_kernel(%arg0: i32, %arg1: memref<8x64xf32, #tpu.memory_space<vmem>>, %arg2: memref<64x64xbf16, #tpu.memory_space<vmem>>, %arg3: memref<1x64xf32, #tpu.memory_space<vmem>>, %arg4: memref<64x64xbf16, #tpu.memory_space<vmem>>, %arg5: memref<1x64xf32, #tpu.memory_space<vmem>>, %arg6: memref<8x64xf32, #tpu.memory_space<vmem>>, %arg7: memref<8x64xf32, #tpu.memory_space<vmem>>) attributes {dimension_semantics = [#tpu.dimension_semantics<parallel>], iteration_bounds = array<i64: 2>, scalar_prefetch = 0 : i64, scratch_operands = 0 : i64, tpu.core_type = #tpu.core_type<tc>, window_params = [{transform_indices = @transform_0, window_bounds = array<i64: 8, 64>}, {pipeline_mode = #tpu.pipeline_mode<synchronous>, transform_indices = @transform_1, window_bounds = array<i64: 64, 64>}, {pipeline_mode = #tpu.pipeline_mode<synchronous>, transform_indices = @transform_2, window_bounds = array<i64: 1, 64>}, {pipeline_mode = #tpu.pipeline_mode<synchronous>, transform_indices = @transform_3, window_bounds = array<i64: 64, 64>}, {pipeline_mode = #tpu.pipeline_mode<synchronous>, transform_indices = @transform_4, window_bounds = array<i64: 1, 64>}, {transform_indices = @transform_5, window_bounds = array<i64: 8, 64>}, {transform_indices = @transform_6, window_bounds = array<i64: 8, 64>}]} {
    %c0 = arith.constant 0 : index
    %c0_0 = arith.constant 0 : index
    %0 = vector.load %arg1[%c0, %c0_0] : memref<8x64xf32, #tpu.memory_space<vmem>>, vector<8x64xf32>
    %1 = arith.truncf %0 : vector<8x64xf32> to vector<8x64xbf16>
    %c0_1 = arith.constant 0 : index
    %c0_2 = arith.constant 0 : index
    %2 = vector.load %arg2[%c0_1, %c0_2] : memref<64x64xbf16, #tpu.memory_space<vmem>>, vector<64x64xbf16>
    %cst = arith.constant dense<0.000000e+00> : vector<8x64xf32>
    %3 = tpu.matmul %1, %2, %cst {dimension_numbers = #tpu.dot_dimension_numbers<[1], [0], [0], [1], [0, 0, 1, 1], [], []>} : vector<8x64xbf16>, vector<64x64xbf16>, vector<8x64xf32> -> vector<8x64xf32>
    %c0_3 = arith.constant 0 : index
    %c0_4 = arith.constant 0 : index
    %4 = vector.load %arg3[%c0_3, %c0_4] : memref<1x64xf32, #tpu.memory_space<vmem>>, vector<1x64xf32>
    %5 = vector.broadcast %4 : vector<1x64xf32> to vector<8x64xf32>
    %6 = arith.addf %3, %5 : vector<8x64xf32>
    %c0_5 = arith.constant 0 : index
    %c0_6 = arith.constant 0 : index
    %7 = vector.load %arg6[%c0_5, %c0_6] : memref<8x64xf32, #tpu.memory_space<vmem>>, vector<8x64xf32>
    tpu.vector_store %arg6[%c0_5, %c0_6], %6 {strides = array<i32>} : memref<8x64xf32, #tpu.memory_space<vmem>>, vector<8x64xf32>,
    %c0_7 = arith.constant 0 : index
    %c0_8 = arith.constant 0 : index
    %8 = vector.load %arg4[%c0_7, %c0_8] : memref<64x64xbf16, #tpu.memory_space<vmem>>, vector<64x64xbf16>
    %cst_9 = arith.constant dense<0.000000e+00> : vector<8x64xf32>
    %9 = tpu.matmul %1, %8, %cst_9 {dimension_numbers = #tpu.dot_dimension_numbers<[1], [0], [0], [1], [0, 0, 1, 1], [], []>} : vector<8x64xbf16>, vector<64x64xbf16>, vector<8x64xf32> -> vector<8x64xf32>
    %c0_10 = arith.constant 0 : index
    %c0_11 = arith.constant 0 : index
    %10 = vector.load %arg5[%c0_10, %c0_11] : memref<1x64xf32, #tpu.memory_space<vmem>>, vector<1x64xf32>
    %11 = vector.broadcast %10 : vector<1x64xf32> to vector<8x64xf32>
    %12 = arith.addf %9, %11 : vector<8x64xf32>
    %c0_12 = arith.constant 0 : index
    %c0_13 = arith.constant 0 : index
    %13 = vector.load %arg7[%c0_12, %c0_13] : memref<8x64xf32, #tpu.memory_space<vmem>>, vector<8x64xf32>
    tpu.vector_store %arg7[%c0_12, %c0_13], %12 {strides = array<i32>} : memref<8x64xf32, #tpu.memory_space<vmem>>, vector<8x64xf32>,
    return
  }
  func.func @transform_0(%arg0: i32) -> (i32, i32) {
    %c0_i32 = arith.constant 0 : i32
    %c0_i32_0 = arith.constant 0 : i32
    return %arg0, %c0_i32 : i32, i32
  }
  func.func @transform_1(%arg0: i32) -> (i32, i32) {
    %c0_i32 = arith.constant 0 : i32
    %c0_i32_0 = arith.constant 0 : i32
    %c0_i32_1 = arith.constant 0 : i32
    return %c0_i32, %c0_i32_0 : i32, i32
  }
  func.func @transform_2(%arg0: i32) -> (i32, i32) {
    %c0_i32 = arith.constant 0 : i32
    %c0_i32_0 = arith.constant 0 : i32
    %c0_i32_1 = arith.constant 0 : i32
    return %c0_i32, %c0_i32_0 : i32, i32
  }
  func.func @transform_3(%arg0: i32) -> (i32, i32) {
    %c0_i32 = arith.constant 0 : i32
    %c0_i32_0 = arith.constant 0 : i32
    %c0_i32_1 = arith.constant 0 : i32
    return %c0_i32, %c0_i32_0 : i32, i32
  }
  func.func @transform_4(%arg0: i32) -> (i32, i32) {
    %c0_i32 = arith.constant 0 : i32
    %c0_i32_0 = arith.constant 0 : i32
    %c0_i32_1 = arith.constant 0 : i32
    return %c0_i32, %c0_i32_0 : i32, i32
  }
  func.func @transform_5(%arg0: i32) -> (i32, i32) {
    %c0_i32 = arith.constant 0 : i32
    %c0_i32_0 = arith.constant 0 : i32
    return %arg0, %c0_i32 : i32, i32
  }
  func.func @transform_6(%arg0: i32) -> (i32, i32) {
    %c0_i32 = arith.constant 0 : i32
    %c0_i32_0 = arith.constant 0 : i32
    return %arg0, %c0_i32 : i32, i32
  }
}

module attributes {stable_mosaic.version = 11 : i64} {
  func.func @_attention_kernel(%arg0: i32, %arg1: memref<1x8x64xf32, #tpu.memory_space<vmem>>, %arg2: memref<1x8x64xf32, #tpu.memory_space<vmem>>, %arg3: memref<1x8x64xf32, #tpu.memory_space<vmem>>, %arg4: memref<1x1x1x8xi32, #tpu.memory_space<vmem>>, %arg5: memref<1x8x64xf32, #tpu.memory_space<vmem>>) attributes {dimension_semantics = [#tpu.dimension_semantics<parallel>], iteration_bounds = array<i64: 2>, scalar_prefetch = 0 : i64, scratch_operands = 0 : i64, tpu.core_type = #tpu.core_type<tc>, window_params = [{transform_indices = @transform_0, window_bounds = array<i64: 1, 8, 64>}, {transform_indices = @transform_1, window_bounds = array<i64: 1, 8, 64>}, {transform_indices = @transform_2, window_bounds = array<i64: 1, 8, 64>}, {transform_indices = @transform_3, window_bounds = array<i64: 1, 1, 1, 8>}, {transform_indices = @transform_4, window_bounds = array<i64: 1, 8, 64>}]} {
    %c0 = arith.constant 0 : index
    %c0_0 = arith.constant 0 : index
    %c0_1 = arith.constant 0 : index
    %c0_2 = arith.constant 0 : index
    %0 = vector.load %arg4[%c0, %c0_0, %c0_1, %c0_2] : memref<1x1x1x8xi32, #tpu.memory_space<vmem>>, vector<1x1x1x8xi32>
    %1 = vector.shape_cast %0 : vector<1x1x1x8xi32> to vector<1x8xi32>
    %c0_i32 = arith.constant 0 : i32
    %2 = vector.broadcast %c0_i32 : i32 to vector<1x8xi32>
    %3 = arith.cmpi eq, %1, %2 : vector<1x8xi32>
    %c0_3 = arith.constant 0 : index
    %c0_4 = arith.constant 0 : index
    %c0_5 = arith.constant 0 : index
    %4 = vector.load %arg1[%c0_3, %c0_4, %c0_5] : memref<1x8x64xf32, #tpu.memory_space<vmem>>, vector<1x8x16xf32>
    %5 = vector.shape_cast %4 : vector<1x8x16xf32> to vector<8x16xf32>
    %cst = arith.constant 2.500000e-01 : f32
    %6 = vector.broadcast %cst : f32 to vector<8x16xf32>
    %7 = arith.mulf %5, %6 : vector<8x16xf32>
    %8 = arith.truncf %7 : vector<8x16xf32> to vector<8x16xbf16>
    %c0_6 = arith.constant 0 : index
    %c0_7 = arith.constant 0 : index
    %c0_8 = arith.constant 0 : index
    %9 = vector.load %arg2[%c0_6, %c0_7, %c0_8] : memref<1x8x64xf32, #tpu.memory_space<vmem>>, vector<1x8x16xf32>
    %10 = vector.shape_cast %9 : vector<1x8x16xf32> to vector<8x16xf32>
    %11 = arith.truncf %10 : vector<8x16xf32> to vector<8x16xbf16>
    %c0_9 = arith.constant 0 : index
    %c0_10 = arith.constant 0 : index
    %c0_11 = arith.constant 0 : index
    %12 = vector.load %arg3[%c0_9, %c0_10, %c0_11] : memref<1x8x64xf32, #tpu.memory_space<vmem>>, vector<1x8x16xf32>
    %13 = vector.shape_cast %12 : vector<1x8x16xf32> to vector<8x16xf32>
    %14 = arith.truncf %13 : vector<8x16xf32> to vector<8x16xbf16>
    %cst_12 = arith.constant dense<0.000000e+00> : vector<8x8xf32>
    %15 = tpu.matmul %8, %11, %cst_12 {dimension_numbers = #tpu.dot_dimension_numbers<[1], [1], [0], [0], [0, 0, 1, 0], [], []>} : vector<8x16xbf16>, vector<8x16xbf16>, vector<8x8xf32> -> vector<8x8xf32>
    %cst_13 = arith.constant -1.000000e+09 : f32
    %16 = vector.shape_cast %3 : vector<1x8xi1> to vector<1x8xi1>
    %17 = vector.broadcast %16 : vector<1x8xi1> to vector<8x8xi1>
    %18 = vector.broadcast %cst_13 : f32 to vector<8x8xf32>
    %19 = arith.select %17, %18, %15 : vector<8x8xi1>, vector<8x8xf32>
    %cst_14 = arith.constant dense<0xFF800000> : vector<8xf32>
    %20 = vector.multi_reduction <maximumf>, %19, %cst_14 [1] : vector<8x8xf32> to vector<8xf32>
    %21 = vector.shape_cast %20 : vector<8xf32> to vector<8x1xf32>
    %22 = vector.broadcast %21 : vector<8x1xf32> to vector<8x8xf32>
    %23 = arith.subf %19, %22 : vector<8x8xf32>
    %24 = math.exp %23 : vector<8x8xf32>
    %cst_15 = arith.constant dense<0.000000e+00> : vector<8xf32>
    %25 = vector.multi_reduction <add>, %24, %cst_15 [1] : vector<8x8xf32> to vector<8xf32>
    %26 = vector.shape_cast %25 : vector<8xf32> to vector<8x1xf32>
    %27 = tpu.reciprocal %26 : vector<8x1xf32> -> vector<8x1xf32>
    %28 = arith.truncf %24 : vector<8x8xf32> to vector<8x8xbf16>
    %cst_16 = arith.constant dense<0.000000e+00> : vector<8x16xf32>
    %29 = tpu.matmul %28, %14, %cst_16 {dimension_numbers = #tpu.dot_dimension_numbers<[1], [0], [0], [1], [0, 0, 1, 1], [], []>} : vector<8x8xbf16>, vector<8x16xbf16>, vector<8x16xf32> -> vector<8x16xf32>
    %30 = vector.broadcast %27 : vector<8x1xf32> to vector<8x16xf32>
    %31 = arith.mulf %29, %30 : vector<8x16xf32>
    %c0_17 = arith.constant 0 : index
    %c0_18 = arith.constant 0 : index
    %c0_19 = arith.constant 0 : index
    %32 = vector.load %arg5[%c0_17, %c0_18, %c0_19] : memref<1x8x64xf32, #tpu.memory_space<vmem>>, vector<1x8x16xf32>
    %33 = vector.shape_cast %32 : vector<1x8x16xf32> to vector<8x16xf32>
    %34 = vector.shape_cast %31 : vector<8x16xf32> to vector<1x8x16xf32>
    tpu.vector_store %arg5[%c0_17, %c0_18, %c0_19], %34 {strides = array<i32>} : memref<1x8x64xf32, #tpu.memory_space<vmem>>, vector<1x8x16xf32>,
    %c0_20 = arith.constant 0 : index
    %c0_21 = arith.constant 0 : index
    %c16 = arith.constant 16 : index
    %35 = vector.load %arg1[%c0_20, %c0_21, %c16] : memref<1x8x64xf32, #tpu.memory_space<vmem>>, vector<1x8x16xf32>
    %36 = vector.shape_cast %35 : vector<1x8x16xf32> to vector<8x16xf32>
    %cst_22 = arith.constant 2.500000e-01 : f32
    %37 = vector.broadcast %cst_22 : f32 to vector<8x16xf32>
    %38 = arith.mulf %36, %37 : vector<8x16xf32>
    %39 = arith.truncf %38 : vector<8x16xf32> to vector<8x16xbf16>
    %c0_23 = arith.constant 0 : index
    %c0_24 = arith.constant 0 : index
    %c16_25 = arith.constant 16 : index
    %40 = vector.load %arg2[%c0_23, %c0_24, %c16_25] : memref<1x8x64xf32, #tpu.memory_space<vmem>>, vector<1x8x16xf32>
    %41 = vector.shape_cast %40 : vector<1x8x16xf32> to vector<8x16xf32>
    %42 = arith.truncf %41 : vector<8x16xf32> to vector<8x16xbf16>
    %c0_26 = arith.constant 0 : index
    %c0_27 = arith.constant 0 : index
    %c16_28 = arith.constant 16 : index
    %43 = vector.load %arg3[%c0_26, %c0_27, %c16_28] : memref<1x8x64xf32, #tpu.memory_space<vmem>>, vector<1x8x16xf32>
    %44 = vector.shape_cast %43 : vector<1x8x16xf32> to vector<8x16xf32>
    %45 = arith.truncf %44 : vector<8x16xf32> to vector<8x16xbf16>
    %cst_29 = arith.constant dense<0.000000e+00> : vector<8x8xf32>
    %46 = tpu.matmul %39, %42, %cst_29 {dimension_numbers = #tpu.dot_dimension_numbers<[1], [1], [0], [0], [0, 0, 1, 0], [], []>} : vector<8x16xbf16>, vector<8x16xbf16>, vector<8x8xf32> -> vector<8x8xf32>
    %cst_30 = arith.constant -1.000000e+09 : f32
    %47 = vector.shape_cast %3 : vector<1x8xi1> to vector<1x8xi1>
    %48 = vector.broadcast %47 : vector<1x8xi1> to vector<8x8xi1>
    %49 = vector.broadcast %cst_30 : f32 to vector<8x8xf32>
    %50 = arith.select %48, %49, %46 : vector<8x8xi1>, vector<8x8xf32>
    %cst_31 = arith.constant dense<0xFF800000> : vector<8xf32>
    %51 = vector.multi_reduction <maximumf>, %50, %cst_31 [1] : vector<8x8xf32> to vector<8xf32>
    %52 = vector.shape_cast %51 : vector<8xf32> to vector<8x1xf32>
    %53 = vector.broadcast %52 : vector<8x1xf32> to vector<8x8xf32>
    %54 = arith.subf %50, %53 : vector<8x8xf32>
    %55 = math.exp %54 : vector<8x8xf32>
    %cst_32 = arith.constant dense<0.000000e+00> : vector<8xf32>
    %56 = vector.multi_reduction <add>, %55, %cst_32 [1] : vector<8x8xf32> to vector<8xf32>
    %57 = vector.shape_cast %56 : vector<8xf32> to vector<8x1xf32>
    %58 = tpu.reciprocal %57 : vector<8x1xf32> -> vector<8x1xf32>
    %59 = arith.truncf %55 : vector<8x8xf32> to vector<8x8xbf16>
    %cst_33 = arith.constant dense<0.000000e+00> : vector<8x16xf32>
    %60 = tpu.matmul %59, %45, %cst_33 {dimension_numbers = #tpu.dot_dimension_numbers<[1], [0], [0], [1], [0, 0, 1, 1], [], []>} : vector<8x8xbf16>, vector<8x16xbf16>, vector<8x16xf32> -> vector<8x16xf32>
    %61 = vector.broadcast %58 : vector<8x1xf32> to vector<8x16xf32>
    %62 = arith.mulf %60, %61 : vector<8x16xf32>
    %c0_34 = arith.constant 0 : index
    %c0_35 = arith.constant 0 : index
    %c16_36 = arith.constant 16 : index
    %63 = vector.load %arg5[%c0_34, %c0_35, %c16_36] : memref<1x8x64xf32, #tpu.memory_space<vmem>>, vector<1x8x16xf32>
    %64 = vector.shape_cast %63 : vector<1x8x16xf32> to vector<8x16xf32>
    %65 = vector.shape_cast %62 : vector<8x16xf32> to vector<1x8x16xf32>
    tpu.vector_store %arg5[%c0_34, %c0_35, %c16_36], %65 {strides = array<i32>} : memref<1x8x64xf32, #tpu.memory_space<vmem>>, vector<1x8x16xf32>,
    %c0_37 = arith.constant 0 : index
    %c0_38 = arith.constant 0 : index
    %c32 = arith.constant 32 : index
    %66 = vector.load %arg1[%c0_37, %c0_38, %c32] : memref<1x8x64xf32, #tpu.memory_space<vmem>>, vector<1x8x16xf32>
    %67 = vector.shape_cast %66 : vector<1x8x16xf32> to vector<8x16xf32>
    %cst_39 = arith.constant 2.500000e-01 : f32
    %68 = vector.broadcast %cst_39 : f32 to vector<8x16xf32>
    %69 = arith.mulf %67, %68 : vector<8x16xf32>
    %70 = arith.truncf %69 : vector<8x16xf32> to vector<8x16xbf16>
    %c0_40 = arith.constant 0 : index
    %c0_41 = arith.constant 0 : index
    %c32_42 = arith.constant 32 : index
    %71 = vector.load %arg2[%c0_40, %c0_41, %c32_42] : memref<1x8x64xf32, #tpu.memory_space<vmem>>, vector<1x8x16xf32>
    %72 = vector.shape_cast %71 : vector<1x8x16xf32> to vector<8x16xf32>
    %73 = arith.truncf %72 : vector<8x16xf32> to vector<8x16xbf16>
    %c0_43 = arith.constant 0 : index
    %c0_44 = arith.constant 0 : index
    %c32_45 = arith.constant 32 : index
    %74 = vector.load %arg3[%c0_43, %c0_44, %c32_45] : memref<1x8x64xf32, #tpu.memory_space<vmem>>, vector<1x8x16xf32>
    %75 = vector.shape_cast %74 : vector<1x8x16xf32> to vector<8x16xf32>
    %76 = arith.truncf %75 : vector<8x16xf32> to vector<8x16xbf16>
    %cst_46 = arith.constant dense<0.000000e+00> : vector<8x8xf32>
    %77 = tpu.matmul %70, %73, %cst_46 {dimension_numbers = #tpu.dot_dimension_numbers<[1], [1], [0], [0], [0, 0, 1, 0], [], []>} : vector<8x16xbf16>, vector<8x16xbf16>, vector<8x8xf32> -> vector<8x8xf32>
    %cst_47 = arith.constant -1.000000e+09 : f32
    %78 = vector.shape_cast %3 : vector<1x8xi1> to vector<1x8xi1>
    %79 = vector.broadcast %78 : vector<1x8xi1> to vector<8x8xi1>
    %80 = vector.broadcast %cst_47 : f32 to vector<8x8xf32>
    %81 = arith.select %79, %80, %77 : vector<8x8xi1>, vector<8x8xf32>
    %cst_48 = arith.constant dense<0xFF800000> : vector<8xf32>
    %82 = vector.multi_reduction <maximumf>, %81, %cst_48 [1] : vector<8x8xf32> to vector<8xf32>
    %83 = vector.shape_cast %82 : vector<8xf32> to vector<8x1xf32>
    %84 = vector.broadcast %83 : vector<8x1xf32> to vector<8x8xf32>
    %85 = arith.subf %81, %84 : vector<8x8xf32>
    %86 = math.exp %85 : vector<8x8xf32>
    %cst_49 = arith.constant dense<0.000000e+00> : vector<8xf32>
    %87 = vector.multi_reduction <add>, %86, %cst_49 [1] : vector<8x8xf32> to vector<8xf32>
    %88 = vector.shape_cast %87 : vector<8xf32> to vector<8x1xf32>
    %89 = tpu.reciprocal %88 : vector<8x1xf32> -> vector<8x1xf32>
    %90 = arith.truncf %86 : vector<8x8xf32> to vector<8x8xbf16>
    %cst_50 = arith.constant dense<0.000000e+00> : vector<8x16xf32>
    %91 = tpu.matmul %90, %76, %cst_50 {dimension_numbers = #tpu.dot_dimension_numbers<[1], [0], [0], [1], [0, 0, 1, 1], [], []>} : vector<8x8xbf16>, vector<8x16xbf16>, vector<8x16xf32> -> vector<8x16xf32>
    %92 = vector.broadcast %89 : vector<8x1xf32> to vector<8x16xf32>
    %93 = arith.mulf %91, %92 : vector<8x16xf32>
    %c0_51 = arith.constant 0 : index
    %c0_52 = arith.constant 0 : index
    %c32_53 = arith.constant 32 : index
    %94 = vector.load %arg5[%c0_51, %c0_52, %c32_53] : memref<1x8x64xf32, #tpu.memory_space<vmem>>, vector<1x8x16xf32>
    %95 = vector.shape_cast %94 : vector<1x8x16xf32> to vector<8x16xf32>
    %96 = vector.shape_cast %93 : vector<8x16xf32> to vector<1x8x16xf32>
    tpu.vector_store %arg5[%c0_51, %c0_52, %c32_53], %96 {strides = array<i32>} : memref<1x8x64xf32, #tpu.memory_space<vmem>>, vector<1x8x16xf32>,
    %c0_54 = arith.constant 0 : index
    %c0_55 = arith.constant 0 : index
    %c48 = arith.constant 48 : index
    %97 = vector.load %arg1[%c0_54, %c0_55, %c48] : memref<1x8x64xf32, #tpu.memory_space<vmem>>, vector<1x8x16xf32>
    %98 = vector.shape_cast %97 : vector<1x8x16xf32> to vector<8x16xf32>
    %cst_56 = arith.constant 2.500000e-01 : f32
    %99 = vector.broadcast %cst_56 : f32 to vector<8x16xf32>
    %100 = arith.mulf %98, %99 : vector<8x16xf32>
    %101 = arith.truncf %100 : vector<8x16xf32> to vector<8x16xbf16>
    %c0_57 = arith.constant 0 : index
    %c0_58 = arith.constant 0 : index
    %c48_59 = arith.constant 48 : index
    %102 = vector.load %arg2[%c0_57, %c0_58, %c48_59] : memref<1x8x64xf32, #tpu.memory_space<vmem>>, vector<1x8x16xf32>
    %103 = vector.shape_cast %102 : vector<1x8x16xf32> to vector<8x16xf32>
    %104 = arith.truncf %103 : vector<8x16xf32> to vector<8x16xbf16>
    %c0_60 = arith.constant 0 : index
    %c0_61 = arith.constant 0 : index
    %c48_62 = arith.constant 48 : index
    %105 = vector.load %arg3[%c0_60, %c0_61, %c48_62] : memref<1x8x64xf32, #tpu.memory_space<vmem>>, vector<1x8x16xf32>
    %106 = vector.shape_cast %105 : vector<1x8x16xf32> to vector<8x16xf32>
    %107 = arith.truncf %106 : vector<8x16xf32> to vector<8x16xbf16>
    %cst_63 = arith.constant dense<0.000000e+00> : vector<8x8xf32>
    %108 = tpu.matmul %101, %104, %cst_63 {dimension_numbers = #tpu.dot_dimension_numbers<[1], [1], [0], [0], [0, 0, 1, 0], [], []>} : vector<8x16xbf16>, vector<8x16xbf16>, vector<8x8xf32> -> vector<8x8xf32>
    %cst_64 = arith.constant -1.000000e+09 : f32
    %109 = vector.shape_cast %3 : vector<1x8xi1> to vector<1x8xi1>
    %110 = vector.broadcast %109 : vector<1x8xi1> to vector<8x8xi1>
    %111 = vector.broadcast %cst_64 : f32 to vector<8x8xf32>
    %112 = arith.select %110, %111, %108 : vector<8x8xi1>, vector<8x8xf32>
    %cst_65 = arith.constant dense<0xFF800000> : vector<8xf32>
    %113 = vector.multi_reduction <maximumf>, %112, %cst_65 [1] : vector<8x8xf32> to vector<8xf32>
    %114 = vector.shape_cast %113 : vector<8xf32> to vector<8x1xf32>
    %115 = vector.broadcast %114 : vector<8x1xf32> to vector<8x8xf32>
    %116 = arith.subf %112, %115 : vector<8x8xf32>
    %117 = math.exp %116 : vector<8x8xf32>
    %cst_66 = arith.constant dense<0.000000e+00> : vector<8xf32>
    %118 = vector.multi_reduction <add>, %117, %cst_66 [1] : vector<8x8xf32> to vector<8xf32>
    %119 = vector.shape_cast %118 : vector<8xf32> to vector<8x1xf32>
    %120 = tpu.reciprocal %119 : vector<8x1xf32> -> vector<8x1xf32>
    %121 = arith.truncf %117 : vector<8x8xf32> to vector<8x8xbf16>
    %cst_67 = arith.constant dense<0.000000e+00> : vector<8x16xf32>
    %122 = tpu.matmul %121, %107, %cst_67 {dimension_numbers = #tpu.dot_dimension_numbers<[1], [0], [0], [1], [0, 0, 1, 1], [], []>} : vector<8x8xbf16>, vector<8x16xbf16>, vector<8x16xf32> -> vector<8x16xf32>
    %123 = vector.broadcast %120 : vector<8x1xf32> to vector<8x16xf32>
    %124 = arith.mulf %122, %123 : vector<8x16xf32>
    %c0_68 = arith.constant 0 : index
    %c0_69 = arith.constant 0 : index
    %c48_70 = arith.constant 48 : index
    %125 = vector.load %arg5[%c0_68, %c0_69, %c48_70] : memref<1x8x64xf32, #tpu.memory_space<vmem>>, vector<1x8x16xf32>
    %126 = vector.shape_cast %125 : vector<1x8x16xf32> to vector<8x16xf32>
    %127 = vector.shape_cast %124 : vector<8x16xf32> to vector<1x8x16xf32>
    tpu.vector_store %arg5[%c0_68, %c0_69, %c48_70], %127 {strides = array<i32>} : memref<1x8x64xf32, #tpu.memory_space<vmem>>, vector<1x8x16xf32>,
    return
  }
  func.func @transform_0(%arg0: i32) -> (i32, i32, i32) {
    %c0_i32 = arith.constant 0 : i32
    %c0_i32_0 = arith.constant 0 : i32
    %c0_i32_1 = arith.constant 0 : i32
    return %arg0, %c0_i32, %c0_i32_0 : i32, i32, i32
  }
  func.func @transform_1(%arg0: i32) -> (i32, i32, i32) {
    %c0_i32 = arith.constant 0 : i32
    %c0_i32_0 = arith.constant 0 : i32
    %c0_i32_1 = arith.constant 0 : i32
    return %arg0, %c0_i32, %c0_i32_0 : i32, i32, i32
  }
  func.func @transform_2(%arg0: i32) -> (i32, i32, i32) {
    %c0_i32 = arith.constant 0 : i32
    %c0_i32_0 = arith.constant 0 : i32
    %c0_i32_1 = arith.constant 0 : i32
    return %arg0, %c0_i32, %c0_i32_0 : i32, i32, i32
  }
  func.func @transform_3(%arg0: i32) -> (i32, i32, i32, i32) {
    %c0_i32 = arith.constant 0 : i32
    %c0_i32_0 = arith.constant 0 : i32
    %c0_i32_1 = arith.constant 0 : i32
    %c0_i32_2 = arith.constant 0 : i32
    return %arg0, %c0_i32, %c0_i32_0, %c0_i32_1 : i32, i32, i32, i32
  }
  func.func @transform_4(%arg0: i32) -> (i32, i32, i32) {
    %c0_i32 = arith.constant 0 : i32
    %c0_i32_0 = arith.constant 0 : i32
    %c0_i32_1 = arith.constant 0 : i32
    return %arg0, %c0_i32, %c0_i32_0 : i32, i32, i32
  }
}

module attributes {stable_mosaic.version = 11 : i64} {
  func.func @_ln_linear_kernel(%arg0: i32, %arg1: memref<8x64xf32, #tpu.memory_space<vmem>>, %arg2: memref<2xf32, #tpu.memory_space<smem>>, %arg3: memref<64x128xbf16, #tpu.memory_space<vmem>>, %arg4: memref<1x128xf32, #tpu.memory_space<vmem>>, %arg5: memref<8x128xf32, #tpu.memory_space<vmem>>) attributes {dimension_semantics = [#tpu.dimension_semantics<parallel>], iteration_bounds = array<i64: 2>, scalar_prefetch = 0 : i64, scratch_operands = 0 : i64, tpu.core_type = #tpu.core_type<tc>, window_params = [{transform_indices = @transform_0, window_bounds = array<i64: 8, 64>}, {transform_indices = @transform_1, window_bounds = array<i64: 2>}, {pipeline_mode = #tpu.pipeline_mode<synchronous>, transform_indices = @transform_2, window_bounds = array<i64: 64, 128>}, {pipeline_mode = #tpu.pipeline_mode<synchronous>, transform_indices = @transform_3, window_bounds = array<i64: 1, 128>}, {transform_indices = @transform_4, window_bounds = array<i64: 8, 128>}]} {
    %c0 = arith.constant 0 : index
    %c0_0 = arith.constant 0 : index
    %0 = vector.load %arg1[%c0, %c0_0] : memref<8x64xf32, #tpu.memory_space<vmem>>, vector<8x64xf32>
    %c0_1 = arith.constant 0 : index
    %1 = memref.load %arg2[%c0_1] : memref<2xf32, #tpu.memory_space<smem>>
    %c1 = arith.constant 1 : index
    %2 = memref.load %arg2[%c1] : memref<2xf32, #tpu.memory_space<smem>>
    %cst = arith.constant dense<0.000000e+00> : vector<8xf32>
    %3 = vector.multi_reduction <add>, %0, %cst [1] : vector<8x64xf32> to vector<8xf32>
    %4 = vector.shape_cast %3 : vector<8xf32> to vector<8x1xf32>
    %cst_2 = arith.constant 6.400000e+01 : f32
    %5 = vector.broadcast %cst_2 : f32 to vector<8x1xf32>
    %6 = arith.divf %4, %5 : vector<8x1xf32>
    %7 = vector.broadcast %6 : vector<8x1xf32> to vector<8x64xf32>
    %8 = arith.subf %0, %7 : vector<8x64xf32>
    %9 = arith.mulf %8, %8 : vector<8x64xf32>
    %cst_3 = arith.constant dense<0.000000e+00> : vector<8xf32>
    %10 = vector.multi_reduction <add>, %9, %cst_3 [1] : vector<8x64xf32> to vector<8xf32>
    %11 = vector.shape_cast %10 : vector<8xf32> to vector<8x1xf32>
    %cst_4 = arith.constant 6.300000e+01 : f32
    %12 = vector.broadcast %cst_4 : f32 to vector<8x1xf32>
    %13 = arith.divf %11, %12 : vector<8x1xf32>
    %14 = math.sqrt %13 : vector<8x1xf32>
    %cst_5 = arith.constant 9.99999997E-7 : f32
    %15 = vector.broadcast %cst_5 : f32 to vector<8x1xf32>
    %16 = arith.addf %14, %15 : vector<8x1xf32>
    %17 = vector.broadcast %1 : f32 to vector<8x1xf32>
    %18 = arith.divf %17, %16 : vector<8x1xf32>
    %19 = vector.broadcast %18 : vector<8x1xf32> to vector<8x64xf32>
    %20 = arith.mulf %8, %19 : vector<8x64xf32>
    %21 = vector.broadcast %2 : f32 to vector<8x64xf32>
    %22 = arith.addf %20, %21 : vector<8x64xf32>
    %23 = arith.truncf %22 : vector<8x64xf32> to vector<8x64xbf16>
    %c0_6 = arith.constant 0 : index
    %c0_7 = arith.constant 0 : index
    %24 = vector.load %arg3[%c0_6, %c0_7] : memref<64x128xbf16, #tpu.memory_space<vmem>>, vector<64x128xbf16>
    %cst_8 = arith.constant dense<0.000000e+00> : vector<8x128xf32>
    %25 = tpu.matmul %23, %24, %cst_8 {dimension_numbers = #tpu.dot_dimension_numbers<[1], [0], [0], [1], [0, 0, 1, 1], [], []>} : vector<8x64xbf16>, vector<64x128xbf16>, vector<8x128xf32> -> vector<8x128xf32>
    %c0_9 = arith.constant 0 : index
    %c0_10 = arith.constant 0 : index
    %26 = vector.load %arg4[%c0_9, %c0_10] : memref<1x128xf32, #tpu.memory_space<vmem>>, vector<1x128xf32>
    %27 = vector.broadcast %26 : vector<1x128xf32> to vector<8x128xf32>
    %28 = arith.addf %25, %27 : vector<8x128xf32>
    %cst_11 = arith.constant 0.000000e+00 : f32
    %29 = vector.broadcast %cst_11 : f32 to vector<8x128xf32>
    %30 = arith.maximumf %28, %29 : vector<8x128xf32>
    %c0_12 = arith.constant 0 : index
    %c0_13 = arith.constant 0 : index
    %31 = vector.load %arg5[%c0_12, %c0_13] : memref<8x128xf32, #tpu.memory_space<vmem>>, vector<8x128xf32>
    tpu.vector_store %arg5[%c0_12, %c0_13], %30 {strides = array<i32>} : memref<8x128xf32, #tpu.memory_space<vmem>>, vector<8x128xf32>,
    return
  }
  func.func @transform_0(%arg0: i32) -> (i32, i32) {
    %c0_i32 = arith.constant 0 : i32
    %c0_i32_0 = arith.constant 0 : i32
    return %arg0, %c0_i32 : i32, i32
  }
  func.func @transform_1(%arg0: i32) -> i32 {
    %c0_i32 = arith.constant 0 : i32
    %c0_i32_0 = arith.constant 0 : i32
    return %c0_i32 : i32
  }
  func.func @transform_2(%arg0: i32) -> (i32, i32) {
    %c0_i32 = arith.constant 0 : i32
    %c0_i32_0 = arith.constant 0 : i32
    %c0_i32_1 = arith.constant 0 : i32
    return %c0_i32, %c0_i32_0 : i32, i32
  }
  func.func @transform_3(%arg0: i32) -> (i32, i32) {
    %c0_i32 = arith.constant 0 : i32
    %c0_i32_0 = arith.constant 0 : i32
    %c0_i32_1 = arith.constant 0 : i32
    return %c0_i32, %c0_i32_0 : i32, i32
  }
  func.func @transform_4(%arg0: i32) -> (i32, i32) {
    %c0_i32 = arith.constant 0 : i32
    %c0_i32_0 = arith.constant 0 : i32
    return %arg0, %c0_i32 : i32, i32
  }
}

module attributes {stable_mosaic.version = 11 : i64} {
  func.func @_linear_residual_kernel(%arg0: i32, %arg1: memref<8x128xf32, #tpu.memory_space<vmem>>, %arg2: memref<128x64xbf16, #tpu.memory_space<vmem>>, %arg3: memref<1x64xf32, #tpu.memory_space<vmem>>, %arg4: memref<8x64xf32, #tpu.memory_space<vmem>>, %arg5: memref<8x64xf32, #tpu.memory_space<vmem>>) attributes {dimension_semantics = [#tpu.dimension_semantics<parallel>], iteration_bounds = array<i64: 2>, scalar_prefetch = 0 : i64, scratch_operands = 0 : i64, tpu.core_type = #tpu.core_type<tc>, window_params = [{transform_indices = @transform_0, window_bounds = array<i64: 8, 128>}, {pipeline_mode = #tpu.pipeline_mode<synchronous>, transform_indices = @transform_1, window_bounds = array<i64: 128, 64>}, {pipeline_mode = #tpu.pipeline_mode<synchronous>, transform_indices = @transform_2, window_bounds = array<i64: 1, 64>}, {transform_indices = @transform_3, window_bounds = array<i64: 8, 64>}, {transform_indices = @transform_4, window_bounds = array<i64: 8, 64>}]} {
    %c0 = arith.constant 0 : index
    %c0_0 = arith.constant 0 : index
    %0 = vector.load %arg1[%c0, %c0_0] : memref<8x128xf32, #tpu.memory_space<vmem>>, vector<8x128xf32>
    %1 = arith.truncf %0 : vector<8x128xf32> to vector<8x128xbf16>
    %c0_1 = arith.constant 0 : index
    %c0_2 = arith.constant 0 : index
    %2 = vector.load %arg2[%c0_1, %c0_2] : memref<128x64xbf16, #tpu.memory_space<vmem>>, vector<128x64xbf16>
    %cst = arith.constant dense<0.000000e+00> : vector<8x64xf32>
    %3 = tpu.matmul %1, %2, %cst {dimension_numbers = #tpu.dot_dimension_numbers<[1], [0], [0], [1], [0, 0, 1, 1], [], []>} : vector<8x128xbf16>, vector<128x64xbf16>, vector<8x64xf32> -> vector<8x64xf32>
    %c0_3 = arith.constant 0 : index
    %c0_4 = arith.constant 0 : index
    %4 = vector.load %arg3[%c0_3, %c0_4] : memref<1x64xf32, #tpu.memory_space<vmem>>, vector<1x64xf32>
    %5 = vector.broadcast %4 : vector<1x64xf32> to vector<8x64xf32>
    %6 = arith.addf %3, %5 : vector<8x64xf32>
    %c0_5 = arith.constant 0 : index
    %c0_6 = arith.constant 0 : index
    %7 = vector.load %arg4[%c0_5, %c0_6] : memref<8x64xf32, #tpu.memory_space<vmem>>, vector<8x64xf32>
    %8 = arith.addf %6, %7 : vector<8x64xf32>
    %c0_7 = arith.constant 0 : index
    %c0_8 = arith.constant 0 : index
    %9 = vector.load %arg5[%c0_7, %c0_8] : memref<8x64xf32, #tpu.memory_space<vmem>>, vector<8x64xf32>
    tpu.vector_store %arg5[%c0_7, %c0_8], %8 {strides = array<i32>} : memref<8x64xf32, #tpu.memory_space<vmem>>, vector<8x64xf32>,
    return
  }
  func.func @transform_0(%arg0: i32) -> (i32, i32) {
    %c0_i32 = arith.constant 0 : i32
    %c0_i32_0 = arith.constant 0 : i32
    return %arg0, %c0_i32 : i32, i32
  }
  func.func @transform_1(%arg0: i32) -> (i32, i32) {
    %c0_i32 = arith.constant 0 : i32
    %c0_i32_0 = arith.constant 0 : i32
    %c0_i32_1 = arith.constant 0 : i32
    return %c0_i32, %c0_i32_0 : i32, i32
  }
  func.func @transform_2(%arg0: i32) -> (i32, i32) {
    %c0_i32 = arith.constant 0 : i32
    %c0_i32_0 = arith.constant 0 : i32
    %c0_i32_1 = arith.constant 0 : i32
    return %c0_i32, %c0_i32_0 : i32, i32
  }
  func.func @transform_3(%arg0: i32) -> (i32, i32) {
    %c0_i32 = arith.constant 0 : i32
    %c0_i32_0 = arith.constant 0 : i32
    return %arg0, %c0_i32 : i32, i32
  }
  func.func @transform_4(%arg0: i32) -> (i32, i32) {
    %c0_i32 = arith.constant 0 : i32
    %c0_i32_0 = arith.constant 0 : i32
    return %arg0, %c0_i32 : i32, i32
  }
}

</mosaic_0001>

<llo_original>
// kernel: decoder_block.12
$region0: #{decoder_block.12}
  #allocation0 [shape = 'u32[]', space=smem, size = 0x4, offset = 0x4, fixed_abs, tag = 'smem constant byte address 0x4 - core index']
  #allocation1 [shape = 'u32[144,128]{1,0:T(1,128)}', space=vmem, size = 0x12000, scoped, tag = 'internal scratch']
  %s0 = inlined_call_operand.vmem [shape: f32[16,64], index: 0, kind: input, shape index: {}]
  %s1 = inlined_call_operand.vmem [shape: f32[2], index: 1, kind: input, shape index: {}]
  %s2 = inlined_call_operand.vmem [shape: bf16[64,64], index: 2, kind: input, shape index: {}]
  %s3 = inlined_call_operand.vmem [shape: f32[1,64], index: 3, kind: input, shape index: {}]
  %s4 = inlined_call_operand.vmem [shape: f32[16,64], index: 4, kind: output, shape index: {}]
  %s5 = sld [smem:[#allocation0]]
  $region53: #{decoder_block.12} parent=0
    _
  %s7 = ssub.s32 1, %s5
  %s8 = scalar_select 0, %s7, %s5
  $region1: #{decoder_block.12} parent=0
    #allocation2 [shape = 'u8[512]{0}', space=smem, size = 0x200, scoped, tag = 'input window, operand 1, single buffered']
    #allocation3 [shape = 's32[2]{0}', space=sflag, size = 0x8, scoped, tag = 'scoped memory for decoder_block.12']
    %9 = vsyncpa [#allocation3], 0
    loop: start=0, step=1, limit=4
    $region2: #{decoder_block.12} parent=1 // loop_pre_header
      _
    $region3: #{decoder_block.12} parent=1 // loop_header
      %s11 = sphi 0, %s15
      %p12 = scmp.ge.s32.totalorder %s11, 4
      %s21 = sphi 0, %s23
      %s24 = sphi 0, %s21
      %s25 = sphi 0, %s24
      %s41 = sphi 0, %s25
      %s45 = sphi 0, %s45
      %s47 = sphi 0, %s45
      %s48 = sphi 0, %s47
      %s62 = sphi 0, %s48
      %s66 = sphi 0, %s66
      %s68 = sphi 0, %s66
      %s69 = sphi 0, %s68
      %s83 = sphi 0, %s69
      %s87 = sphi 0, %s87
      %s89 = sphi 0, %s87
      %s90 = sphi 0, %s89
      %s104 = sphi 0, %s90
      %s110 = sphi 0, %s112
      %s113 = sphi 0, %s110
      %s114 = sphi 0, %s113
      %s130 = sphi 0, %s114
    $region4: #{decoder_block.12} parent=1 // loop_header_branch
      %14 = sbr.rel (%p12) target = $region8
    $region5: #{decoder_block.12} parent=1 // loop_body
      %s16 = ssub.s32 %s11, 1
      %s17 = ssub.s32 %s11, 2
      %s18 = sadd.s32 %s11, 1
      %s19 = ssub.s32 %s11, %s18
      %p20 = scmp.eq.s32.totalorder %s19, 0
      %s22 = sadd.s32 %s21, 1
      %s23 = scalar_select %p20, %s21, %s22
      %p26 = pneg %p20
      %p27 = scmp.eq.s32.totalorder %s11, 1
      %p28 = por %p26, %p27
      %p29 = scmp.ne.s32.totalorder %s21, %s24
      %p30 = scmp.eq.s32.totalorder %s11, 0
      %p31 = por %p29, %p30
      %p32 = scmp.ne.s32.totalorder %s21, %s24
      %p33 = scmp.eq.s32.totalorder %s16, 1
      %p34 = por %p32, %p33
      %p35 = scmp.ne.s32.totalorder %s24, %s25
      %p36 = scmp.eq.s32.totalorder %s16, 0
      %p37 = por %p35, %p36
      %p38 = scmp.ne.s32.totalorder %s24, %s25
      %p39 = scmp.eq.s32.totalorder %s17, 1
      %p40 = por %p38, %p39
      %p42 = scmp.ne.s32.totalorder %s25, %s41
      %p43 = scmp.eq.s32.totalorder %s17, 0
      %p44 = por %p42, %p43
      %s46 = sadd.s32 %s45, 1
      %p49 = scmp.eq.s32.totalorder %s11, 1
      %p50 = scmp.ne.s32.totalorder %s45, %s47
      %p51 = scmp.eq.s32.totalorder %s11, 0
      %p52 = por %p50, %p51
      %p53 = scmp.ne.s32.totalorder %s45, %s47
      %p54 = scmp.eq.s32.totalorder %s16, 1
      %p55 = por %p53, %p54
      %p56 = scmp.ne.s32.totalorder %s47, %s48
      %p57 = scmp.eq.s32.totalorder %s16, 0
      %p58 = por %p56, %p57
      %p59 = scmp.ne.s32.totalorder %s47, %s48
      %p60 = scmp.eq.s32.totalorder %s17, 1
      %p61 = por %p59, %p60
      %p63 = scmp.ne.s32.totalorder %s48, %s62
      %p64 = scmp.eq.s32.totalorder %s17, 0
      %p65 = por %p63, %p64
      %s67 = sadd.s32 %s66, 1
      %p70 = scmp.eq.s32.totalorder %s11, 1
      %p71 = scmp.ne.s32.totalorder %s66, %s68
      %p72 = scmp.eq.s32.totalorder %s11, 0
      %p73 = por %p71, %p72
      %p74 = scmp.ne.s32.totalorder %s66, %s68
      %p75 = scmp.eq.s32.totalorder %s16, 1
      %p76 = por %p74, %p75
      %p77 = scmp.ne.s32.totalorder %s68, %s69
      %p78 = scmp.eq.s32.totalorder %s16, 0
      %p79 = por %p77, %p78
      %p80 = scmp.ne.s32.totalorder %s68, %s69
      %p81 = scmp.eq.s32.totalorder %s17, 1
      %p82 = por %p80, %p81
      %p84 = scmp.ne.s32.totalorder %s69, %s83
      %p85 = scmp.eq.s32.totalorder %s17, 0
      %p86 = por %p84, %p85
      %s88 = sadd.s32 %s87, 1
      %p91 = scmp.eq.s32.totalorder %s11, 1
      %p92 = scmp.ne.s32.totalorder %s87, %s89
      %p93 = scmp.eq.s32.totalorder %s11, 0
      %p94 = por %p92, %p93
      %p95 = scmp.ne.s32.totalorder %s87, %s89
      %p96 = scmp.eq.s32.totalorder %s16, 1
      %p97 = por %p95, %p96
      %p98 = scmp.ne.s32.totalorder %s89, %s90
      %p99 = scmp.eq.s32.totalorder %s16, 0
      %p100 = por %p98, %p99
      %p101 = scmp.ne.s32.totalorder %s89, %s90
      %p102 = scmp.eq.s32.totalorder %s17, 1
      %p103 = por %p101, %p102
      %p105 = scmp.ne.s32.totalorder %s90, %s104
      %p106 = scmp.eq.s32.totalorder %s17, 0
      %p107 = por %p105, %p106
      %s108 = ssub.s32 %s11, %s18
      %p109 = scmp.eq.s32.totalorder %s108, 0
      %s111 = sadd.s32 %s110, 1
      %s112 = scalar_select %p109, %s110, %s111
      %p115 = pneg %p109
      %p116 = scmp.eq.s32.totalorder %s11, 1
      %p117 = por %p115, %p116
      %p118 = scmp.ne.s32.totalorder %s110, %s113
      %p119 = scmp.eq.s32.totalorder %s11, 0
      %p120 = por %p118, %p119
      %p121 = scmp.ne.s32.totalorder %s110, %s113
      %p122 = scmp.eq.s32.totalorder %s16, 1
      %p123 = por %p121, %p122
      %p124 = scmp.ne.s32.totalorder %s113, %s114
      %p125 = scmp.eq.s32.totalorder %s16, 0
      %p126 = por %p124, %p125
      %p127 = scmp.ne.s32.totalorder %s113, %s114
      %p128 = scmp.eq.s32.totalorder %s17, 1
      %p129 = por %p127, %p128
      %p131 = scmp.ne.s32.totalorder %s114, %s130
      %p132 = scmp.eq.s32.totalorder %s17, 0
      %p133 = por %p131, %p132
      %p134 = scmp.le.s32.totalorder 1, %s11
      %p135 = scmp.lt.s32.totalorder %s11, 3
      %p136 = pnand %p134, %p135
      %p137 = pneg %p136
      // Predicated region
      $region9: #{decoder_block.12} parent=5 // pred_check
        _
      $region10: #{decoder_block.12} parent=5 // pred_check_branch
        %139 = sbr.rel (%p136) target = $region12
      $region11: #{decoder_block.12} parent=5 // pred_region
        %s140 = ssub.s32 %s11, 1
        // Predicated region
        $region13: #{decoder_block.12} parent=11 // pred_check
          %p141 = pneg %p58
        $region14: #{decoder_block.12} parent=11 // pred_check_branch
          %143 = sbr.rel (%p141) target = $region16
        $region15: #{decoder_block.12} parent=11 // pred_region
          %s145 = ssub.s32 16, 16
          %146 = vsyncadd [#allocation3], %s145
          %s148 = sshll.u32 %s1, 4
          %s149 = int_to_ptr.vmem [resolvable:$true] %s148
          %151 = dma.vmem_to_smem %s149, 16, [#allocation2], [#allocation3]
        $region16: #{decoder_block.12} parent=11 // pred_fallthru
          _
        // Predicated region
        $region17: #{decoder_block.12} parent=11 // pred_check
          %p152 = pneg %p79
        $region18: #{decoder_block.12} parent=11 // pred_check_branch
          %154 = sbr.rel (%p152) target = $region20
        $region19: #{decoder_block.12} parent=11 // pred_region
          _
        $region20: #{decoder_block.12} parent=11 // pred_fallthru
          _
        // Predicated region
        $region21: #{decoder_block.12} parent=11 // pred_check
          %p155 = pneg %p100
        $region22: #{decoder_block.12} parent=11 // pred_check_branch
          %157 = sbr.rel (%p155) target = $region24
        $region23: #{decoder_block.12} parent=11 // pred_region
          _
        $region24: #{decoder_block.12} parent=11 // pred_fallthru
          _
      $region12: #{decoder_block.12} parent=5 // pred_fallthru
        _
      %p158 = scmp.lt.s32.totalorder %s11, 2
      // Predicated region
      $region25: #{decoder_block.12} parent=5 // pred_check
        %p159 = pneg %p158
      $region26: #{decoder_block.12} parent=5 // pred_check_branch
        %161 = sbr.rel (%p159) target = $region28
      $region27: #{decoder_block.12} parent=5 // pred_region
        // Predicated region
        $region29: #{decoder_block.12} parent=27 // pred_check
          %p162 = pneg %p31
        $region30: #{decoder_block.12} parent=27 // pred_check_branch
          %164 = sbr.rel (%p162) target = $region32
        $region31: #{decoder_block.12} parent=27 // pred_region
          %p165 = scmp.lt.s32.totalorder %s11, 1
          %s166 = scalar_select %p165, %s11, 1
          %s167 = smul.addr %s166, 8
          %s168 = scalar_lea.vmem %s0, %s167
        $region32: #{decoder_block.12} parent=27 // pred_fallthru
          _
      $region28: #{decoder_block.12} parent=5 // pred_fallthru
        _
      %p169 = scmp.le.s32.totalorder 1, %s11
      %p170 = scmp.lt.s32.totalorder %s11, 3
      %p171 = pnand %p169, %p170
      %p172 = pneg %p171
      // Predicated region
      $region33: #{decoder_block.12} parent=5 // pred_check
        _
      $region34: #{decoder_block.12} parent=5 // pred_check_branch
        %174 = sbr.rel (%p171) target = $region36
      $region35: #{decoder_block.12} parent=5 // pred_region
        %s175 = ssub.s32 %s11, 1
        // Predicated region
        $region37: #{decoder_block.12} parent=35 // pred_check
          %p176 = pneg %p58
        $region38: #{decoder_block.12} parent=35 // pred_check_branch
          %178 = sbr.rel (%p176) target = $region40
        $region39: #{decoder_block.12} parent=35 // pred_region
          %179 = dma.done [#allocation3], 16
        $region40: #{decoder_block.12} parent=35 // pred_fallthru
          _
        %180 = sfence
        %p181 = scmp.lt.s32.totalorder %s16, 1
        %s182 = scalar_select %p181, %s16, 1
        %s183 = smul.addr %s182, 8
        %s184 = scalar_lea.vmem %s0, %s183
        %p185 = pneg %p37
        %p186 = pneg %p34
        %p187 = pneg %p58
        %p188 = pneg %p55
        %p189 = pneg %p79
        %p190 = pneg %p76
        %p191 = pneg %p100
        %p192 = pneg %p97
        %p193 = pneg %p126
        %p194 = pneg %p123
        %p195 = scmp.lt.s32.totalorder %s16, 1
        %s196 = scalar_select %p195, %s16, 1
        %s197 = smul.addr %s196, 8
        %s198 = scalar_lea.vmem %s4, %s197
        %p199 = scmp.lt.s32.totalorder %s16, 1
        %s200 = scalar_select %p199, %s16, 1
        %s201 = smul.addr %s200, 8
        %s202 = scalar_lea.vmem %s0, %s201
        %p203 = scmp.lt.s32.totalorder %s16, 1
        %s204 = scalar_select %p203, %s16, 1
        %s205 = smul.addr %s204, 8
        %s206 = scalar_lea.vmem %s4, %s205
        %v208 = vld [vmem:[%s202] sm:$0xff]
        %s209 = sld [smem:[#allocation2]]
        %s210 = sld [smem:[#allocation2 + $0x1]]
        %vm211 = vcmask 523264
        %v212 = vsel %vm211, %v208, 0.0
        %213 = vadd.xlane.f32.xlu0 %v212
        %v214 = vpop.xlane.xlu0 %213
        %v215 = vrcp.pop 64.0
        %v216 = vmul.f32 %v214, %v215
        %v217 = vsub.f32 %v208, %v216
        %v218 = vmul.f32 %v217, %v217
        %v219 = vsel %vm211, %v218, 0.0
        %220 = vadd.xlane.f32.xlu0 %v219
        %v221 = vpop.xlane.xlu0 %220
        %v222 = vrcp.pop 63.0
        %v223 = vmul.f32 %v221, %v222
        %v224 = vrsqrt.pop %v223
        %v225 = vmul.f32 %v223, %v224
        %vm226 = vcmp.eq.f32.partialorder %v223, inf
        %v227 = vsel %vm226, %v223, %v225
        %vm228 = vcmp.eq.f32.partialorder %v223, 0.0
        %v229 = vand.u32 %v223, 2147483648
        %v230 = vsel %vm228, %v229, %v227
        %v231 = vadd.f32 %v230, 1e-06
        %v232 = vstv %s209
        %v233 = vrcp.pop %v231
        %v234 = vmul.f32 %v232, %v233
        %v235 = vmul.f32 %v217, %v234
        %v236 = vstv %s210
        %v237 = vadd.f32 %v235, %v236
        %v238 = vpack.c.bf16 %v237, %v237
        %v239 = vld [vmem:[%s2] sm:$0xf]
        %v240 = vld [vmem:[%s2 + $0x4] sm:$0xf]
        %v241 = vld [vmem:[%s2 + $0x8] sm:$0xf]
        %v242 = vld [vmem:[%s2 + $0xc] sm:$0xf]
        %v243 = vld [vmem:[%s2 + $0x10] sm:$0xf]
        %v244 = vld [vmem:[%s2 + $0x14] sm:$0xf]
        %v245 = vld [vmem:[%s2 + $0x18] sm:$0xf]
        %v246 = vld [vmem:[%s2 + $0x1c] sm:$0xf]
        %v247 = vld [vmem:[%s3] sm:$0x1]
        %v249 = vlaneseq
        %v250 = vshrl.u32 %v249, 7
        %v251 = vsub.s32 0, %v250
        %v252 = vrot.slane %v247, %v251
        %v262 = vunpack.c.l.b16 %v239
        %v263 = vunpack.c.l.b16 %v240
        %v264 = vunpack.c.l.b16 %v241
        %v265 = vunpack.c.l.b16 %v242
        %v266 = vunpack.c.l.b16 %v243
        %v267 = vunpack.c.l.b16 %v244
        %v268 = vunpack.c.l.b16 %v245
        %v269 = vunpack.c.l.b16 %v246
        %v270 = vpack.c.b16 %v263, %v262
        %v271 = vpack.c.b16 %v265, %v264
        %v272 = vpack.c.b16 %v267, %v266
        %v273 = vpack.c.b16 %v269, %v268
        %v279 = vsel %vm211, %v238, 0
        %281 = vmatprep.subr.bf16.mxu0 0
        %282 = vmatpush1.bf16.msra.mxu0 0
        %283 = vmatprep.subr.bf16.mxu0 0
        %284 = vmatpush1.bf16.msra.mxu0 0
        %285 = vmatprep.subr.bf16.mxu0 0
        %286 = vmatpush1.bf16.msra.mxu0 0
        %287 = vmatprep.subr.bf16.mxu0 0
        %288 = vmatpush1.bf16.msra.mxu0 0
        %289 = vmatprep.subr.bf16.mxu0 0
        %290 = vmatpush1.bf16.msra.mxu0 %v273
        %291 = vmatprep.subr.bf16.mxu0 0
        %292 = vmatpush1.bf16.msra.mxu0 %v272
        %293 = vmatprep.subr.bf16.mxu0 0
        %294 = vmatpush1.bf16.msra.mxu0 %v271
        %295 = vmatprep.subr.bf16.mxu0 0
        %296 = vmatpush1.bf16.msra.mxu0 %v270
        %297 = vmatprep.subr.bf16.mxu0 0
        %298 = vmatpush2.bf16.msra.mxu0 0
        %299 = vmatprep.subr.bf16.mxu0 0
        %300 = vmatpush2.bf16.msra.mxu0 0
        %301 = vmatprep.subr.bf16.mxu0 0
        %302 = vmatpush2.bf16.msra.mxu0 0
        %303 = vmatprep.subr.bf16.mxu0 0
        %304 = vmatpush2.bf16.msra.mxu0 0
        %305 = vmatprep.subr.bf16.mxu0 0
        %306 = vmatpush2.bf16.msra.mxu0 0
        %307 = vmatprep.subr.bf16.mxu0 0
        %308 = vmatpush2.bf16.msra.mxu0 0
        %309 = vmatprep.subr.bf16.mxu0 0
        %310 = vmatpush2.bf16.msra.mxu0 0
        %311 = vmatprep.subr.bf16.mxu0 0
        %312 = vmatpush2.bf16.msra.mxu0 0
        %313 = vmatprep.mubr.bf16.mxu0 0
        %314 = vmatmul.mubr.bf16.gmra.mxu0 %v279
        %v315 = vpop.f32.mrf.mxu0
        %v316 = vadd.f32 %v252, %v315
        %v317 = vpop.f32.mrf.mxu0
        %v318 = vpop.f32.mrf.mxu0
        %v319 = vpop.f32.mrf.mxu0
        %320 = vdwg.mxu0
        %321 = vst.msk [vmem:[%s206] sm:$0xff] %vm211, %v316
        %p322 = scmp.lt.s32.totalorder %s16, 1
        %s323 = scalar_select %p322, %s16, 1
        %s324 = smul.addr %s323, 8
        %s325 = scalar_lea.vmem %s4, %s324
        // Predicated region
        $region41: #{decoder_block.12} parent=35 // pred_check
          %p326 = pneg %p123
        $region42: #{decoder_block.12} parent=35 // pred_check_branch
          %328 = sbr.rel (%p326) target = $region44
        $region43: #{decoder_block.12} parent=35 // pred_region
          _
        $region44: #{decoder_block.12} parent=35 // pred_fallthru
          _
      $region36: #{decoder_block.12} parent=5 // pred_fallthru
        _
      %p329 = scmp.le.s32.totalorder 2, %s11
      // Predicated region
      $region45: #{decoder_block.12} parent=5 // pred_check
        %p330 = pneg %p329
      $region46: #{decoder_block.12} parent=5 // pred_check_branch
        %332 = sbr.rel (%p330) target = $region48
      $region47: #{decoder_block.12} parent=5 // pred_region
        %s333 = ssub.s32 %s11, 2
        // Predicated region
        $region49: #{decoder_block.12} parent=47 // pred_check
          %p334 = pneg %p129
        $region50: #{decoder_block.12} parent=47 // pred_check_branch
          %336 = sbr.rel (%p334) target = $region52
        $region51: #{decoder_block.12} parent=47 // pred_region
          %p337 = scmp.lt.s32.totalorder %s17, 1
          %s338 = scalar_select %p337, %s17, 1
          %s339 = smul.addr %s338, 8
          %s340 = scalar_lea.vmem %s4, %s339
        $region52: #{decoder_block.12} parent=47 // pred_fallthru
          _
      $region48: #{decoder_block.12} parent=5 // pred_fallthru
        _
    $region6: #{decoder_block.12} parent=1 // loop_footer
      %s15 = sadd.s32 1, %s11
    $region7: #{decoder_block.12} parent=1 // loop_footer_branch
      %10 = sbr.rel target = $region3
    $region8: #{decoder_block.12} parent=1 // loop_exit
      _
    %341 = vsyncpa [#allocation3], 1
    %s342 = scalar_lea.sflag [#allocation3], 1
    %343 = vsyncpa %s342, 1

// kernel: decoder_block.11
$region0: #{decoder_block.11}
  #allocation0 [shape = 'u32[]', space=smem, size = 0x4, offset = 0x4, fixed_abs, tag = 'smem constant byte address 0x4 - core index']
  #allocation1 [shape = 'u32[144,128]{1,0:T(1,128)}', space=vmem, size = 0x12000, scoped, tag = 'internal scratch']
  %s0 = inlined_call_operand.vmem [shape: f32[16,64], index: 0, kind: input, shape index: {}]
  %s1 = inlined_call_operand.vmem [shape: bf16[64,64], index: 1, kind: input, shape index: {}]
  %s2 = inlined_call_operand.vmem [shape: f32[1,64], index: 2, kind: input, shape index: {}]
  %s3 = inlined_call_operand.vmem [shape: f32[16,64], index: 3, kind: input, shape index: {}]
  %s4 = inlined_call_operand.vmem [shape: f32[16,64], index: 4, kind: output, shape index: {}]
  %s5 = sld [smem:[#allocation0]]
  $region49: #{decoder_block.11} parent=0
    _
  %s7 = ssub.s32 1, %s5
  %s8 = scalar_select 0, %s7, %s5
  loop: start=0, step=1, limit=4
  $region2: #{decoder_block.11} parent=0 // loop_pre_header
    _
  $region3: #{decoder_block.11} parent=0 // loop_header
    %s10 = sphi 0, %s14
    %p11 = scmp.ge.s32.totalorder %s10, 4
    %s20 = sphi 0, %s22
    %s23 = sphi 0, %s20
    %s24 = sphi 0, %s23
    %s40 = sphi 0, %s24
    %s44 = sphi 0, %s44
    %s46 = sphi 0, %s44
    %s47 = sphi 0, %s46
    %s61 = sphi 0, %s47
    %s65 = sphi 0, %s65
    %s67 = sphi 0, %s65
    %s68 = sphi 0, %s67
    %s82 = sphi 0, %s68
    %s88 = sphi 0, %s90
    %s91 = sphi 0, %s88
    %s92 = sphi 0, %s91
    %s108 = sphi 0, %s92
    %s114 = sphi 0, %s116
    %s117 = sphi 0, %s114
    %s118 = sphi 0, %s117
    %s134 = sphi 0, %s118
  $region4: #{decoder_block.11} parent=0 // loop_header_branch
    %13 = sbr.rel (%p11) target = $region8
  $region5: #{decoder_block.11} parent=0 // loop_body
    %s15 = ssub.s32 %s10, 1
    %s16 = ssub.s32 %s10, 2
    %s17 = sadd.s32 %s10, 1
    %s18 = ssub.s32 %s10, %s17
    %p19 = scmp.eq.s32.totalorder %s18, 0
    %s21 = sadd.s32 %s20, 1
    %s22 = scalar_select %p19, %s20, %s21
    %p25 = pneg %p19
    %p26 = scmp.eq.s32.totalorder %s10, 1
    %p27 = por %p25, %p26
    %p28 = scmp.ne.s32.totalorder %s20, %s23
    %p29 = scmp.eq.s32.totalorder %s10, 0
    %p30 = por %p28, %p29
    %p31 = scmp.ne.s32.totalorder %s20, %s23
    %p32 = scmp.eq.s32.totalorder %s15, 1
    %p33 = por %p31, %p32
    %p34 = scmp.ne.s32.totalorder %s23, %s24
    %p35 = scmp.eq.s32.totalorder %s15, 0
    %p36 = por %p34, %p35
    %p37 = scmp.ne.s32.totalorder %s23, %s24
    %p38 = scmp.eq.s32.totalorder %s16, 1
    %p39 = por %p37, %p38
    %p41 = scmp.ne.s32.totalorder %s24, %s40
    %p42 = scmp.eq.s32.totalorder %s16, 0
    %p43 = por %p41, %p42
    %s45 = sadd.s32 %s44, 1
    %p48 = scmp.eq.s32.totalorder %s10, 1
    %p49 = scmp.ne.s32.totalorder %s44, %s46
    %p50 = scmp.eq.s32.totalorder %s10, 0
    %p51 = por %p49, %p50
    %p52 = scmp.ne.s32.totalorder %s44, %s46
    %p53 = scmp.eq.s32.totalorder %s15, 1
    %p54 = por %p52, %p53
    %p55 = scmp.ne.s32.totalorder %s46, %s47
    %p56 = scmp.eq.s32.totalorder %s15, 0
    %p57 = por %p55, %p56
    %p58 = scmp.ne.s32.totalorder %s46, %s47
    %p59 = scmp.eq.s32.totalorder %s16, 1
    %p60 = por %p58, %p59
    %p62 = scmp.ne.s32.totalorder %s47, %s61
    %p63 = scmp.eq.s32.totalorder %s16, 0
    %p64 = por %p62, %p63
    %s66 = sadd.s32 %s65, 1
    %p69 = scmp.eq.s32.totalorder %s10, 1
    %p70 = scmp.ne.s32.totalorder %s65, %s67
    %p71 = scmp.eq.s32.totalorder %s10, 0
    %p72 = por %p70, %p71
    %p73 = scmp.ne.s32.totalorder %s65, %s67
    %p74 = scmp.eq.s32.totalorder %s15, 1
    %p75 = por %p73, %p74
    %p76 = scmp.ne.s32.totalorder %s67, %s68
    %p77 = scmp.eq.s32.totalorder %s15, 0
    %p78 = por %p76, %p77
    %p79 = scmp.ne.s32.totalorder %s67, %s68
    %p80 = scmp.eq.s32.totalorder %s16, 1
    %p81 = por %p79, %p80
    %p83 = scmp.ne.s32.totalorder %s68, %s82
    %p84 = scmp.eq.s32.totalorder %s16, 0
    %p85 = por %p83, %p84
    %s86 = ssub.s32 %s10, %s17
    %p87 = scmp.eq.s32.totalorder %s86, 0
    %s89 = sadd.s32 %s88, 1
    %s90 = scalar_select %p87, %s88, %s89
    %p93 = pneg %p87
    %p94 = scmp.eq.s32.totalorder %s10, 1
    %p95 = por %p93, %p94
    %p96 = scmp.ne.s32.totalorder %s88, %s91
    %p97 = scmp.eq.s32.totalorder %s10, 0
    %p98 = por %p96, %p97
    %p99 = scmp.ne.s32.totalorder %s88, %s91
    %p100 = scmp.eq.s32.totalorder %s15, 1
    %p101 = por %p99, %p100
    %p102 = scmp.ne.s32.totalorder %s91, %s92
    %p103 = scmp.eq.s32.totalorder %s15, 0
    %p104 = por %p102, %p103
    %p105 = scmp.ne.s32.totalorder %s91, %s92
    %p106 = scmp.eq.s32.totalorder %s16, 1
    %p107 = por %p105, %p106
    %p109 = scmp.ne.s32.totalorder %s92, %s108
    %p110 = scmp.eq.s32.totalorder %s16, 0
    %p111 = por %p109, %p110
    %s112 = ssub.s32 %s10, %s17
    %p113 = scmp.eq.s32.totalorder %s112, 0
    %s115 = sadd.s32 %s114, 1
    %s116 = scalar_select %p113, %s114, %s115
    %p119 = pneg %p113
    %p120 = scmp.eq.s32.totalorder %s10, 1
    %p121 = por %p119, %p120
    %p122 = scmp.ne.s32.totalorder %s114, %s117
    %p123 = scmp.eq.s32.totalorder %s10, 0
    %p124 = por %p122, %p123
    %p125 = scmp.ne.s32.totalorder %s114, %s117
    %p126 = scmp.eq.s32.totalorder %s15, 1
    %p127 = por %p125, %p126
    %p128 = scmp.ne.s32.totalorder %s117, %s118
    %p129 = scmp.eq.s32.totalorder %s15, 0
    %p130 = por %p128, %p129
    %p131 = scmp.ne.s32.totalorder %s117, %s118
    %p132 = scmp.eq.s32.totalorder %s16, 1
    %p133 = por %p131, %p132
    %p135 = scmp.ne.s32.totalorder %s118, %s134
    %p136 = scmp.eq.s32.totalorder %s16, 0
    %p137 = por %p135, %p136
    %p138 = scmp.le.s32.totalorder 1, %s10
    %p139 = scmp.lt.s32.totalorder %s10, 3
    %p140 = pnand %p138, %p139
    %p141 = pneg %p140
    // Predicated region
    $region9: #{decoder_block.11} parent=5 // pred_check
      _
    $region10: #{decoder_block.11} parent=5 // pred_check_branch
      %143 = sbr.rel (%p140) target = $region12
    $region11: #{decoder_block.11} parent=5 // pred_region
      %s144 = ssub.s32 %s10, 1
      // Predicated region
      $region13: #{decoder_block.11} parent=11 // pred_check
        %p145 = pneg %p57
      $region14: #{decoder_block.11} parent=11 // pred_check_branch
        %147 = sbr.rel (%p145) target = $region16
      $region15: #{decoder_block.11} parent=11 // pred_region
        _
      $region16: #{decoder_block.11} parent=11 // pred_fallthru
        _
      // Predicated region
      $region17: #{decoder_block.11} parent=11 // pred_check
        %p148 = pneg %p78
      $region18: #{decoder_block.11} parent=11 // pred_check_branch
        %150 = sbr.rel (%p148) target = $region20
      $region19: #{decoder_block.11} parent=11 // pred_region
        _
      $region20: #{decoder_block.11} parent=11 // pred_fallthru
        _
    $region12: #{decoder_block.11} parent=5 // pred_fallthru
      _
    %p151 = scmp.lt.s32.totalorder %s10, 2
    // Predicated region
    $region21: #{decoder_block.11} parent=5 // pred_check
      %p152 = pneg %p151
    $region22: #{decoder_block.11} parent=5 // pred_check_branch
      %154 = sbr.rel (%p152) target = $region24
    $region23: #{decoder_block.11} parent=5 // pred_region
      // Predicated region
      $region25: #{decoder_block.11} parent=23 // pred_check
        %p155 = pneg %p30
      $region26: #{decoder_block.11} parent=23 // pred_check_branch
        %157 = sbr.rel (%p155) target = $region28
      $region27: #{decoder_block.11} parent=23 // pred_region
        %p158 = scmp.lt.s32.totalorder %s10, 1
        %s159 = scalar_select %p158, %s10, 1
        %s160 = smul.addr %s159, 8
        %s161 = scalar_lea.vmem %s0, %s160
      $region28: #{decoder_block.11} parent=23 // pred_fallthru
        _
      // Predicated region
      $region29: #{decoder_block.11} parent=23 // pred_check
        %p162 = pneg %p98
      $region30: #{decoder_block.11} parent=23 // pred_check_branch
        %164 = sbr.rel (%p162) target = $region32
      $region31: #{decoder_block.11} parent=23 // pred_region
        %p165 = scmp.lt.s32.totalorder %s10, 1
        %s166 = scalar_select %p165, %s10, 1
        %s167 = smul.addr %s166, 8
        %s168 = scalar_lea.vmem %s3, %s167
      $region32: #{decoder_block.11} parent=23 // pred_fallthru
        _
    $region24: #{decoder_block.11} parent=5 // pred_fallthru
      _
    %p169 = scmp.le.s32.totalorder 1, %s10
    %p170 = scmp.lt.s32.totalorder %s10, 3
    %p171 = pnand %p169, %p170
    %p172 = pneg %p171
    // Predicated region
    $region33: #{decoder_block.11} parent=5 // pred_check
      _
    $region34: #{decoder_block.11} parent=5 // pred_check_branch
      %174 = sbr.rel (%p171) target = $region36
    $region35: #{decoder_block.11} parent=5 // pred_region
      %s175 = ssub.s32 %s10, 1
      %p176 = scmp.lt.s32.totalorder %s15, 1
      %s177 = scalar_select %p176, %s15, 1
      %s178 = smul.addr %s177, 8
      %s179 = scalar_lea.vmem %s0, %s178
      %p180 = pneg %p36
      %p181 = pneg %p33
      %p182 = pneg %p57
      %p183 = pneg %p54
      %p184 = pneg %p78
      %p185 = pneg %p75
      %p186 = scmp.lt.s32.totalorder %s15, 1
      %s187 = scalar_select %p186, %s15, 1
      %s188 = smul.addr %s187, 8
      %s189 = scalar_lea.vmem %s3, %s188
      %p190 = pneg %p104
      %p191 = pneg %p101
      %p192 = pneg %p130
      %p193 = pneg %p127
      %p194 = scmp.lt.s32.totalorder %s15, 1
      %s195 = scalar_select %p194, %s15, 1
      %s196 = smul.addr %s195, 8
      %s197 = scalar_lea.vmem %s4, %s196
      %p198 = scmp.lt.s32.totalorder %s15, 1
      %s199 = scalar_select %p198, %s15, 1
      %s200 = smul.addr %s199, 8
      %s201 = scalar_lea.vmem %s0, %s200
      %p202 = scmp.lt.s32.totalorder %s15, 1
      %s203 = scalar_select %p202, %s15, 1
      %s204 = smul.addr %s203, 8
      %s205 = scalar_lea.vmem %s3, %s204
      %p206 = scmp.lt.s32.totalorder %s15, 1
      %s207 = scalar_select %p206, %s15, 1
      %s208 = smul.addr %s207, 8
      %s209 = scalar_lea.vmem %s4, %s208
      %v211 = vld [vmem:[%s201] sm:$0xff]
      %v212 = vpack.c.bf16 %v211, %v211
      %v213 = vld [vmem:[%s1] sm:$0xf]
      %v214 = vld [vmem:[%s1 + $0x4] sm:$0xf]
      %v215 = vld [vmem:[%s1 + $0x8] sm:$0xf]
      %v216 = vld [vmem:[%s1 + $0xc] sm:$0xf]
      %v217 = vld [vmem:[%s1 + $0x10] sm:$0xf]
      %v218 = vld [vmem:[%s1 + $0x14] sm:$0xf]
      %v219 = vld [vmem:[%s1 + $0x18] sm:$0xf]
      %v220 = vld [vmem:[%s1 + $0x1c] sm:$0xf]
      %v221 = vld [vmem:[%s2] sm:$0x1]
      %v223 = vlaneseq
      %v224 = vshrl.u32 %v223, 7
      %v225 = vsub.s32 0, %v224
      %v226 = vrot.slane %v221, %v225
      %v236 = vunpack.c.l.b16 %v213
      %v237 = vunpack.c.l.b16 %v214
      %v238 = vunpack.c.l.b16 %v215
      %v239 = vunpack.c.l.b16 %v216
      %v240 = vunpack.c.l.b16 %v217
      %v241 = vunpack.c.l.b16 %v218
      %v242 = vunpack.c.l.b16 %v219
      %v243 = vunpack.c.l.b16 %v220
      %v244 = vpack.c.b16 %v237, %v236
      %v245 = vpack.c.b16 %v239, %v238
      %v246 = vpack.c.b16 %v241, %v240
      %v247 = vpack.c.b16 %v243, %v242
      %vm252 = vcmask 523264
      %v254 = vsel %vm252, %v212, 0
      %256 = vmatprep.subr.bf16.mxu0 0
      %257 = vmatpush1.bf16.msra.mxu0 0
      %258 = vmatprep.subr.bf16.mxu0 0
      %259 = vmatpush1.bf16.msra.mxu0 0
      %260 = vmatprep.subr.bf16.mxu0 0
      %261 = vmatpush1.bf16.msra.mxu0 0
      %262 = vmatprep.subr.bf16.mxu0 0
      %263 = vmatpush1.bf16.msra.mxu0 0
      %264 = vmatprep.subr.bf16.mxu0 0
      %265 = vmatpush1.bf16.msra.mxu0 %v247
      %266 = vmatprep.subr.bf16.mxu0 0
      %267 = vmatpush1.bf16.msra.mxu0 %v246
      %268 = vmatprep.subr.bf16.mxu0 0
      %269 = vmatpush1.bf16.msra.mxu0 %v245
      %270 = vmatprep.subr.bf16.mxu0 0
      %271 = vmatpush1.bf16.msra.mxu0 %v244
      %272 = vmatprep.subr.bf16.mxu0 0
      %273 = vmatpush2.bf16.msra.mxu0 0
      %274 = vmatprep.subr.bf16.mxu0 0
      %275 = vmatpush2.bf16.msra.mxu0 0
      %276 = vmatprep.subr.bf16.mxu0 0
      %277 = vmatpush2.bf16.msra.mxu0 0
      %278 = vmatprep.subr.bf16.mxu0 0
      %279 = vmatpush2.bf16.msra.mxu0 0
      %280 = vmatprep.subr.bf16.mxu0 0
      %281 = vmatpush2.bf16.msra.mxu0 0
      %282 = vmatprep.subr.bf16.mxu0 0
      %283 = vmatpush2.bf16.msra.mxu0 0
      %284 = vmatprep.subr.bf16.mxu0 0
      %285 = vmatpush2.bf16.msra.mxu0 0
      %286 = vmatprep.subr.bf16.mxu0 0
      %287 = vmatpush2.bf16.msra.mxu0 0
      %288 = vmatprep.mubr.bf16.mxu0 0
      %289 = vmatmul.mubr.bf16.gmra.mxu0 %v254
      %v290 = vpop.f32.mrf.mxu0
      %v291 = vadd.f32 %v226, %v290
      %v292 = vpop.f32.mrf.mxu0
      %v293 = vpop.f32.mrf.mxu0
      %v294 = vpop.f32.mrf.mxu0
      %295 = vdwg.mxu0
      %v296 = vld [vmem:[%s205] sm:$0xff]
      %v297 = vadd.f32 %v291, %v296
      %298 = vst.msk [vmem:[%s209] sm:$0xff] %vm252, %v297
      %p299 = scmp.lt.s32.totalorder %s15, 1
      %s300 = scalar_select %p299, %s15, 1
      %s301 = smul.addr %s300, 8
      %s302 = scalar_lea.vmem %s4, %s301
      // Predicated region
      $region37: #{decoder_block.11} parent=35 // pred_check
        %p303 = pneg %p127
      $region38: #{decoder_block.11} parent=35 // pred_check_branch
        %305 = sbr.rel (%p303) target = $region40
      $region39: #{decoder_block.11} parent=35 // pred_region
        _
      $region40: #{decoder_block.11} parent=35 // pred_fallthru
        _
    $region36: #{decoder_block.11} parent=5 // pred_fallthru
      _
    %p306 = scmp.le.s32.totalorder 2, %s10
    // Predicated region
    $region41: #{decoder_block.11} parent=5 // pred_check
      %p307 = pneg %p306
    $region42: #{decoder_block.11} parent=5 // pred_check_branch
      %309 = sbr.rel (%p307) target = $region44
    $region43: #{decoder_block.11} parent=5 // pred_region
      %s310 = ssub.s32 %s10, 2
      // Predicated region
      $region45: #{decoder_block.11} parent=43 // pred_check
        %p311 = pneg %p133
      $region46: #{decoder_block.11} parent=43 // pred_check_branch
        %313 = sbr.rel (%p311) target = $region48
      $region47: #{decoder_block.11} parent=43 // pred_region
        %p314 = scmp.lt.s32.totalorder %s16, 1
        %s315 = scalar_select %p314, %s16, 1
        %s316 = smul.addr %s315, 8
        %s317 = scalar_lea.vmem %s4, %s316
      $region48: #{decoder_block.11} parent=43 // pred_fallthru
        _
    $region44: #{decoder_block.11} parent=5 // pred_fallthru
      _
  $region6: #{decoder_block.11} parent=0 // loop_footer
    %s14 = sadd.s32 1, %s10
  $region7: #{decoder_block.11} parent=0 // loop_footer_branch
    %9 = sbr.rel target = $region3
  $region8: #{decoder_block.11} parent=0 // loop_exit
    _

// kernel: decoder_block.9
$region0: #{decoder_block.9}
  #allocation0 [shape = 'u32[]', space=smem, size = 0x4, offset = 0x4, fixed_abs, tag = 'smem constant byte address 0x4 - core index']
  #allocation1 [shape = 'u32[144,128]{1,0:T(1,128)}', space=vmem, size = 0x12000, scoped, tag = 'internal scratch']
  %s0 = inlined_call_operand.vmem [shape: f32[16,64], index: 0, kind: input, shape index: {}]
  %s1 = inlined_call_operand.vmem [shape: f32[2], index: 1, kind: input, shape index: {}]
  %s2 = inlined_call_operand.vmem [shape: bf16[64,64], index: 2, kind: input, shape index: {}]
  %s3 = inlined_call_operand.vmem [shape: f32[1,64], index: 3, kind: input, shape index: {}]
  %s4 = inlined_call_operand.vmem [shape: bf16[64,64], index: 4, kind: input, shape index: {}]
  %s5 = inlined_call_operand.vmem [shape: f32[1,64], index: 5, kind: input, shape index: {}]
  %s6 = inlined_call_operand.vmem [shape: bf16[64,64], index: 6, kind: input, shape index: {}]
  %s7 = inlined_call_operand.vmem [shape: f32[1,64], index: 7, kind: input, shape index: {}]
  %s8 = inlined_call_operand.vmem [shape: f32[16,64], index: 8, kind: output, shape index: {0}]
  %s9 = inlined_call_operand.vmem [shape: f32[16,64], index: 9, kind: output, shape index: {1}]
  %s10 = inlined_call_operand.vmem [shape: f32[16,64], index: 10, kind: output, shape index: {2}]
  %11 = xla_tuple %s8, %s9, %s10
  %s12 = sld [smem:[#allocation0]]
  $region85: #{decoder_block.9} parent=0
    _
  %s14 = ssub.s32 1, %s12
  %s15 = scalar_select 0, %s14, %s12
  $region1: #{decoder_block.9} parent=0
    #allocation2 [shape = 'u8[512]{0}', space=smem, size = 0x200, scoped, tag = 'input window, operand 1, single buffered']
    #allocation3 [shape = 's32[2]{0}', space=sflag, size = 0x8, scoped, tag = 'scoped memory for decoder_block.9']
    %16 = vsyncpa [#allocation3], 0
    loop: start=0, step=1, limit=4
    $region2: #{decoder_block.9} parent=1 // loop_pre_header
      _
    $region3: #{decoder_block.9} parent=1 // loop_header
      %s18 = sphi 0, %s22
      %p19 = scmp.ge.s32.totalorder %s18, 4
      %s28 = sphi 0, %s30
      %s31 = sphi 0, %s28
      %s32 = sphi 0, %s31
      %s48 = sphi 0, %s32
      %s52 = sphi 0, %s52
      %s54 = sphi 0, %s52
      %s55 = sphi 0, %s54
      %s69 = sphi 0, %s55
      %s73 = sphi 0, %s73
      %s75 = sphi 0, %s73
      %s76 = sphi 0, %s75
      %s90 = sphi 0, %s76
      %s94 = sphi 0, %s94
      %s96 = sphi 0, %s94
      %s97 = sphi 0, %s96
      %s111 = sphi 0, %s97
      %s115 = sphi 0, %s115
      %s117 = sphi 0, %s115
      %s118 = sphi 0, %s117
      %s132 = sphi 0, %s118
      %s136 = sphi 0, %s136
      %s138 = sphi 0, %s136
      %s139 = sphi 0, %s138
      %s153 = sphi 0, %s139
      %s157 = sphi 0, %s157
      %s159 = sphi 0, %s157
      %s160 = sphi 0, %s159
      %s174 = sphi 0, %s160
      %s178 = sphi 0, %s178
      %s180 = sphi 0, %s178
      %s181 = sphi 0, %s180
      %s195 = sphi 0, %s181
      %s201 = sphi 0, %s203
      %s204 = sphi 0, %s201
      %s205 = sphi 0, %s204
      %s221 = sphi 0, %s205
      %s227 = sphi 0, %s229
      %s230 = sphi 0, %s227
      %s231 = sphi 0, %s230
      %s247 = sphi 0, %s231
      %s253 = sphi 0, %s255
      %s256 = sphi 0, %s253
      %s257 = sphi 0, %s256
      %s273 = sphi 0, %s257
    $region4: #{decoder_block.9} parent=1 // loop_header_branch
      %21 = sbr.rel (%p19) target = $region8
    $region5: #{decoder_block.9} parent=1 // loop_body
      %s23 = ssub.s32 %s18, 1
      %s24 = ssub.s32 %s18, 2
      %s25 = sadd.s32 %s18, 1
      %s26 = ssub.s32 %s18, %s25
      %p27 = scmp.eq.s32.totalorder %s26, 0
      %s29 = sadd.s32 %s28, 1
      %s30 = scalar_select %p27, %s28, %s29
      %p33 = pneg %p27
      %p34 = scmp.eq.s32.totalorder %s18, 1
      %p35 = por %p33, %p34
      %p36 = scmp.ne.s32.totalorder %s28, %s31
      %p37 = scmp.eq.s32.totalorder %s18, 0
      %p38 = por %p36, %p37
      %p39 = scmp.ne.s32.totalorder %s28, %s31
      %p40 = scmp.eq.s32.totalorder %s23, 1
      %p41 = por %p39, %p40
      %p42 = scmp.ne.s32.totalorder %s31, %s32
      %p43 = scmp.eq.s32.totalorder %s23, 0
      %p44 = por %p42, %p43
      %p45 = scmp.ne.s32.totalorder %s31, %s32
      %p46 = scmp.eq.s32.totalorder %s24, 1
      %p47 = por %p45, %p46
      %p49 = scmp.ne.s32.totalorder %s32, %s48
      %p50 = scmp.eq.s32.totalorder %s24, 0
      %p51 = por %p49, %p50
      %s53 = sadd.s32 %s52, 1
      %p56 = scmp.eq.s32.totalorder %s18, 1
      %p57 = scmp.ne.s32.totalorder %s52, %s54
      %p58 = scmp.eq.s32.totalorder %s18, 0
      %p59 = por %p57, %p58
      %p60 = scmp.ne.s32.totalorder %s52, %s54
      %p61 = scmp.eq.s32.totalorder %s23, 1
      %p62 = por %p60, %p61
      %p63 = scmp.ne.s32.totalorder %s54, %s55
      %p64 = scmp.eq.s32.totalorder %s23, 0
      %p65 = por %p63, %p64
      %p66 = scmp.ne.s32.totalorder %s54, %s55
      %p67 = scmp.eq.s32.totalorder %s24, 1
      %p68 = por %p66, %p67
      %p70 = scmp.ne.s32.totalorder %s55, %s69
      %p71 = scmp.eq.s32.totalorder %s24, 0
      %p72 = por %p70, %p71
      %s74 = sadd.s32 %s73, 1
      %p77 = scmp.eq.s32.totalorder %s18, 1
      %p78 = scmp.ne.s32.totalorder %s73, %s75
      %p79 = scmp.eq.s32.totalorder %s18, 0
      %p80 = por %p78, %p79
      %p81 = scmp.ne.s32.totalorder %s73, %s75
      %p82 = scmp.eq.s32.totalorder %s23, 1
      %p83 = por %p81, %p82
      %p84 = scmp.ne.s32.totalorder %s75, %s76
      %p85 = scmp.eq.s32.totalorder %s23, 0
      %p86 = por %p84, %p85
      %p87 = scmp.ne.s32.totalorder %s75, %s76
      %p88 = scmp.eq.s32.totalorder %s24, 1
      %p89 = por %p87, %p88
      %p91 = scmp.ne.s32.totalorder %s76, %s90
      %p92 = scmp.eq.s32.totalorder %s24, 0
      %p93 = por %p91, %p92
      %s95 = sadd.s32 %s94, 1
      %p98 = scmp.eq.s32.totalorder %s18, 1
      %p99 = scmp.ne.s32.totalorder %s94, %s96
      %p100 = scmp.eq.s32.totalorder %s18, 0
      %p101 = por %p99, %p100
      %p102 = scmp.ne.s32.totalorder %s94, %s96
      %p103 = scmp.eq.s32.totalorder %s23, 1
      %p104 = por %p102, %p103
      %p105 = scmp.ne.s32.totalorder %s96, %s97
      %p106 = scmp.eq.s32.totalorder %s23, 0
      %p107 = por %p105, %p106
      %p108 = scmp.ne.s32.totalorder %s96, %s97
      %p109 = scmp.eq.s32.totalorder %s24, 1
      %p110 = por %p108, %p109
      %p112 = scmp.ne.s32.totalorder %s97, %s111
      %p113 = scmp.eq.s32.totalorder %s24, 0
      %p114 = por %p112, %p113
      %s116 = sadd.s32 %s115, 1
      %p119 = scmp.eq.s32.totalorder %s18, 1
      %p120 = scmp.ne.s32.totalorder %s115, %s117
      %p121 = scmp.eq.s32.totalorder %s18, 0
      %p122 = por %p120, %p121
      %p123 = scmp.ne.s32.totalorder %s115, %s117
      %p124 = scmp.eq.s32.totalorder %s23, 1
      %p125 = por %p123, %p124
      %p126 = scmp.ne.s32.totalorder %s117, %s118
      %p127 = scmp.eq.s32.totalorder %s23, 0
      %p128 = por %p126, %p127
      %p129 = scmp.ne.s32.totalorder %s117, %s118
      %p130 = scmp.eq.s32.totalorder %s24, 1
      %p131 = por %p129, %p130
      %p133 = scmp.ne.s32.totalorder %s118, %s132
      %p134 = scmp.eq.s32.totalorder %s24, 0
      %p135 = por %p133, %p134
      %s137 = sadd.s32 %s136, 1
      %p140 = scmp.eq.s32.totalorder %s18, 1
      %p141 = scmp.ne.s32.totalorder %s136, %s138
      %p142 = scmp.eq.s32.totalorder %s18, 0
      %p143 = por %p141, %p142
      %p144 = scmp.ne.s32.totalorder %s136, %s138
      %p145 = scmp.eq.s32.totalorder %s23, 1
      %p146 = por %p144, %p145
      %p147 = scmp.ne.s32.totalorder %s138, %s139
      %p148 = scmp.eq.s32.totalorder %s23, 0
      %p149 = por %p147, %p148
      %p150 = scmp.ne.s32.totalorder %s138, %s139
      %p151 = scmp.eq.s32.totalorder %s24, 1
      %p152 = por %p150, %p151
      %p154 = scmp.ne.s32.totalorder %s139, %s153
      %p155 = scmp.eq.s32.totalorder %s24, 0
      %p156 = por %p154, %p155
      %s158 = sadd.s32 %s157, 1
      %p161 = scmp.eq.s32.totalorder %s18, 1
      %p162 = scmp.ne.s32.totalorder %s157, %s159
      %p163 = scmp.eq.s32.totalorder %s18, 0
      %p164 = por %p162, %p163
      %p165 = scmp.ne.s32.totalorder %s157, %s159
      %p166 = scmp.eq.s32.totalorder %s23, 1
      %p167 = por %p165, %p166
      %p168 = scmp.ne.s32.totalorder %s159, %s160
      %p169 = scmp.eq.s32.totalorder %s23, 0
      %p170 = por %p168, %p169
      %p171 = scmp.ne.s32.totalorder %s159, %s160
      %p172 = scmp.eq.s32.totalorder %s24, 1
      %p173 = por %p171, %p172
      %p175 = scmp.ne.s32.totalorder %s160, %s174
      %p176 = scmp.eq.s32.totalorder %s24, 0
      %p177 = por %p175, %p176
      %s179 = sadd.s32 %s178, 1
      %p182 = scmp.eq.s32.totalorder %s18, 1
      %p183 = scmp.ne.s32.totalorder %s178, %s180
      %p184 = scmp.eq.s32.totalorder %s18, 0
      %p185 = por %p183, %p184
      %p186 = scmp.ne.s32.totalorder %s178, %s180
      %p187 = scmp.eq.s32.totalorder %s23, 1
      %p188 = por %p186, %p187
      %p189 = scmp.ne.s32.totalorder %s180, %s181
      %p190 = scmp.eq.s32.totalorder %s23, 0
      %p191 = por %p189, %p190
      %p192 = scmp.ne.s32.totalorder %s180, %s181
      %p193 = scmp.eq.s32.totalorder %s24, 1
      %p194 = por %p192, %p193
      %p196 = scmp.ne.s32.totalorder %s181, %s195
      %p197 = scmp.eq.s32.totalorder %s24, 0
      %p198 = por %p196, %p197
      %s199 = ssub.s32 %s18, %s25
      %p200 = scmp.eq.s32.totalorder %s199, 0
      %s202 = sadd.s32 %s201, 1
      %s203 = scalar_select %p200, %s201, %s202
      %p206 = pneg %p200
      %p207 = scmp.eq.s32.totalorder %s18, 1
      %p208 = por %p206, %p207
      %p209 = scmp.ne.s32.totalorder %s201, %s204
      %p210 = scmp.eq.s32.totalorder %s18, 0
      %p211 = por %p209, %p210
      %p212 = scmp.ne.s32.totalorder %s201, %s204
      %p213 = scmp.eq.s32.totalorder %s23, 1
      %p214 = por %p212, %p213
      %p215 = scmp.ne.s32.totalorder %s204, %s205
      %p216 = scmp.eq.s32.totalorder %s23, 0
      %p217 = por %p215, %p216
      %p218 = scmp.ne.s32.totalorder %s204, %s205
      %p219 = scmp.eq.s32.totalorder %s24, 1
      %p220 = por %p218, %p219
      %p222 = scmp.ne.s32.totalorder %s205, %s221
      %p223 = scmp.eq.s32.totalorder %s24, 0
      %p224 = por %p222, %p223
      %s225 = ssub.s32 %s18, %s25
      %p226 = scmp.eq.s32.totalorder %s225, 0
      %s228 = sadd.s32 %s227, 1
      %s229 = scalar_select %p226, %s227, %s228
      %p232 = pneg %p226
      %p233 = scmp.eq.s32.totalorder %s18, 1
      %p234 = por %p232, %p233
      %p235 = scmp.ne.s32.totalorder %s227, %s230
      %p236 = scmp.eq.s32.totalorder %s18, 0
      %p237 = por %p235, %p236
      %p238 = scmp.ne.s32.totalorder %s227, %s230
      %p239 = scmp.eq.s32.totalorder %s23, 1
      %p240 = por %p238, %p239
      %p241 = scmp.ne.s32.totalorder %s230, %s231
      %p242 = scmp.eq.s32.totalorder %s23, 0
      %p243 = por %p241, %p242
      %p244 = scmp.ne.s32.totalorder %s230, %s231
      %p245 = scmp.eq.s32.totalorder %s24, 1
      %p246 = por %p244, %p245
      %p248 = scmp.ne.s32.totalorder %s231, %s247
      %p249 = scmp.eq.s32.totalorder %s24, 0
      %p250 = por %p248, %p249
      %s251 = ssub.s32 %s18, %s25
      %p252 = scmp.eq.s32.totalorder %s251, 0
      %s254 = sadd.s32 %s253, 1
      %s255 = scalar_select %p252, %s253, %s254
      %p258 = pneg %p252
      %p259 = scmp.eq.s32.totalorder %s18, 1
      %p260 = por %p258, %p259
      %p261 = scmp.ne.s32.totalorder %s253, %s256
      %p262 = scmp.eq.s32.totalorder %s18, 0
      %p263 = por %p261, %p262
      %p264 = scmp.ne.s32.totalorder %s253, %s256
      %p265 = scmp.eq.s32.totalorder %s23, 1
      %p266 = por %p264, %p265
      %p267 = scmp.ne.s32.totalorder %s256, %s257
      %p268 = scmp.eq.s32.totalorder %s23, 0
      %p269 = por %p267, %p268
      %p270 = scmp.ne.s32.totalorder %s256, %s257
      %p271 = scmp.eq.s32.totalorder %s24, 1
      %p272 = por %p270, %p271
      %p274 = scmp.ne.s32.totalorder %s257, %s273
      %p275 = scmp.eq.s32.totalorder %s24, 0
      %p276 = por %p274, %p275
      %p277 = scmp.le.s32.totalorder 1, %s18
      %p278 = scmp.lt.s32.totalorder %s18, 3
      %p279 = pnand %p277, %p278
      %p280 = pneg %p279
      // Predicated region
      $region9: #{decoder_block.9} parent=5 // pred_check
        _
      $region10: #{decoder_block.9} parent=5 // pred_check_branch
        %282 = sbr.rel (%p279) target = $region12
      $region11: #{decoder_block.9} parent=5 // pred_region
        %s283 = ssub.s32 %s18, 1
        // Predicated region
        $region13: #{decoder_block.9} parent=11 // pred_check
          %p284 = pneg %p65
        $region14: #{decoder_block.9} parent=11 // pred_check_branch
          %286 = sbr.rel (%p284) target = $region16
        $region15: #{decoder_block.9} parent=11 // pred_region
          %s288 = ssub.s32 16, 16
          %289 = vsyncadd [#allocation3], %s288
          %s291 = sshll.u32 %s1, 4
          %s292 = int_to_ptr.vmem [resolvable:$true] %s291
          %294 = dma.vmem_to_smem %s292, 16, [#allocation2], [#allocation3]
        $region16: #{decoder_block.9} parent=11 // pred_fallthru
          _
        // Predicated region
        $region17: #{decoder_block.9} parent=11 // pred_check
          %p295 = pneg %p86
        $region18: #{decoder_block.9} parent=11 // pred_check_branch
          %297 = sbr.rel (%p295) target = $region20
        $region19: #{decoder_block.9} parent=11 // pred_region
          _
        $region20: #{decoder_block.9} parent=11 // pred_fallthru
          _
        // Predicated region
        $region21: #{decoder_block.9} parent=11 // pred_check
          %p298 = pneg %p107
        $region22: #{decoder_block.9} parent=11 // pred_check_branch
          %300 = sbr.rel (%p298) target = $region24
        $region23: #{decoder_block.9} parent=11 // pred_region
          _
        $region24: #{decoder_block.9} parent=11 // pred_fallthru
          _
        // Predicated region
        $region25: #{decoder_block.9} parent=11 // pred_check
          %p301 = pneg %p128
        $region26: #{decoder_block.9} parent=11 // pred_check_branch
          %303 = sbr.rel (%p301) target = $region28
        $region27: #{decoder_block.9} parent=11 // pred_region
          _
        $region28: #{decoder_block.9} parent=11 // pred_fallthru
          _
        // Predicated region
        $region29: #{decoder_block.9} parent=11 // pred_check
          %p304 = pneg %p149
        $region30: #{decoder_block.9} parent=11 // pred_check_branch
          %306 = sbr.rel (%p304) target = $region32
        $region31: #{decoder_block.9} parent=11 // pred_region
          _
        $region32: #{decoder_block.9} parent=11 // pred_fallthru
          _
        // Predicated region
        $region33: #{decoder_block.9} parent=11 // pred_check
          %p307 = pneg %p170
        $region34: #{decoder_block.9} parent=11 // pred_check_branch
          %309 = sbr.rel (%p307) target = $region36
        $region35: #{decoder_block.9} parent=11 // pred_region
          _
        $region36: #{decoder_block.9} parent=11 // pred_fallthru
          _
        // Predicated region
        $region37: #{decoder_block.9} parent=11 // pred_check
          %p310 = pneg %p191
        $region38: #{decoder_block.9} parent=11 // pred_check_branch
          %312 = sbr.rel (%p310) target = $region40
        $region39: #{decoder_block.9} parent=11 // pred_region
          _
        $region40: #{decoder_block.9} parent=11 // pred_fallthru
          _
      $region12: #{decoder_block.9} parent=5 // pred_fallthru
        _
      %p313 = scmp.lt.s32.totalorder %s18, 2
      // Predicated region
      $region41: #{decoder_block.9} parent=5 // pred_check
        %p314 = pneg %p313
      $region42: #{decoder_block.9} parent=5 // pred_check_branch
        %316 = sbr.rel (%p314) target = $region44
      $region43: #{decoder_block.9} parent=5 // pred_region
        // Predicated region
        $region45: #{decoder_block.9} parent=43 // pred_check
          %p317 = pneg %p38
        $region46: #{decoder_block.9} parent=43 // pred_check_branch
          %319 = sbr.rel (%p317) target = $region48
        $region47: #{decoder_block.9} parent=43 // pred_region
          %p320 = scmp.lt.s32.totalorder %s18, 1
          %s321 = scalar_select %p320, %s18, 1
          %s322 = smul.addr %s321, 8
          %s323 = scalar_lea.vmem %s0, %s322
        $region48: #{decoder_block.9} parent=43 // pred_fallthru
          _
      $region44: #{decoder_block.9} parent=5 // pred_fallthru
        _
      %p324 = scmp.le.s32.totalorder 1, %s18
      %p325 = scmp.lt.s32.totalorder %s18, 3
      %p326 = pnand %p324, %p325
      %p327 = pneg %p326
      // Predicated region
      $region49: #{decoder_block.9} parent=5 // pred_check
        _
      $region50: #{decoder_block.9} parent=5 // pred_check_branch
        %329 = sbr.rel (%p326) target = $region52
      $region51: #{decoder_block.9} parent=5 // pred_region
        %s330 = ssub.s32 %s18, 1
        // Predicated region
        $region53: #{decoder_block.9} parent=51 // pred_check
          %p331 = pneg %p65
        $region54: #{decoder_block.9} parent=51 // pred_check_branch
          %333 = sbr.rel (%p331) target = $region56
        $region55: #{decoder_block.9} parent=51 // pred_region
          %334 = dma.done [#allocation3], 16
        $region56: #{decoder_block.9} parent=51 // pred_fallthru
          _
        %335 = sfence
        %p336 = scmp.lt.s32.totalorder %s23, 1
        %s337 = scalar_select %p336, %s23, 1
        %s338 = smul.addr %s337, 8
        %s339 = scalar_lea.vmem %s0, %s338
        %p340 = pneg %p44
        %p341 = pneg %p41
        %p342 = pneg %p65
        %p343 = pneg %p62
        %p344 = pneg %p86
        %p345 = pneg %p83
        %p346 = pneg %p107
        %p347 = pneg %p104
        %p348 = pneg %p128
        %p349 = pneg %p125
        %p350 = pneg %p149
        %p351 = pneg %p146
        %p352 = pneg %p170
        %p353 = pneg %p167
        %p354 = pneg %p191
        %p355 = pneg %p188
        %p356 = pneg %p217
        %p357 = pneg %p214
        %p358 = scmp.lt.s32.totalorder %s23, 1
        %s359 = scalar_select %p358, %s23, 1
        %s360 = smul.addr %s359, 8
        %s361 = scalar_lea.vmem %s8, %s360
        %p362 = pneg %p243
        %p363 = pneg %p240
        %p364 = scmp.lt.s32.totalorder %s23, 1
        %s365 = scalar_select %p364, %s23, 1
        %s366 = smul.addr %s365, 8
        %s367 = scalar_lea.vmem %s9, %s366
        %p368 = pneg %p269
        %p369 = pneg %p266
        %p370 = scmp.lt.s32.totalorder %s23, 1
        %s371 = scalar_select %p370, %s23, 1
        %s372 = smul.addr %s371, 8
        %s373 = scalar_lea.vmem %s10, %s372
        %p374 = scmp.lt.s32.totalorder %s23, 1
        %s375 = scalar_select %p374, %s23, 1
        %s376 = smul.addr %s375, 8
        %s377 = scalar_lea.vmem %s0, %s376
        %p378 = scmp.lt.s32.totalorder %s23, 1
        %s379 = scalar_select %p378, %s23, 1
        %s380 = smul.addr %s379, 8
        %s381 = scalar_lea.vmem %s8, %s380
        %p382 = scmp.lt.s32.totalorder %s23, 1
        %s383 = scalar_select %p382, %s23, 1
        %s384 = smul.addr %s383, 8
        %s385 = scalar_lea.vmem %s9, %s384
        %p386 = scmp.lt.s32.totalorder %s23, 1
        %s387 = scalar_select %p386, %s23, 1
        %s388 = smul.addr %s387, 8
        %s389 = scalar_lea.vmem %s10, %s388
        %v391 = vld [vmem:[%s377] sm:$0xff]
        %s392 = sld [smem:[#allocation2]]
        %s393 = sld [smem:[#allocation2 + $0x1]]
        %vm394 = vcmask 523264
        %v395 = vsel %vm394, %v391, 0.0
        %396 = vadd.xlane.f32.xlu0 %v395
        %v397 = vpop.xlane.xlu0 %396
        %v398 = vrcp.pop 64.0
        %v399 = vmul.f32 %v397, %v398
        %v400 = vsub.f32 %v391, %v399
        %v401 = vmul.f32 %v400, %v400
        %v402 = vsel %vm394, %v401, 0.0
        %403 = vadd.xlane.f32.xlu0 %v402
        %v404 = vpop.xlane.xlu0 %403
        %v405 = vrcp.pop 63.0
        %v406 = vmul.f32 %v404, %v405
        %v407 = vrsqrt.pop %v406
        %v408 = vmul.f32 %v406, %v407
        %vm409 = vcmp.eq.f32.partialorder %v406, inf
        %v410 = vsel %vm409, %v406, %v408
        %vm411 = vcmp.eq.f32.partialorder %v406, 0.0
        %v412 = vand.u32 %v406, 2147483648
        %v413 = vsel %vm411, %v412, %v410
        %v414 = vadd.f32 %v413, 1e-06
        %v415 = vstv %s392
        %v416 = vrcp.pop %v414
        %v417 = vmul.f32 %v415, %v416
        %v418 = vmul.f32 %v400, %v417
        %v419 = vstv %s393
        %v420 = vadd.f32 %v418, %v419
        %v421 = vpack.c.bf16 %v420, %v420
        %v422 = vld [vmem:[%s2] sm:$0xf]
        %v423 = vld [vmem:[%s2 + $0x4] sm:$0xf]
        %v424 = vld [vmem:[%s2 + $0x8] sm:$0xf]
        %v425 = vld [vmem:[%s2 + $0xc] sm:$0xf]
        %v426 = vld [vmem:[%s2 + $0x10] sm:$0xf]
        %v427 = vld [vmem:[%s2 + $0x14] sm:$0xf]
        %v428 = vld [vmem:[%s2 + $0x18] sm:$0xf]
        %v429 = vld [vmem:[%s2 + $0x1c] sm:$0xf]
        %v430 = vld [vmem:[%s3] sm:$0x1]
        %v432 = vlaneseq
        %v433 = vshrl.u32 %v432, 7
        %v434 = vsub.s32 0, %v433
        %v435 = vrot.slane %v430, %v434
        %v445 = vunpack.c.l.b16 %v422
        %v446 = vunpack.c.l.b16 %v423
        %v447 = vunpack.c.l.b16 %v424
        %v448 = vunpack.c.l.b16 %v425
        %v449 = vunpack.c.l.b16 %v426
        %v450 = vunpack.c.l.b16 %v427
        %v451 = vunpack.c.l.b16 %v428
        %v452 = vunpack.c.l.b16 %v429
        %v453 = vpack.c.b16 %v446, %v445
        %v454 = vpack.c.b16 %v448, %v447
        %v455 = vpack.c.b16 %v450, %v449
        %v456 = vpack.c.b16 %v452, %v451
        %v462 = vsel %vm394, %v421, 0
        %464 = vmatprep.subr.bf16.mxu0 0
        %465 = vmatpush1.bf16.msra.mxu0 0
        %466 = vmatprep.subr.bf16.mxu0 0
        %467 = vmatpush1.bf16.msra.mxu0 0
        %468 = vmatprep.subr.bf16.mxu0 0
        %469 = vmatpush1.bf16.msra.mxu0 0
        %470 = vmatprep.subr.bf16.mxu0 0
        %471 = vmatpush1.bf16.msra.mxu0 0
        %472 = vmatprep.subr.bf16.mxu0 0
        %473 = vmatpush1.bf16.msra.mxu0 %v456
        %474 = vmatprep.subr.bf16.mxu0 0
        %475 = vmatpush1.bf16.msra.mxu0 %v455
        %476 = vmatprep.subr.bf16.mxu0 0
        %477 = vmatpush1.bf16.msra.mxu0 %v454
        %478 = vmatprep.subr.bf16.mxu0 0
        %479 = vmatpush1.bf16.msra.mxu0 %v453
        %480 = vmatprep.subr.bf16.mxu0 0
        %481 = vmatpush2.bf16.msra.mxu0 0
        %482 = vmatprep.subr.bf16.mxu0 0
        %483 = vmatpush2.bf16.msra.mxu0 0
        %484 = vmatprep.subr.bf16.mxu0 0
        %485 = vmatpush2.bf16.msra.mxu0 0
        %486 = vmatprep.subr.bf16.mxu0 0
        %487 = vmatpush2.bf16.msra.mxu0 0
        %488 = vmatprep.subr.bf16.mxu0 0
        %489 = vmatpush2.bf16.msra.mxu0 0
        %490 = vmatprep.subr.bf16.mxu0 0
        %491 = vmatpush2.bf16.msra.mxu0 0
        %492 = vmatprep.subr.bf16.mxu0 0
        %493 = vmatpush2.bf16.msra.mxu0 0
        %494 = vmatprep.subr.bf16.mxu0 0
        %495 = vmatpush2.bf16.msra.mxu0 0
        %496 = vmatprep.mubr.bf16.mxu0 0
        %497 = vmatmul.mubr.bf16.gmra.mxu0 %v462
        %v498 = vpop.f32.mrf.mxu0
        %v499 = vadd.f32 %v435, %v498
        %v500 = vpop.f32.mrf.mxu0
        %v501 = vpop.f32.mrf.mxu0
        %v502 = vpop.f32.mrf.mxu0
        %503 = vdwg.mxu0
        %504 = vst.msk [vmem:[%s381] sm:$0xff] %vm394, %v499
        %v505 = vld [vmem:[%s4] sm:$0xf]
        %v506 = vld [vmem:[%s4 + $0x4] sm:$0xf]
        %v507 = vld [vmem:[%s4 + $0x8] sm:$0xf]
        %v508 = vld [vmem:[%s4 + $0xc] sm:$0xf]
        %v509 = vld [vmem:[%s4 + $0x10] sm:$0xf]
        %v510 = vld [vmem:[%s4 + $0x14] sm:$0xf]
        %v511 = vld [vmem:[%s4 + $0x18] sm:$0xf]
        %v512 = vld [vmem:[%s4 + $0x1c] sm:$0xf]
        %v513 = vld [vmem:[%s5] sm:$0x1]
        %v515 = vlaneseq
        %v516 = vshrl.u32 %v515, 7
        %v517 = vsub.s32 0, %v516
        %v518 = vrot.slane %v513, %v517
        %v528 = vunpack.c.l.b16 %v505
        %v529 = vunpack.c.l.b16 %v506
        %v530 = vunpack.c.l.b16 %v507
        %v531 = vunpack.c.l.b16 %v508
        %v532 = vunpack.c.l.b16 %v509
        %v533 = vunpack.c.l.b16 %v510
        %v534 = vunpack.c.l.b16 %v511
        %v535 = vunpack.c.l.b16 %v512
        %v536 = vpack.c.b16 %v529, %v528
        %v537 = vpack.c.b16 %v531, %v530
        %v538 = vpack.c.b16 %v533, %v532
        %v539 = vpack.c.b16 %v535, %v534
        %544 = vmatprep.subr.bf16.mxu0 0
        %545 = vmatpush1.bf16.msra.mxu0 0
        %546 = vmatprep.subr.bf16.mxu0 0
        %547 = vmatpush1.bf16.msra.mxu0 0
        %548 = vmatprep.subr.bf16.mxu0 0
        %549 = vmatpush1.bf16.msra.mxu0 0
        %550 = vmatprep.subr.bf16.mxu0 0
        %551 = vmatpush1.bf16.msra.mxu0 0
        %552 = vmatprep.subr.bf16.mxu0 0
        %553 = vmatpush1.bf16.msra.mxu0 %v539
        %554 = vmatprep.subr.bf16.mxu0 0
        %555 = vmatpush1.bf16.msra.mxu0 %v538
        %556 = vmatprep.subr.bf16.mxu0 0
        %557 = vmatpush1.bf16.msra.mxu0 %v537
        %558 = vmatprep.subr.bf16.mxu0 0
        %559 = vmatpush1.bf16.msra.mxu0 %v536
        %560 = vmatprep.subr.bf16.mxu0 0
        %561 = vmatpush2.bf16.msra.mxu0 0
        %562 = vmatprep.subr.bf16.mxu0 0
        %563 = vmatpush2.bf16.msra.mxu0 0
        %564 = vmatprep.subr.bf16.mxu0 0
        %565 = vmatpush2.bf16.msra.mxu0 0
        %566 = vmatprep.subr.bf16.mxu0 0
        %567 = vmatpush2.bf16.msra.mxu0 0
        %568 = vmatprep.subr.bf16.mxu0 0
        %569 = vmatpush2.bf16.msra.mxu0 0
        %570 = vmatprep.subr.bf16.mxu0 0
        %571 = vmatpush2.bf16.msra.mxu0 0
        %572 = vmatprep.subr.bf16.mxu0 0
        %573 = vmatpush2.bf16.msra.mxu0 0
        %574 = vmatprep.subr.bf16.mxu0 0
        %575 = vmatpush2.bf16.msra.mxu0 0
        %576 = vmatprep.mubr.bf16.mxu0 0
        %577 = vmatmul.mubr.bf16.gmra.mxu0 %v462
        %v578 = vpop.f32.mrf.mxu0
        %v579 = vadd.f32 %v518, %v578
        %v580 = vpop.f32.mrf.mxu0
        %v581 = vpop.f32.mrf.mxu0
        %v582 = vpop.f32.mrf.mxu0
        %583 = vdwg.mxu0
        %584 = vst.msk [vmem:[%s385] sm:$0xff] %vm394, %v579
        %v585 = vld [vmem:[%s6] sm:$0xf]
        %v586 = vld [vmem:[%s6 + $0x4] sm:$0xf]
        %v587 = vld [vmem:[%s6 + $0x8] sm:$0xf]
        %v588 = vld [vmem:[%s6 + $0xc] sm:$0xf]
        %v589 = vld [vmem:[%s6 + $0x10] sm:$0xf]
        %v590 = vld [vmem:[%s6 + $0x14] sm:$0xf]
        %v591 = vld [vmem:[%s6 + $0x18] sm:$0xf]
        %v592 = vld [vmem:[%s6 + $0x1c] sm:$0xf]
        %v593 = vld [vmem:[%s7] sm:$0x1]
        %v595 = vlaneseq
        %v596 = vshrl.u32 %v595, 7
        %v597 = vsub.s32 0, %v596
        %v598 = vrot.slane %v593, %v597
        %v608 = vunpack.c.l.b16 %v585
        %v609 = vunpack.c.l.b16 %v586
        %v610 = vunpack.c.l.b16 %v587
        %v611 = vunpack.c.l.b16 %v588
        %v612 = vunpack.c.l.b16 %v589
        %v613 = vunpack.c.l.b16 %v590
        %v614 = vunpack.c.l.b16 %v591
        %v615 = vunpack.c.l.b16 %v592
        %v616 = vpack.c.b16 %v609, %v608
        %v617 = vpack.c.b16 %v611, %v610
        %v618 = vpack.c.b16 %v613, %v612
        %v619 = vpack.c.b16 %v615, %v614
        %624 = vmatprep.subr.bf16.mxu0 0
        %625 = vmatpush1.bf16.msra.mxu0 0
        %626 = vmatprep.subr.bf16.mxu0 0
        %627 = vmatpush1.bf16.msra.mxu0 0
        %628 = vmatprep.subr.bf16.mxu0 0
        %629 = vmatpush1.bf16.msra.mxu0 0
        %630 = vmatprep.subr.bf16.mxu0 0
        %631 = vmatpush1.bf16.msra.mxu0 0
        %632 = vmatprep.subr.bf16.mxu0 0
        %633 = vmatpush1.bf16.msra.mxu0 %v619
        %634 = vmatprep.subr.bf16.mxu0 0
        %635 = vmatpush1.bf16.msra.mxu0 %v618
        %636 = vmatprep.subr.bf16.mxu0 0
        %637 = vmatpush1.bf16.msra.mxu0 %v617
        %638 = vmatprep.subr.bf16.mxu0 0
        %639 = vmatpush1.bf16.msra.mxu0 %v616
        %640 = vmatprep.subr.bf16.mxu0 0
        %641 = vmatpush2.bf16.msra.mxu0 0
        %642 = vmatprep.subr.bf16.mxu0 0
        %643 = vmatpush2.bf16.msra.mxu0 0
        %644 = vmatprep.subr.bf16.mxu0 0
        %645 = vmatpush2.bf16.msra.mxu0 0
        %646 = vmatprep.subr.bf16.mxu0 0
        %647 = vmatpush2.bf16.msra.mxu0 0
        %648 = vmatprep.subr.bf16.mxu0 0
        %649 = vmatpush2.bf16.msra.mxu0 0
        %650 = vmatprep.subr.bf16.mxu0 0
        %651 = vmatpush2.bf16.msra.mxu0 0
        %652 = vmatprep.subr.bf16.mxu0 0
        %653 = vmatpush2.bf16.msra.mxu0 0
        %654 = vmatprep.subr.bf16.mxu0 0
        %655 = vmatpush2.bf16.msra.mxu0 0
        %656 = vmatprep.mubr.bf16.mxu0 0
        %657 = vmatmul.mubr.bf16.gmra.mxu0 %v462
        %v658 = vpop.f32.mrf.mxu0
        %v659 = vadd.f32 %v598, %v658
        %v660 = vpop.f32.mrf.mxu0
        %v661 = vpop.f32.mrf.mxu0
        %v662 = vpop.f32.mrf.mxu0
        %663 = vdwg.mxu0
        %664 = vst.msk [vmem:[%s389] sm:$0xff] %vm394, %v659
        %p665 = scmp.lt.s32.totalorder %s23, 1
        %s666 = scalar_select %p665, %s23, 1
        %s667 = smul.addr %s666, 8
        %s668 = scalar_lea.vmem %s8, %s667
        %p669 = scmp.lt.s32.totalorder %s23, 1
        %s670 = scalar_select %p669, %s23, 1
        %s671 = smul.addr %s670, 8
        %s672 = scalar_lea.vmem %s9, %s671
        %p673 = scmp.lt.s32.totalorder %s23, 1
        %s674 = scalar_select %p673, %s23, 1
        %s675 = smul.addr %s674, 8
        %s676 = scalar_lea.vmem %s10, %s675
        // Predicated region
        $region57: #{decoder_block.9} parent=51 // pred_check
          %p677 = pneg %p214
        $region58: #{decoder_block.9} parent=51 // pred_check_branch
          %679 = sbr.rel (%p677) target = $region60
        $region59: #{decoder_block.9} parent=51 // pred_region
          _
        $region60: #{decoder_block.9} parent=51 // pred_fallthru
          _
        // Predicated region
        $region61: #{decoder_block.9} parent=51 // pred_check
          %p680 = pneg %p240
        $region62: #{decoder_block.9} parent=51 // pred_check_branch
          %682 = sbr.rel (%p680) target = $region64
        $region63: #{decoder_block.9} parent=51 // pred_region
          _
        $region64: #{decoder_block.9} parent=51 // pred_fallthru
          _
        // Predicated region
        $region65: #{decoder_block.9} parent=51 // pred_check
          %p683 = pneg %p266
        $region66: #{decoder_block.9} parent=51 // pred_check_branch
          %685 = sbr.rel (%p683) target = $region68
        $region67: #{decoder_block.9} parent=51 // pred_region
          _
        $region68: #{decoder_block.9} parent=51 // pred_fallthru
          _
      $region52: #{decoder_block.9} parent=5 // pred_fallthru
        _
      %p686 = scmp.le.s32.totalorder 2, %s18
      // Predicated region
      $region69: #{decoder_block.9} parent=5 // pred_check
        %p687 = pneg %p686
      $region70: #{decoder_block.9} parent=5 // pred_check_branch
        %689 = sbr.rel (%p687) target = $region72
      $region71: #{decoder_block.9} parent=5 // pred_region
        %s690 = ssub.s32 %s18, 2
        // Predicated region
        $region73: #{decoder_block.9} parent=71 // pred_check
          %p691 = pneg %p220
        $region74: #{decoder_block.9} parent=71 // pred_check_branch
          %693 = sbr.rel (%p691) target = $region76
        $region75: #{decoder_block.9} parent=71 // pred_region
          %p694 = scmp.lt.s32.totalorder %s24, 1
          %s695 = scalar_select %p694, %s24, 1
          %s696 = smul.addr %s695, 8
          %s697 = scalar_lea.vmem %s8, %s696
        $region76: #{decoder_block.9} parent=71 // pred_fallthru
          _
        // Predicated region
        $region77: #{decoder_block.9} parent=71 // pred_check
          %p698 = pneg %p246
        $region78: #{decoder_block.9} parent=71 // pred_check_branch
          %700 = sbr.rel (%p698) target = $region80
        $region79: #{decoder_block.9} parent=71 // pred_region
          %p701 = scmp.lt.s32.totalorder %s24, 1
          %s702 = scalar_select %p701, %s24, 1
          %s703 = smul.addr %s702, 8
          %s704 = scalar_lea.vmem %s9, %s703
        $region80: #{decoder_block.9} parent=71 // pred_fallthru
          _
        // Predicated region
        $region81: #{decoder_block.9} parent=71 // pred_check
          %p705 = pneg %p272
        $region82: #{decoder_block.9} parent=71 // pred_check_branch
          %707 = sbr.rel (%p705) target = $region84
        $region83: #{decoder_block.9} parent=71 // pred_region
          %p708 = scmp.lt.s32.totalorder %s24, 1
          %s709 = scalar_select %p708, %s24, 1
          %s710 = smul.addr %s709, 8
          %s711 = scalar_lea.vmem %s10, %s710
        $region84: #{decoder_block.9} parent=71 // pred_fallthru
          _
      $region72: #{decoder_block.9} parent=5 // pred_fallthru
        _
    $region6: #{decoder_block.9} parent=1 // loop_footer
      %s22 = sadd.s32 1, %s18
    $region7: #{decoder_block.9} parent=1 // loop_footer_branch
      %17 = sbr.rel target = $region3
    $region8: #{decoder_block.9} parent=1 // loop_exit
      _
    %712 = vsyncpa [#allocation3], 1
    %s713 = scalar_lea.sflag [#allocation3], 1
    %714 = vsyncpa %s713, 1

// kernel: decoder_block.10
$region0: #{decoder_block.10}
  #allocation0 [shape = 'u32[]', space=smem, size = 0x4, offset = 0x4, fixed_abs, tag = 'smem constant byte address 0x4 - core index']
  #allocation1 [shape = 'u32[144,128]{1,0:T(1,128)}', space=vmem, size = 0x12000, scoped, tag = 'internal scratch']
  %s0 = inlined_call_operand.vmem [shape: f32[2,8,64], index: 0, kind: input, shape index: {}]
  %s1 = inlined_call_operand.vmem [shape: f32[2,8,64], index: 1, kind: input, shape index: {}]
  %s2 = inlined_call_operand.vmem [shape: f32[2,8,64], index: 2, kind: input, shape index: {}]
  %s3 = inlined_call_operand.vmem [shape: s32[1,1,8,8], index: 3, kind: input, shape index: {}]
  %s4 = inlined_call_operand.vmem [shape: f32[2,8,64], index: 4, kind: output, shape index: {}]
  %s5 = sld [smem:[#allocation0]]
  $region49: #{decoder_block.10} parent=0
    _
  %s7 = ssub.s32 1, %s5
  %s8 = scalar_select 0, %s7, %s5
  loop: start=0, step=1, limit=4
  $region2: #{decoder_block.10} parent=0 // loop_pre_header
    _
  $region3: #{decoder_block.10} parent=0 // loop_header
    %s10 = sphi 0, %s14
    %p11 = scmp.ge.s32.totalorder %s10, 4
    %s20 = sphi 0, %s22
    %s23 = sphi 0, %s20
    %s24 = sphi 0, %s23
    %s40 = sphi 0, %s24
    %s46 = sphi 0, %s48
    %s49 = sphi 0, %s46
    %s50 = sphi 0, %s49
    %s66 = sphi 0, %s50
    %s72 = sphi 0, %s74
    %s75 = sphi 0, %s72
    %s76 = sphi 0, %s75
    %s92 = sphi 0, %s76
    %s96 = sphi 0, %s96
    %s98 = sphi 0, %s96
    %s99 = sphi 0, %s98
    %s113 = sphi 0, %s99
    %s119 = sphi 0, %s121
    %s122 = sphi 0, %s119
    %s123 = sphi 0, %s122
    %s139 = sphi 0, %s123
  $region4: #{decoder_block.10} parent=0 // loop_header_branch
    %13 = sbr.rel (%p11) target = $region8
  $region5: #{decoder_block.10} parent=0 // loop_body
    %s15 = ssub.s32 %s10, 1
    %s16 = ssub.s32 %s10, 2
    %s17 = sadd.s32 %s10, 1
    %s18 = ssub.s32 %s10, %s17
    %p19 = scmp.eq.s32.totalorder %s18, 0
    %s21 = sadd.s32 %s20, 1
    %s22 = scalar_select %p19, %s20, %s21
    %p25 = pneg %p19
    %p26 = scmp.eq.s32.totalorder %s10, 1
    %p27 = por %p25, %p26
    %p28 = scmp.ne.s32.totalorder %s20, %s23
    %p29 = scmp.eq.s32.totalorder %s10, 0
    %p30 = por %p28, %p29
    %p31 = scmp.ne.s32.totalorder %s20, %s23
    %p32 = scmp.eq.s32.totalorder %s15, 1
    %p33 = por %p31, %p32
    %p34 = scmp.ne.s32.totalorder %s23, %s24
    %p35 = scmp.eq.s32.totalorder %s15, 0
    %p36 = por %p34, %p35
    %p37 = scmp.ne.s32.totalorder %s23, %s24
    %p38 = scmp.eq.s32.totalorder %s16, 1
    %p39 = por %p37, %p38
    %p41 = scmp.ne.s32.totalorder %s24, %s40
    %p42 = scmp.eq.s32.totalorder %s16, 0
    %p43 = por %p41, %p42
    %s44 = ssub.s32 %s10, %s17
    %p45 = scmp.eq.s32.totalorder %s44, 0
    %s47 = sadd.s32 %s46, 1
    %s48 = scalar_select %p45, %s46, %s47
    %p51 = pneg %p45
    %p52 = scmp.eq.s32.totalorder %s10, 1
    %p53 = por %p51, %p52
    %p54 = scmp.ne.s32.totalorder %s46, %s49
    %p55 = scmp.eq.s32.totalorder %s10, 0
    %p56 = por %p54, %p55
    %p57 = scmp.ne.s32.totalorder %s46, %s49
    %p58 = scmp.eq.s32.totalorder %s15, 1
    %p59 = por %p57, %p58
    %p60 = scmp.ne.s32.totalorder %s49, %s50
    %p61 = scmp.eq.s32.totalorder %s15, 0
    %p62 = por %p60, %p61
    %p63 = scmp.ne.s32.totalorder %s49, %s50
    %p64 = scmp.eq.s32.totalorder %s16, 1
    %p65 = por %p63, %p64
    %p67 = scmp.ne.s32.totalorder %s50, %s66
    %p68 = scmp.eq.s32.totalorder %s16, 0
    %p69 = por %p67, %p68
    %s70 = ssub.s32 %s10, %s17
    %p71 = scmp.eq.s32.totalorder %s70, 0
    %s73 = sadd.s32 %s72, 1
    %s74 = scalar_select %p71, %s72, %s73
    %p77 = pneg %p71
    %p78 = scmp.eq.s32.totalorder %s10, 1
    %p79 = por %p77, %p78
    %p80 = scmp.ne.s32.totalorder %s72, %s75
    %p81 = scmp.eq.s32.totalorder %s10, 0
    %p82 = por %p80, %p81
    %p83 = scmp.ne.s32.totalorder %s72, %s75
    %p84 = scmp.eq.s32.totalorder %s15, 1
    %p85 = por %p83, %p84
    %p86 = scmp.ne.s32.totalorder %s75, %s76
    %p87 = scmp.eq.s32.totalorder %s15, 0
    %p88 = por %p86, %p87
    %p89 = scmp.ne.s32.totalorder %s75, %s76
    %p90 = scmp.eq.s32.totalorder %s16, 1
    %p91 = por %p89, %p90
    %p93 = scmp.ne.s32.totalorder %s76, %s92
    %p94 = scmp.eq.s32.totalorder %s16, 0
    %p95 = por %p93, %p94
    %s97 = sadd.s32 %s96, 1
    %p100 = scmp.eq.s32.totalorder %s10, 1
    %p101 = scmp.ne.s32.totalorder %s96, %s98
    %p102 = scmp.eq.s32.totalorder %s10, 0
    %p103 = por %p101, %p102
    %p104 = scmp.ne.s32.totalorder %s96, %s98
    %p105 = scmp.eq.s32.totalorder %s15, 1
    %p106 = por %p104, %p105
    %p107 = scmp.ne.s32.totalorder %s98, %s99
    %p108 = scmp.eq.s32.totalorder %s15, 0
    %p109 = por %p107, %p108
    %p110 = scmp.ne.s32.totalorder %s98, %s99
    %p111 = scmp.eq.s32.totalorder %s16, 1
    %p112 = por %p110, %p111
    %p114 = scmp.ne.s32.totalorder %s99, %s113
    %p115 = scmp.eq.s32.totalorder %s16, 0
    %p116 = por %p114, %p115
    %s117 = ssub.s32 %s10, %s17
    %p118 = scmp.eq.s32.totalorder %s117, 0
    %s120 = sadd.s32 %s119, 1
    %s121 = scalar_select %p118, %s119, %s120
    %p124 = pneg %p118
    %p125 = scmp.eq.s32.totalorder %s10, 1
    %p126 = por %p124, %p125
    %p127 = scmp.ne.s32.totalorder %s119, %s122
    %p128 = scmp.eq.s32.totalorder %s10, 0
    %p129 = por %p127, %p128
    %p130 = scmp.ne.s32.totalorder %s119, %s122
    %p131 = scmp.eq.s32.totalorder %s15, 1
    %p132 = por %p130, %p131
    %p133 = scmp.ne.s32.totalorder %s122, %s123
    %p134 = scmp.eq.s32.totalorder %s15, 0
    %p135 = por %p133, %p134
    %p136 = scmp.ne.s32.totalorder %s122, %s123
    %p137 = scmp.eq.s32.totalorder %s16, 1
    %p138 = por %p136, %p137
    %p140 = scmp.ne.s32.totalorder %s123, %s139
    %p141 = scmp.eq.s32.totalorder %s16, 0
    %p142 = por %p140, %p141
    %p143 = scmp.le.s32.totalorder 1, %s10
    %p144 = scmp.lt.s32.totalorder %s10, 3
    %p145 = pnand %p143, %p144
    %p146 = pneg %p145
    // Predicated region
    $region9: #{decoder_block.10} parent=5 // pred_check
      _
    $region10: #{decoder_block.10} parent=5 // pred_check_branch
      %148 = sbr.rel (%p145) target = $region12
    $region11: #{decoder_block.10} parent=5 // pred_region
      %s149 = ssub.s32 %s10, 1
      // Predicated region
      $region13: #{decoder_block.10} parent=11 // pred_check
        %p150 = pneg %p109
      $region14: #{decoder_block.10} parent=11 // pred_check_branch
        %152 = sbr.rel (%p150) target = $region16
      $region15: #{decoder_block.10} parent=11 // pred_region
        _
      $region16: #{decoder_block.10} parent=11 // pred_fallthru
        _
    $region12: #{decoder_block.10} parent=5 // pred_fallthru
      _
    %p153 = scmp.lt.s32.totalorder %s10, 2
    // Predicated region
    $region17: #{decoder_block.10} parent=5 // pred_check
      %p154 = pneg %p153
    $region18: #{decoder_block.10} parent=5 // pred_check_branch
      %156 = sbr.rel (%p154) target = $region20
    $region19: #{decoder_block.10} parent=5 // pred_region
      // Predicated region
      $region21: #{decoder_block.10} parent=19 // pred_check
        %p157 = pneg %p30
      $region22: #{decoder_block.10} parent=19 // pred_check_branch
        %159 = sbr.rel (%p157) target = $region24
      $region23: #{decoder_block.10} parent=19 // pred_region
        %p160 = scmp.lt.s32.totalorder %s10, 1
        %s161 = scalar_select %p160, %s10, 1
        %s162 = smul.addr %s161, 8
        %s163 = scalar_lea.vmem %s0, %s162
      $region24: #{decoder_block.10} parent=19 // pred_fallthru
        _
      // Predicated region
      $region25: #{decoder_block.10} parent=19 // pred_check
        %p164 = pneg %p56
      $region26: #{decoder_block.10} parent=19 // pred_check_branch
        %166 = sbr.rel (%p164) target = $region28
      $region27: #{decoder_block.10} parent=19 // pred_region
        %p167 = scmp.lt.s32.totalorder %s10, 1
        %s168 = scalar_select %p167, %s10, 1
        %s169 = smul.addr %s168, 8
        %s170 = scalar_lea.vmem %s1, %s169
      $region28: #{decoder_block.10} parent=19 // pred_fallthru
        _
      // Predicated region
      $region29: #{decoder_block.10} parent=19 // pred_check
        %p171 = pneg %p82
      $region30: #{decoder_block.10} parent=19 // pred_check_branch
        %173 = sbr.rel (%p171) target = $region32
      $region31: #{decoder_block.10} parent=19 // pred_region
        %p174 = scmp.lt.s32.totalorder %s10, 1
        %s175 = scalar_select %p174, %s10, 1
        %s176 = smul.addr %s175, 8
        %s177 = scalar_lea.vmem %s2, %s176
      $region32: #{decoder_block.10} parent=19 // pred_fallthru
        _
    $region20: #{decoder_block.10} parent=5 // pred_fallthru
      _
    %p178 = scmp.le.s32.totalorder 1, %s10
    %p179 = scmp.lt.s32.totalorder %s10, 3
    %p180 = pnand %p178, %p179
    %p181 = pneg %p180
    // Predicated region
    $region33: #{decoder_block.10} parent=5 // pred_check
      _
    $region34: #{decoder_block.10} parent=5 // pred_check_branch
      %183 = sbr.rel (%p180) target = $region36
    $region35: #{decoder_block.10} parent=5 // pred_region
      %s184 = ssub.s32 %s10, 1
      %p185 = scmp.lt.s32.totalorder %s15, 1
      %s186 = scalar_select %p185, %s15, 1
      %s187 = smul.addr %s186, 8
      %s188 = scalar_lea.vmem %s0, %s187
      %p189 = pneg %p36
      %p190 = pneg %p33
      %p191 = scmp.lt.s32.totalorder %s15, 1
      %s192 = scalar_select %p191, %s15, 1
      %s193 = smul.addr %s192, 8
      %s194 = scalar_lea.vmem %s1, %s193
      %p195 = pneg %p62
      %p196 = pneg %p59
      %p197 = scmp.lt.s32.totalorder %s15, 1
      %s198 = scalar_select %p197, %s15, 1
      %s199 = smul.addr %s198, 8
      %s200 = scalar_lea.vmem %s2, %s199
      %p201 = pneg %p88
      %p202 = pneg %p85
      %p203 = pneg %p109
      %p204 = pneg %p106
      %p205 = pneg %p135
      %p206 = pneg %p132
      %p207 = scmp.lt.s32.totalorder %s15, 1
      %s208 = scalar_select %p207, %s15, 1
      %s209 = smul.addr %s208, 8
      %s210 = scalar_lea.vmem %s4, %s209
      %p211 = scmp.lt.s32.totalorder %s15, 1
      %s212 = scalar_select %p211, %s15, 1
      %s213 = smul.addr %s212, 8
      %s214 = scalar_lea.vmem %s0, %s213
      %p215 = scmp.lt.s32.totalorder %s15, 1
      %s216 = scalar_select %p215, %s15, 1
      %s217 = smul.addr %s216, 8
      %s218 = scalar_lea.vmem %s1, %s217
      %p219 = scmp.lt.s32.totalorder %s15, 1
      %s220 = scalar_select %p219, %s15, 1
      %s221 = smul.addr %s220, 8
      %s222 = scalar_lea.vmem %s2, %s221
      %p223 = scmp.lt.s32.totalorder %s15, 1
      %s224 = scalar_select %p223, %s15, 1
      %s225 = smul.addr %s224, 8
      %s226 = scalar_lea.vmem %s4, %s225
      %v228 = vld [vmem:[%s3] sm:$0xff]
      %vm229 = vcmp.eq.s32.totalorder %v228, 0
      %v230 = vld [vmem:[%s214] sm:$0xff]
      %v231 = vmul.f32 %v230, 0.25
      %v232 = vpack.c.bf16 %v231, %v231
      %v233 = vld [vmem:[%s218] sm:$0xff]
      %v234 = vpack.c.bf16 %v233, %v233
      %v235 = vld [vmem:[%s222] sm:$0xff]
      %v236 = vpack.c.bf16 %v235, %v235
      %vm237 = vcmask 130048
      %v239 = vsel %vm237, %v232, 0
      %v242 = vsel %vm237, %v234, 0
      %244 = vmatprep.subr.bf16.mxu0 0
      %245 = vmatpush1.bf16.xpose.msra.mxu0 0
      %246 = vmatprep.subr.bf16.mxu0 0
      %247 = vmatpush1.bf16.xpose.msra.mxu0 0
      %248 = vmatprep.subr.bf16.mxu0 0
      %249 = vmatpush1.bf16.xpose.msra.mxu0 0
      %250 = vmatprep.subr.bf16.mxu0 0
      %251 = vmatpush1.bf16.xpose.msra.mxu0 0
      %252 = vmatprep.subr.bf16.mxu0 0
      %253 = vmatpush1.bf16.xpose.msra.mxu0 0
      %254 = vmatprep.subr.bf16.mxu0 0
      %255 = vmatpush1.bf16.xpose.msra.mxu0 0
      %256 = vmatprep.subr.bf16.mxu0 0
      %257 = vmatpush1.bf16.xpose.msra.mxu0 0
      %258 = vmatprep.subr.bf16.mxu0 0
      %259 = vmatpush1.bf16.xpose.msra.mxu0 %v242
      %260 = vmatprep.subr.bf16.mxu0 0
      %261 = vmatpush2.bf16.xpose.msra.mxu0 0
      %262 = vmatprep.subr.bf16.mxu0 0
      %263 = vmatpush2.bf16.xpose.msra.mxu0 0
      %264 = vmatprep.subr.bf16.mxu0 0
      %265 = vmatpush2.bf16.xpose.msra.mxu0 0
      %266 = vmatprep.subr.bf16.mxu0 0
      %267 = vmatpush2.bf16.xpose.msra.mxu0 0
      %268 = vmatprep.subr.bf16.mxu0 0
      %269 = vmatpush2.bf16.xpose.msra.mxu0 0
      %270 = vmatprep.subr.bf16.mxu0 0
      %271 = vmatpush2.bf16.xpose.msra.mxu0 0
      %272 = vmatprep.subr.bf16.mxu0 0
      %273 = vmatpush2.bf16.xpose.msra.mxu0 0
      %274 = vmatprep.subr.bf16.mxu0 0
      %275 = vmatpush2.bf16.xpose.msra.mxu0 0
      %276 = vmatprep.mubr.bf16.mxu0 0
      %277 = vmatmul.mubr.bf16.gmra.mxu0 %v239
      %v278 = vpop.f32.mrf.mxu0
      %v279 = vadd.f32 0.0, %v278
      %v280 = vpop.f32.mrf.mxu0
      %v281 = vpop.f32.mrf.mxu0
      %v282 = vpop.f32.mrf.mxu0
      %283 = vdwg.mxu0
      %v284 = vsel %vm229, -1e+09, %v279
      %vm285 = vcmask 64512
      %v286 = vsel %vm285, %v284, -inf
      %287 = vmax.xlane.f32.xlu0 %v286
      %v288 = vpop.xlane.xlu0 %287
      %v289 = vsub.f32 %v284, %v288
      %v290 = vmul.f32 %v289, 1.442695
      %v291 = vpow.pop %v290
      %v292 = vsel %vm285, %v291, 0.0
      %293 = vadd.xlane.f32.xlu0 %v292
      %v294 = vpop.xlane.xlu0 %293
      %v295 = vrcp.pop %v294
      %v296 = vpack.c.bf16 %v291, %v291
      %v298 = vsel %vm285, %v296, 0
      %vm300 = vcmask 1043456
      %v302 = vsel %vm300, %v236, 0
      %304 = vmatprep.subr.bf16.mxu0 0
      %305 = vmatpush1.bf16.msra.mxu0 0
      %306 = vmatprep.subr.bf16.mxu0 0
      %307 = vmatpush1.bf16.msra.mxu0 0
      %308 = vmatprep.subr.bf16.mxu0 0
      %309 = vmatpush1.bf16.msra.mxu0 0
      %310 = vmatprep.subr.bf16.mxu0 0
      %311 = vmatpush1.bf16.msra.mxu0 0
      %312 = vmatprep.subr.bf16.mxu0 0
      %313 = vmatpush1.bf16.msra.mxu0 0
      %314 = vmatprep.subr.bf16.mxu0 0
      %315 = vmatpush1.bf16.msra.mxu0 0
      %316 = vmatprep.subr.bf16.mxu0 0
      %317 = vmatpush1.bf16.msra.mxu0 0
      %318 = vmatprep.subr.bf16.mxu0 0
      %319 = vmatpush1.bf16.msra.mxu0 %v302
      %320 = vmatprep.subr.bf16.mxu0 0
      %321 = vmatpush2.bf16.msra.mxu0 0
      %322 = vmatprep.subr.bf16.mxu0 0
      %323 = vmatpush2.bf16.msra.mxu0 0
      %324 = vmatprep.subr.bf16.mxu0 0
      %325 = vmatpush2.bf16.msra.mxu0 0
      %326 = vmatprep.subr.bf16.mxu0 0
      %327 = vmatpush2.bf16.msra.mxu0 0
      %328 = vmatprep.subr.bf16.mxu0 0
      %329 = vmatpush2.bf16.msra.mxu0 0
      %330 = vmatprep.subr.bf16.mxu0 0
      %331 = vmatpush2.bf16.msra.mxu0 0
      %332 = vmatprep.subr.bf16.mxu0 0
      %333 = vmatpush2.bf16.msra.mxu0 0
      %334 = vmatprep.subr.bf16.mxu0 0
      %335 = vmatpush2.bf16.msra.mxu0 0
      %336 = vmatprep.mubr.bf16.mxu0 0
      %337 = vmatmul.mubr.bf16.gmra.mxu0 %v298
      %v338 = vpop.f32.mrf.mxu0
      %v339 = vadd.f32 0.0, %v338
      %v340 = vpop.f32.mrf.mxu0
      %v341 = vpop.f32.mrf.mxu0
      %v342 = vpop.f32.mrf.mxu0
      %343 = vdwg.mxu0
      %v344 = vmul.f32 %v339, %v295
      %345 = vst.msk [vmem:[%s226] sm:$0xff] %vm237, %v344
      %v346 = vld [vmem:[%s214] sm:$0xff]
      %v347 = vmul.f32 %v346, 0.25
      %v348 = vpack.c.bf16 %v347, %v347
      %v349 = vld [vmem:[%s218] sm:$0xff]
      %v350 = vpack.c.bf16 %v349, %v349
      %v351 = vld [vmem:[%s222] sm:$0xff]
      %v352 = vpack.c.bf16 %v351, %v351
      %354 = vrot.lane.b32.xlu0 %v348, 112
      %v355 = vpop.permute.xlu0 %354
      %357 = vrot.lane.b32.xlu0 %v350, 112
      %v358 = vpop.permute.xlu0 %357
      %v360 = vsel %vm237, %v355, 0
      %v363 = vsel %vm237, %v358, 0
      %365 = vmatprep.subr.bf16.mxu0 0
      %366 = vmatpush1.bf16.xpose.msra.mxu0 0
      %367 = vmatprep.subr.bf16.mxu0 0
      %368 = vmatpush1.bf16.xpose.msra.mxu0 0
      %369 = vmatprep.subr.bf16.mxu0 0
      %370 = vmatpush1.bf16.xpose.msra.mxu0 0
      %371 = vmatprep.subr.bf16.mxu0 0
      %372 = vmatpush1.bf16.xpose.msra.mxu0 0
      %373 = vmatprep.subr.bf16.mxu0 0
      %374 = vmatpush1.bf16.xpose.msra.mxu0 0
      %375 = vmatprep.subr.bf16.mxu0 0
      %376 = vmatpush1.bf16.xpose.msra.mxu0 0
      %377 = vmatprep.subr.bf16.mxu0 0
      %378 = vmatpush1.bf16.xpose.msra.mxu0 0
      %379 = vmatprep.subr.bf16.mxu0 0
      %380 = vmatpush1.bf16.xpose.msra.mxu0 %v363
      %381 = vmatprep.subr.bf16.mxu0 0
      %382 = vmatpush2.bf16.xpose.msra.mxu0 0
      %383 = vmatprep.subr.bf16.mxu0 0
      %384 = vmatpush2.bf16.xpose.msra.mxu0 0
      %385 = vmatprep.subr.bf16.mxu0 0
      %386 = vmatpush2.bf16.xpose.msra.mxu0 0
      %387 = vmatprep.subr.bf16.mxu0 0
      %388 = vmatpush2.bf16.xpose.msra.mxu0 0
      %389 = vmatprep.subr.bf16.mxu0 0
      %390 = vmatpush2.bf16.xpose.msra.mxu0 0
      %391 = vmatprep.subr.bf16.mxu0 0
      %392 = vmatpush2.bf16.xpose.msra.mxu0 0
      %393 = vmatprep.subr.bf16.mxu0 0
      %394 = vmatpush2.bf16.xpose.msra.mxu0 0
      %395 = vmatprep.subr.bf16.mxu0 0
      %396 = vmatpush2.bf16.xpose.msra.mxu0 0
      %397 = vmatprep.mubr.bf16.mxu0 0
      %398 = vmatmul.mubr.bf16.gmra.mxu0 %v360
      %v399 = vpop.f32.mrf.mxu0
      %v400 = vadd.f32 0.0, %v399
      %v401 = vpop.f32.mrf.mxu0
      %v402 = vpop.f32.mrf.mxu0
      %v403 = vpop.f32.mrf.mxu0
      %404 = vdwg.mxu0
      %v405 = vsel %vm229, -1e+09, %v400
      %v406 = vsel %vm285, %v405, -inf
      %407 = vmax.xlane.f32.xlu0 %v406
      %v408 = vpop.xlane.xlu0 %407
      %v409 = vsub.f32 %v405, %v408
      %v410 = vmul.f32 %v409, 1.442695
      %v411 = vpow.pop %v410
      %v412 = vsel %vm285, %v411, 0.0
      %413 = vadd.xlane.f32.xlu0 %v412
      %v414 = vpop.xlane.xlu0 %413
      %v415 = vrcp.pop %v414
      %v416 = vpack.c.bf16 %v411, %v411
      %418 = vrot.lane.b32.xlu0 %v352, 112
      %v419 = vpop.permute.xlu0 %418
      %v421 = vsel %vm285, %v416, 0
      %v424 = vsel %vm300, %v419, 0
      %426 = vmatprep.subr.bf16.mxu0 0
      %427 = vmatpush1.bf16.msra.mxu0 0
      %428 = vmatprep.subr.bf16.mxu0 0
      %429 = vmatpush1.bf16.msra.mxu0 0
      %430 = vmatprep.subr.bf16.mxu0 0
      %431 = vmatpush1.bf16.msra.mxu0 0
      %432 = vmatprep.subr.bf16.mxu0 0
      %433 = vmatpush1.bf16.msra.mxu0 0
      %434 = vmatprep.subr.bf16.mxu0 0
      %435 = vmatpush1.bf16.msra.mxu0 0
      %436 = vmatprep.subr.bf16.mxu0 0
      %437 = vmatpush1.bf16.msra.mxu0 0
      %438 = vmatprep.subr.bf16.mxu0 0
      %439 = vmatpush1.bf16.msra.mxu0 0
      %440 = vmatprep.subr.bf16.mxu0 0
      %441 = vmatpush1.bf16.msra.mxu0 %v424
      %442 = vmatprep.subr.bf16.mxu0 0
      %443 = vmatpush2.bf16.msra.mxu0 0
      %444 = vmatprep.subr.bf16.mxu0 0
      %445 = vmatpush2.bf16.msra.mxu0 0
      %446 = vmatprep.subr.bf16.mxu0 0
      %447 = vmatpush2.bf16.msra.mxu0 0
      %448 = vmatprep.subr.bf16.mxu0 0
      %449 = vmatpush2.bf16.msra.mxu0 0
      %450 = vmatprep.subr.bf16.mxu0 0
      %451 = vmatpush2.bf16.msra.mxu0 0
      %452 = vmatprep.subr.bf16.mxu0 0
      %453 = vmatpush2.bf16.msra.mxu0 0
      %454 = vmatprep.subr.bf16.mxu0 0
      %455 = vmatpush2.bf16.msra.mxu0 0
      %456 = vmatprep.subr.bf16.mxu0 0
      %457 = vmatpush2.bf16.msra.mxu0 0
      %458 = vmatprep.mubr.bf16.mxu0 0
      %459 = vmatmul.mubr.bf16.gmra.mxu0 %v421
      %v460 = vpop.f32.mrf.mxu0
      %v461 = vadd.f32 0.0, %v460
      %v462 = vpop.f32.mrf.mxu0
      %v463 = vpop.f32.mrf.mxu0
      %v464 = vpop.f32.mrf.mxu0
      %465 = vdwg.mxu0
      %v466 = vmul.f32 %v461, %v415
      %468 = vrot.lane.b32.xlu0 %v466, 16
      %v469 = vpop.permute.xlu0 %468
      %vm471 = vcmask 261248
      %472 = vst.msk [vmem:[%s226] sm:$0xff] %vm471, %v469
      %v473 = vld [vmem:[%s214] sm:$0xff]
      %v474 = vmul.f32 %v473, 0.25
      %v475 = vpack.c.bf16 %v474, %v474
      %v476 = vld [vmem:[%s218] sm:$0xff]
      %v477 = vpack.c.bf16 %v476, %v476
      %v478 = vld [vmem:[%s222] sm:$0xff]
      %v479 = vpack.c.bf16 %v478, %v478
      %481 = vrot.lane.b32.xlu0 %v475, 96
      %v482 = vpop.permute.xlu0 %481
      %484 = vrot.lane.b32.xlu0 %v477, 96
      %v485 = vpop.permute.xlu0 %484
      %v487 = vsel %vm237, %v482, 0
      %v490 = vsel %vm237, %v485, 0
      %492 = vmatprep.subr.bf16.mxu0 0
      %493 = vmatpush1.bf16.xpose.msra.mxu0 0
      %494 = vmatprep.subr.bf16.mxu0 0
      %495 = vmatpush1.bf16.xpose.msra.mxu0 0
      %496 = vmatprep.subr.bf16.mxu0 0
      %497 = vmatpush1.bf16.xpose.msra.mxu0 0
      %498 = vmatprep.subr.bf16.mxu0 0
      %499 = vmatpush1.bf16.xpose.msra.mxu0 0
      %500 = vmatprep.subr.bf16.mxu0 0
      %501 = vmatpush1.bf16.xpose.msra.mxu0 0
      %502 = vmatprep.subr.bf16.mxu0 0
      %503 = vmatpush1.bf16.xpose.msra.mxu0 0
      %504 = vmatprep.subr.bf16.mxu0 0
      %505 = vmatpush1.bf16.xpose.msra.mxu0 0
      %506 = vmatprep.subr.bf16.mxu0 0
      %507 = vmatpush1.bf16.xpose.msra.mxu0 %v490
      %508 = vmatprep.subr.bf16.mxu0 0
      %509 = vmatpush2.bf16.xpose.msra.mxu0 0
      %510 = vmatprep.subr.bf16.mxu0 0
      %511 = vmatpush2.bf16.xpose.msra.mxu0 0
      %512 = vmatprep.subr.bf16.mxu0 0
      %513 = vmatpush2.bf16.xpose.msra.mxu0 0
      %514 = vmatprep.subr.bf16.mxu0 0
      %515 = vmatpush2.bf16.xpose.msra.mxu0 0
      %516 = vmatprep.subr.bf16.mxu0 0
      %517 = vmatpush2.bf16.xpose.msra.mxu0 0
      %518 = vmatprep.subr.bf16.mxu0 0
      %519 = vmatpush2.bf16.xpose.msra.mxu0 0
      %520 = vmatprep.subr.bf16.mxu0 0
      %521 = vmatpush2.bf16.xpose.msra.mxu0 0
      %522 = vmatprep.subr.bf16.mxu0 0
      %523 = vmatpush2.bf16.xpose.msra.mxu0 0
      %524 = vmatprep.mubr.bf16.mxu0 0
      %525 = vmatmul.mubr.bf16.gmra.mxu0 %v487
      %v526 = vpop.f32.mrf.mxu0
      %v527 = vadd.f32 0.0, %v526
      %v528 = vpop.f32.mrf.mxu0
      %v529 = vpop.f32.mrf.mxu0
      %v530 = vpop.f32.mrf.mxu0
      %531 = vdwg.mxu0
      %v532 = vsel %vm229, -1e+09, %v527
      %v533 = vsel %vm285, %v532, -inf
      %534 = vmax.xlane.f32.xlu0 %v533
      %v535 = vpop.xlane.xlu0 %534
      %v536 = vsub.f32 %v532, %v535
      %v537 = vmul.f32 %v536, 1.442695
      %v538 = vpow.pop %v537
      %v539 = vsel %vm285, %v538, 0.0
      %540 = vadd.xlane.f32.xlu0 %v539
      %v541 = vpop.xlane.xlu0 %540
      %v542 = vrcp.pop %v541
      %v543 = vpack.c.bf16 %v538, %v538
      %545 = vrot.lane.b32.xlu0 %v479, 96
      %v546 = vpop.permute.xlu0 %545
      %v548 = vsel %vm285, %v543, 0
      %v551 = vsel %vm300, %v546, 0
      %553 = vmatprep.subr.bf16.mxu0 0
      %554 = vmatpush1.bf16.msra.mxu0 0
      %555 = vmatprep.subr.bf16.mxu0 0
      %556 = vmatpush1.bf16.msra.mxu0 0
      %557 = vmatprep.subr.bf16.mxu0 0
      %558 = vmatpush1.bf16.msra.mxu0 0
      %559 = vmatprep.subr.bf16.mxu0 0
      %560 = vmatpush1.bf16.msra.mxu0 0
      %561 = vmatprep.subr.bf16.mxu0 0
      %562 = vmatpush1.bf16.msra.mxu0 0
      %563 = vmatprep.subr.bf16.mxu0 0
      %564 = vmatpush1.bf16.msra.mxu0 0
      %565 = vmatprep.subr.bf16.mxu0 0
      %566 = vmatpush1.bf16.msra.mxu0 0
      %567 = vmatprep.subr.bf16.mxu0 0
      %568 = vmatpush1.bf16.msra.mxu0 %v551
      %569 = vmatprep.subr.bf16.mxu0 0
      %570 = vmatpush2.bf16.msra.mxu0 0
      %571 = vmatprep.subr.bf16.mxu0 0
      %572 = vmatpush2.bf16.msra.mxu0 0
      %573 = vmatprep.subr.bf16.mxu0 0
      %574 = vmatpush2.bf16.msra.mxu0 0
      %575 = vmatprep.subr.bf16.mxu0 0
      %576 = vmatpush2.bf16.msra.mxu0 0
      %577 = vmatprep.subr.bf16.mxu0 0
      %578 = vmatpush2.bf16.msra.mxu0 0
      %579 = vmatprep.subr.bf16.mxu0 0
      %580 = vmatpush2.bf16.msra.mxu0 0
      %581 = vmatprep.subr.bf16.mxu0 0
      %582 = vmatpush2.bf16.msra.mxu0 0
      %583 = vmatprep.subr.bf16.mxu0 0
      %584 = vmatpush2.bf16.msra.mxu0 0
      %585 = vmatprep.mubr.bf16.mxu0 0
      %586 = vmatmul.mubr.bf16.gmra.mxu0 %v548
      %v587 = vpop.f32.mrf.mxu0
      %v588 = vadd.f32 0.0, %v587
      %v589 = vpop.f32.mrf.mxu0
      %v590 = vpop.f32.mrf.mxu0
      %v591 = vpop.f32.mrf.mxu0
      %592 = vdwg.mxu0
      %v593 = vmul.f32 %v588, %v542
      %595 = vrot.lane.b32.xlu0 %v593, 32
      %v596 = vpop.permute.xlu0 %595
      %vm598 = vcmask 392448
      %599 = vst.msk [vmem:[%s226] sm:$0xff] %vm598, %v596
      %v600 = vld [vmem:[%s214] sm:$0xff]
      %v601 = vmul.f32 %v600, 0.25
      %v602 = vpack.c.bf16 %v601, %v601
      %v603 = vld [vmem:[%s218] sm:$0xff]
      %v604 = vpack.c.bf16 %v603, %v603
      %v605 = vld [vmem:[%s222] sm:$0xff]
      %v606 = vpack.c.bf16 %v605, %v605
      %608 = vrot.lane.b32.xlu0 %v602, 80
      %v609 = vpop.permute.xlu0 %608
      %611 = vrot.lane.b32.xlu0 %v604, 80
      %v612 = vpop.permute.xlu0 %611
      %v614 = vsel %vm237, %v609, 0
      %v617 = vsel %vm237, %v612, 0
      %619 = vmatprep.subr.bf16.mxu0 0
      %620 = vmatpush1.bf16.xpose.msra.mxu0 0
      %621 = vmatprep.subr.bf16.mxu0 0
      %622 = vmatpush1.bf16.xpose.msra.mxu0 0
      %623 = vmatprep.subr.bf16.mxu0 0
      %624 = vmatpush1.bf16.xpose.msra.mxu0 0
      %625 = vmatprep.subr.bf16.mxu0 0
      %626 = vmatpush1.bf16.xpose.msra.mxu0 0
      %627 = vmatprep.subr.bf16.mxu0 0
      %628 = vmatpush1.bf16.xpose.msra.mxu0 0
      %629 = vmatprep.subr.bf16.mxu0 0
      %630 = vmatpush1.bf16.xpose.msra.mxu0 0
      %631 = vmatprep.subr.bf16.mxu0 0
      %632 = vmatpush1.bf16.xpose.msra.mxu0 0
      %633 = vmatprep.subr.bf16.mxu0 0
      %634 = vmatpush1.bf16.xpose.msra.mxu0 %v617
      %635 = vmatprep.subr.bf16.mxu0 0
      %636 = vmatpush2.bf16.xpose.msra.mxu0 0
      %637 = vmatprep.subr.bf16.mxu0 0
      %638 = vmatpush2.bf16.xpose.msra.mxu0 0
      %639 = vmatprep.subr.bf16.mxu0 0
      %640 = vmatpush2.bf16.xpose.msra.mxu0 0
      %641 = vmatprep.subr.bf16.mxu0 0
      %642 = vmatpush2.bf16.xpose.msra.mxu0 0
      %643 = vmatprep.subr.bf16.mxu0 0
      %644 = vmatpush2.bf16.xpose.msra.mxu0 0
      %645 = vmatprep.subr.bf16.mxu0 0
      %646 = vmatpush2.bf16.xpose.msra.mxu0 0
      %647 = vmatprep.subr.bf16.mxu0 0
      %648 = vmatpush2.bf16.xpose.msra.mxu0 0
      %649 = vmatprep.subr.bf16.mxu0 0
      %650 = vmatpush2.bf16.xpose.msra.mxu0 0
      %651 = vmatprep.mubr.bf16.mxu0 0
      %652 = vmatmul.mubr.bf16.gmra.mxu0 %v614
      %v653 = vpop.f32.mrf.mxu0
      %v654 = vadd.f32 0.0, %v653
      %v655 = vpop.f32.mrf.mxu0
      %v656 = vpop.f32.mrf.mxu0
      %v657 = vpop.f32.mrf.mxu0
      %658 = vdwg.mxu0
      %v659 = vsel %vm229, -1e+09, %v654
      %v660 = vsel %vm285, %v659, -inf
      %661 = vmax.xlane.f32.xlu0 %v660
      %v662 = vpop.xlane.xlu0 %661
      %v663 = vsub.f32 %v659, %v662
      %v664 = vmul.f32 %v663, 1.442695
      %v665 = vpow.pop %v664
      %v666 = vsel %vm285, %v665, 0.0
      %667 = vadd.xlane.f32.xlu0 %v666
      %v668 = vpop.xlane.xlu0 %667
      %v669 = vrcp.pop %v668
      %v670 = vpack.c.bf16 %v665, %v665
      %672 = vrot.lane.b32.xlu0 %v606, 80
      %v673 = vpop.permute.xlu0 %672
      %v675 = vsel %vm285, %v670, 0
      %v678 = vsel %vm300, %v673, 0
      %680 = vmatprep.subr.bf16.mxu0 0
      %681 = vmatpush1.bf16.msra.mxu0 0
      %682 = vmatprep.subr.bf16.mxu0 0
      %683 = vmatpush1.bf16.msra.mxu0 0
      %684 = vmatprep.subr.bf16.mxu0 0
      %685 = vmatpush1.bf16.msra.mxu0 0
      %686 = vmatprep.subr.bf16.mxu0 0
      %687 = vmatpush1.bf16.msra.mxu0 0
      %688 = vmatprep.subr.bf16.mxu0 0
      %689 = vmatpush1.bf16.msra.mxu0 0
      %690 = vmatprep.subr.bf16.mxu0 0
      %691 = vmatpush1.bf16.msra.mxu0 0
      %692 = vmatprep.subr.bf16.mxu0 0
      %693 = vmatpush1.bf16.msra.mxu0 0
      %694 = vmatprep.subr.bf16.mxu0 0
      %695 = vmatpush1.bf16.msra.mxu0 %v678
      %696 = vmatprep.subr.bf16.mxu0 0
      %697 = vmatpush2.bf16.msra.mxu0 0
      %698 = vmatprep.subr.bf16.mxu0 0
      %699 = vmatpush2.bf16.msra.mxu0 0
      %700 = vmatprep.subr.bf16.mxu0 0
      %701 = vmatpush2.bf16.msra.mxu0 0
      %702 = vmatprep.subr.bf16.mxu0 0
      %703 = vmatpush2.bf16.msra.mxu0 0
      %704 = vmatprep.subr.bf16.mxu0 0
      %705 = vmatpush2.bf16.msra.mxu0 0
      %706 = vmatprep.subr.bf16.mxu0 0
      %707 = vmatpush2.bf16.msra.mxu0 0
      %708 = vmatprep.subr.bf16.mxu0 0
      %709 = vmatpush2.bf16.msra.mxu0 0
      %710 = vmatprep.subr.bf16.mxu0 0
      %711 = vmatpush2.bf16.msra.mxu0 0
      %712 = vmatprep.mubr.bf16.mxu0 0
      %713 = vmatmul.mubr.bf16.gmra.mxu0 %v675
      %v714 = vpop.f32.mrf.mxu0
      %v715 = vadd.f32 0.0, %v714
      %v716 = vpop.f32.mrf.mxu0
      %v717 = vpop.f32.mrf.mxu0
      %v718 = vpop.f32.mrf.mxu0
      %719 = vdwg.mxu0
      %v720 = vmul.f32 %v715, %v669
      %722 = vrot.lane.b32.xlu0 %v720, 48
      %v723 = vpop.permute.xlu0 %722
      %vm725 = vcmask 523648
      %726 = vst.msk [vmem:[%s226] sm:$0xff] %vm725, %v723
      %p727 = scmp.lt.s32.totalorder %s15, 1
      %s728 = scalar_select %p727, %s15, 1
      %s729 = smul.addr %s728, 8
      %s730 = scalar_lea.vmem %s4, %s729
      // Predicated region
      $region37: #{decoder_block.10} parent=35 // pred_check
        %p731 = pneg %p132
      $region38: #{decoder_block.10} parent=35 // pred_check_branch
        %733 = sbr.rel (%p731) target = $region40
      $region39: #{decoder_block.10} parent=35 // pred_region
        _
      $region40: #{decoder_block.10} parent=35 // pred_fallthru
        _
    $region36: #{decoder_block.10} parent=5 // pred_fallthru
      _
    %p734 = scmp.le.s32.totalorder 2, %s10
    // Predicated region
    $region41: #{decoder_block.10} parent=5 // pred_check
      %p735 = pneg %p734
    $region42: #{decoder_block.10} parent=5 // pred_check_branch
      %737 = sbr.rel (%p735) target = $region44
    $region43: #{decoder_block.10} parent=5 // pred_region
      %s738 = ssub.s32 %s10, 2
      // Predicated region
      $region45: #{decoder_block.10} parent=43 // pred_check
        %p739 = pneg %p138
      $region46: #{decoder_block.10} parent=43 // pred_check_branch
        %741 = sbr.rel (%p739) target = $region48
      $region47: #{decoder_block.10} parent=43 // pred_region
        %p742 = scmp.lt.s32.totalorder %s16, 1
        %s743 = scalar_select %p742, %s16, 1
        %s744 = smul.addr %s743, 8
        %s745 = scalar_lea.vmem %s4, %s744
      $region48: #{decoder_block.10} parent=43 // pred_fallthru
        _
    $region44: #{decoder_block.10} parent=5 // pred_fallthru
      _
  $region6: #{decoder_block.10} parent=0 // loop_footer
    %s14 = sadd.s32 1, %s10
  $region7: #{decoder_block.10} parent=0 // loop_footer_branch
    %9 = sbr.rel target = $region3
  $region8: #{decoder_block.10} parent=0 // loop_exit
    _

// kernel: decoder_block.16
$region0: #{decoder_block.16}
  #allocation0 [shape = 'u32[]', space=smem, size = 0x4, offset = 0x4, fixed_abs, tag = 'smem constant byte address 0x4 - core index']
  #allocation1 [shape = 'u32[144,128]{1,0:T(1,128)}', space=vmem, size = 0x12000, scoped, tag = 'internal scratch']
  %s0 = inlined_call_operand.vmem [shape: f32[16,64], index: 0, kind: input, shape index: {}]
  %s1 = inlined_call_operand.vmem [shape: f32[2], index: 1, kind: input, shape index: {}]
  %s2 = inlined_call_operand.vmem [shape: bf16[64,128], index: 2, kind: input, shape index: {}]
  %s3 = inlined_call_operand.vmem [shape: f32[1,128], index: 3, kind: input, shape index: {}]
  %s4 = inlined_call_operand.vmem [shape: f32[16,128], index: 4, kind: output, shape index: {}]
  %s5 = sld [smem:[#allocation0]]
  $region53: #{decoder_block.16} parent=0
    _
  %s7 = ssub.s32 1, %s5
  %s8 = scalar_select 0, %s7, %s5
  $region1: #{decoder_block.16} parent=0
    #allocation2 [shape = 'u8[512]{0}', space=smem, size = 0x200, scoped, tag = 'input window, operand 1, single buffered']
    #allocation3 [shape = 's32[2]{0}', space=sflag, size = 0x8, scoped, tag = 'scoped memory for decoder_block.16']
    %9 = vsyncpa [#allocation3], 0
    loop: start=0, step=1, limit=4
    $region2: #{decoder_block.16} parent=1 // loop_pre_header
      _
    $region3: #{decoder_block.16} parent=1 // loop_header
      %s11 = sphi 0, %s15
      %p12 = scmp.ge.s32.totalorder %s11, 4
      %s21 = sphi 0, %s23
      %s24 = sphi 0, %s21
      %s25 = sphi 0, %s24
      %s41 = sphi 0, %s25
      %s45 = sphi 0, %s45
      %s47 = sphi 0, %s45
      %s48 = sphi 0, %s47
      %s62 = sphi 0, %s48
      %s66 = sphi 0, %s66
      %s68 = sphi 0, %s66
      %s69 = sphi 0, %s68
      %s83 = sphi 0, %s69
      %s87 = sphi 0, %s87
      %s89 = sphi 0, %s87
      %s90 = sphi 0, %s89
      %s104 = sphi 0, %s90
      %s110 = sphi 0, %s112
      %s113 = sphi 0, %s110
      %s114 = sphi 0, %s113
      %s130 = sphi 0, %s114
    $region4: #{decoder_block.16} parent=1 // loop_header_branch
      %14 = sbr.rel (%p12) target = $region8
    $region5: #{decoder_block.16} parent=1 // loop_body
      %s16 = ssub.s32 %s11, 1
      %s17 = ssub.s32 %s11, 2
      %s18 = sadd.s32 %s11, 1
      %s19 = ssub.s32 %s11, %s18
      %p20 = scmp.eq.s32.totalorder %s19, 0
      %s22 = sadd.s32 %s21, 1
      %s23 = scalar_select %p20, %s21, %s22
      %p26 = pneg %p20
      %p27 = scmp.eq.s32.totalorder %s11, 1
      %p28 = por %p26, %p27
      %p29 = scmp.ne.s32.totalorder %s21, %s24
      %p30 = scmp.eq.s32.totalorder %s11, 0
      %p31 = por %p29, %p30
      %p32 = scmp.ne.s32.totalorder %s21, %s24
      %p33 = scmp.eq.s32.totalorder %s16, 1
      %p34 = por %p32, %p33
      %p35 = scmp.ne.s32.totalorder %s24, %s25
      %p36 = scmp.eq.s32.totalorder %s16, 0
      %p37 = por %p35, %p36
      %p38 = scmp.ne.s32.totalorder %s24, %s25
      %p39 = scmp.eq.s32.totalorder %s17, 1
      %p40 = por %p38, %p39
      %p42 = scmp.ne.s32.totalorder %s25, %s41
      %p43 = scmp.eq.s32.totalorder %s17, 0
      %p44 = por %p42, %p43
      %s46 = sadd.s32 %s45, 1
      %p49 = scmp.eq.s32.totalorder %s11, 1
      %p50 = scmp.ne.s32.totalorder %s45, %s47
      %p51 = scmp.eq.s32.totalorder %s11, 0
      %p52 = por %p50, %p51
      %p53 = scmp.ne.s32.totalorder %s45, %s47
      %p54 = scmp.eq.s32.totalorder %s16, 1
      %p55 = por %p53, %p54
      %p56 = scmp.ne.s32.totalorder %s47, %s48
      %p57 = scmp.eq.s32.totalorder %s16, 0
      %p58 = por %p56, %p57
      %p59 = scmp.ne.s32.totalorder %s47, %s48
      %p60 = scmp.eq.s32.totalorder %s17, 1
      %p61 = por %p59, %p60
      %p63 = scmp.ne.s32.totalorder %s48, %s62
      %p64 = scmp.eq.s32.totalorder %s17, 0
      %p65 = por %p63, %p64
      %s67 = sadd.s32 %s66, 1
      %p70 = scmp.eq.s32.totalorder %s11, 1
      %p71 = scmp.ne.s32.totalorder %s66, %s68
      %p72 = scmp.eq.s32.totalorder %s11, 0
      %p73 = por %p71, %p72
      %p74 = scmp.ne.s32.totalorder %s66, %s68
      %p75 = scmp.eq.s32.totalorder %s16, 1
      %p76 = por %p74, %p75
      %p77 = scmp.ne.s32.totalorder %s68, %s69
      %p78 = scmp.eq.s32.totalorder %s16, 0
      %p79 = por %p77, %p78
      %p80 = scmp.ne.s32.totalorder %s68, %s69
      %p81 = scmp.eq.s32.totalorder %s17, 1
      %p82 = por %p80, %p81
      %p84 = scmp.ne.s32.totalorder %s69, %s83
      %p85 = scmp.eq.s32.totalorder %s17, 0
      %p86 = por %p84, %p85
      %s88 = sadd.s32 %s87, 1
      %p91 = scmp.eq.s32.totalorder %s11, 1
      %p92 = scmp.ne.s32.totalorder %s87, %s89
      %p93 = scmp.eq.s32.totalorder %s11, 0
      %p94 = por %p92, %p93
      %p95 = scmp.ne.s32.totalorder %s87, %s89
      %p96 = scmp.eq.s32.totalorder %s16, 1
      %p97 = por %p95, %p96
      %p98 = scmp.ne.s32.totalorder %s89, %s90
      %p99 = scmp.eq.s32.totalorder %s16, 0
      %p100 = por %p98, %p99
      %p101 = scmp.ne.s32.totalorder %s89, %s90
      %p102 = scmp.eq.s32.totalorder %s17, 1
      %p103 = por %p101, %p102
      %p105 = scmp.ne.s32.totalorder %s90, %s104
      %p106 = scmp.eq.s32.totalorder %s17, 0
      %p107 = por %p105, %p106
      %s108 = ssub.s32 %s11, %s18
      %p109 = scmp.eq.s32.totalorder %s108, 0
      %s111 = sadd.s32 %s110, 1
      %s112 = scalar_select %p109, %s110, %s111
      %p115 = pneg %p109
      %p116 = scmp.eq.s32.totalorder %s11, 1
      %p117 = por %p115, %p116
      %p118 = scmp.ne.s32.totalorder %s110, %s113
      %p119 = scmp.eq.s32.totalorder %s11, 0
      %p120 = por %p118, %p119
      %p121 = scmp.ne.s32.totalorder %s110, %s113
      %p122 = scmp.eq.s32.totalorder %s16, 1
      %p123 = por %p121, %p122
      %p124 = scmp.ne.s32.totalorder %s113, %s114
      %p125 = scmp.eq.s32.totalorder %s16, 0
      %p126 = por %p124, %p125
      %p127 = scmp.ne.s32.totalorder %s113, %s114
      %p128 = scmp.eq.s32.totalorder %s17, 1
      %p129 = por %p127, %p128
      %p131 = scmp.ne.s32.totalorder %s114, %s130
      %p132 = scmp.eq.s32.totalorder %s17, 0
      %p133 = por %p131, %p132
      %p134 = scmp.le.s32.totalorder 1, %s11
      %p135 = scmp.lt.s32.totalorder %s11, 3
      %p136 = pnand %p134, %p135
      %p137 = pneg %p136
      // Predicated region
      $region9: #{decoder_block.16} parent=5 // pred_check
        _
      $region10: #{decoder_block.16} parent=5 // pred_check_branch
        %139 = sbr.rel (%p136) target = $region12
      $region11: #{decoder_block.16} parent=5 // pred_region
        %s140 = ssub.s32 %s11, 1
        // Predicated region
        $region13: #{decoder_block.16} parent=11 // pred_check
          %p141 = pneg %p58
        $region14: #{decoder_block.16} parent=11 // pred_check_branch
          %143 = sbr.rel (%p141) target = $region16
        $region15: #{decoder_block.16} parent=11 // pred_region
          %s145 = ssub.s32 16, 16
          %146 = vsyncadd [#allocation3], %s145
          %s148 = sshll.u32 %s1, 4
          %s149 = int_to_ptr.vmem [resolvable:$true] %s148
          %151 = dma.vmem_to_smem %s149, 16, [#allocation2], [#allocation3]
        $region16: #{decoder_block.16} parent=11 // pred_fallthru
          _
        // Predicated region
        $region17: #{decoder_block.16} parent=11 // pred_check
          %p152 = pneg %p79
        $region18: #{decoder_block.16} parent=11 // pred_check_branch
          %154 = sbr.rel (%p152) target = $region20
        $region19: #{decoder_block.16} parent=11 // pred_region
          _
        $region20: #{decoder_block.16} parent=11 // pred_fallthru
          _
        // Predicated region
        $region21: #{decoder_block.16} parent=11 // pred_check
          %p155 = pneg %p100
        $region22: #{decoder_block.16} parent=11 // pred_check_branch
          %157 = sbr.rel (%p155) target = $region24
        $region23: #{decoder_block.16} parent=11 // pred_region
          _
        $region24: #{decoder_block.16} parent=11 // pred_fallthru
          _
      $region12: #{decoder_block.16} parent=5 // pred_fallthru
        _
      %p158 = scmp.lt.s32.totalorder %s11, 2
      // Predicated region
      $region25: #{decoder_block.16} parent=5 // pred_check
        %p159 = pneg %p158
      $region26: #{decoder_block.16} parent=5 // pred_check_branch
        %161 = sbr.rel (%p159) target = $region28
      $region27: #{decoder_block.16} parent=5 // pred_region
        // Predicated region
        $region29: #{decoder_block.16} parent=27 // pred_check
          %p162 = pneg %p31
        $region30: #{decoder_block.16} parent=27 // pred_check_branch
          %164 = sbr.rel (%p162) target = $region32
        $region31: #{decoder_block.16} parent=27 // pred_region
          %p165 = scmp.lt.s32.totalorder %s11, 1
          %s166 = scalar_select %p165, %s11, 1
          %s167 = smul.addr %s166, 8
          %s168 = scalar_lea.vmem %s0, %s167
        $region32: #{decoder_block.16} parent=27 // pred_fallthru
          _
      $region28: #{decoder_block.16} parent=5 // pred_fallthru
        _
      %p169 = scmp.le.s32.totalorder 1, %s11
      %p170 = scmp.lt.s32.totalorder %s11, 3
      %p171 = pnand %p169, %p170
      %p172 = pneg %p171
      // Predicated region
      $region33: #{decoder_block.16} parent=5 // pred_check
        _
      $region34: #{decoder_block.16} parent=5 // pred_check_branch
        %174 = sbr.rel (%p171) target = $region36
      $region35: #{decoder_block.16} parent=5 // pred_region
        %s175 = ssub.s32 %s11, 1
        // Predicated region
        $region37: #{decoder_block.16} parent=35 // pred_check
          %p176 = pneg %p58
        $region38: #{decoder_block.16} parent=35 // pred_check_branch
          %178 = sbr.rel (%p176) target = $region40
        $region39: #{decoder_block.16} parent=35 // pred_region
          %179 = dma.done [#allocation3], 16
        $region40: #{decoder_block.16} parent=35 // pred_fallthru
          _
        %180 = sfence
        %p181 = scmp.lt.s32.totalorder %s16, 1
        %s182 = scalar_select %p181, %s16, 1
        %s183 = smul.addr %s182, 8
        %s184 = scalar_lea.vmem %s0, %s183
        %p185 = pneg %p37
        %p186 = pneg %p34
        %p187 = pneg %p58
        %p188 = pneg %p55
        %p189 = pneg %p79
        %p190 = pneg %p76
        %p191 = pneg %p100
        %p192 = pneg %p97
        %p193 = pneg %p126
        %p194 = pneg %p123
        %p195 = scmp.lt.s32.totalorder %s16, 1
        %s196 = scalar_select %p195, %s16, 1
        %s197 = smul.addr %s196, 8
        %s198 = scalar_lea.vmem %s4, %s197
        %p199 = scmp.lt.s32.totalorder %s16, 1
        %s200 = scalar_select %p199, %s16, 1
        %s201 = smul.addr %s200, 8
        %s202 = scalar_lea.vmem %s0, %s201
        %p203 = scmp.lt.s32.totalorder %s16, 1
        %s204 = scalar_select %p203, %s16, 1
        %s205 = smul.addr %s204, 8
        %s206 = scalar_lea.vmem %s4, %s205
        %v208 = vld [vmem:[%s202] sm:$0xff]
        %s209 = sld [smem:[#allocation2]]
        %s210 = sld [smem:[#allocation2 + $0x1]]
        %vm211 = vcmask 523264
        %v212 = vsel %vm211, %v208, 0.0
        %213 = vadd.xlane.f32.xlu0 %v212
        %v214 = vpop.xlane.xlu0 %213
        %v215 = vrcp.pop 64.0
        %v216 = vmul.f32 %v214, %v215
        %v217 = vsub.f32 %v208, %v216
        %v218 = vmul.f32 %v217, %v217
        %v219 = vsel %vm211, %v218, 0.0
        %220 = vadd.xlane.f32.xlu0 %v219
        %v221 = vpop.xlane.xlu0 %220
        %v222 = vrcp.pop 63.0
        %v223 = vmul.f32 %v221, %v222
        %v224 = vrsqrt.pop %v223
        %v225 = vmul.f32 %v223, %v224
        %vm226 = vcmp.eq.f32.partialorder %v223, inf
        %v227 = vsel %vm226, %v223, %v225
        %vm228 = vcmp.eq.f32.partialorder %v223, 0.0
        %v229 = vand.u32 %v223, 2147483648
        %v230 = vsel %vm228, %v229, %v227
        %v231 = vadd.f32 %v230, 1e-06
        %v232 = vstv %s209
        %v233 = vrcp.pop %v231
        %v234 = vmul.f32 %v232, %v233
        %v235 = vmul.f32 %v217, %v234
        %v236 = vstv %s210
        %v237 = vadd.f32 %v235, %v236
        %v238 = vpack.c.bf16 %v237, %v237
        %v239 = vld [vmem:[%s2] sm:$0xf]
        %v240 = vld [vmem:[%s2 + $0x4] sm:$0xf]
        %v241 = vld [vmem:[%s2 + $0x8] sm:$0xf]
        %v242 = vld [vmem:[%s2 + $0xc] sm:$0xf]
        %v243 = vld [vmem:[%s2 + $0x10] sm:$0xf]
        %v244 = vld [vmem:[%s2 + $0x14] sm:$0xf]
        %v245 = vld [vmem:[%s2 + $0x18] sm:$0xf]
        %v246 = vld [vmem:[%s2 + $0x1c] sm:$0xf]
        %v247 = vld [vmem:[%s3] sm:$0x1]
        %v249 = vlaneseq
        %v250 = vshrl.u32 %v249, 7
        %v251 = vsub.s32 0, %v250
        %v252 = vrot.slane %v247, %v251
        %v262 = vunpack.c.l.b16 %v239
        %v263 = vunpack.c.l.b16 %v240
        %v264 = vunpack.c.l.b16 %v241
        %v265 = vunpack.c.l.b16 %v242
        %v266 = vunpack.c.l.b16 %v243
        %v267 = vunpack.c.l.b16 %v244
        %v268 = vunpack.c.l.b16 %v245
        %v269 = vunpack.c.l.b16 %v246
        %v270 = vpack.c.b16 %v263, %v262
        %v271 = vpack.c.b16 %v265, %v264
        %v272 = vpack.c.b16 %v267, %v266
        %v273 = vpack.c.b16 %v269, %v268
        %v279 = vsel %vm211, %v238, 0
        %281 = vmatprep.subr.bf16.mxu0 0
        %282 = vmatpush1.bf16.msra.mxu0 0
        %283 = vmatprep.subr.bf16.mxu0 0
        %284 = vmatpush1.bf16.msra.mxu0 0
        %285 = vmatprep.subr.bf16.mxu0 0
        %286 = vmatpush1.bf16.msra.mxu0 0
        %287 = vmatprep.subr.bf16.mxu0 0
        %288 = vmatpush1.bf16.msra.mxu0 0
        %289 = vmatprep.subr.bf16.mxu0 0
        %290 = vmatpush1.bf16.msra.mxu0 %v273
        %291 = vmatprep.subr.bf16.mxu0 0
        %292 = vmatpush1.bf16.msra.mxu0 %v272
        %293 = vmatprep.subr.bf16.mxu0 0
        %294 = vmatpush1.bf16.msra.mxu0 %v271
        %295 = vmatprep.subr.bf16.mxu0 0
        %296 = vmatpush1.bf16.msra.mxu0 %v270
        %297 = vmatprep.subr.bf16.mxu0 0
        %298 = vmatpush2.bf16.msra.mxu0 0
        %299 = vmatprep.subr.bf16.mxu0 0
        %300 = vmatpush2.bf16.msra.mxu0 0
        %301 = vmatprep.subr.bf16.mxu0 0
        %302 = vmatpush2.bf16.msra.mxu0 0
        %303 = vmatprep.subr.bf16.mxu0 0
        %304 = vmatpush2.bf16.msra.mxu0 0
        %305 = vmatprep.subr.bf16.mxu0 0
        %306 = vmatpush2.bf16.msra.mxu0 0
        %307 = vmatprep.subr.bf16.mxu0 0
        %308 = vmatpush2.bf16.msra.mxu0 0
        %309 = vmatprep.subr.bf16.mxu0 0
        %310 = vmatpush2.bf16.msra.mxu0 0
        %311 = vmatprep.subr.bf16.mxu0 0
        %312 = vmatpush2.bf16.msra.mxu0 0
        %313 = vmatprep.mubr.bf16.mxu0 0
        %314 = vmatmul.mubr.bf16.gmra.mxu0 %v279
        %v315 = vpop.f32.mrf.mxu0
        %v316 = vadd.f32 %v252, %v315
        %v317 = vpop.f32.mrf.mxu0
        %v318 = vpop.f32.mrf.mxu0
        %v319 = vpop.f32.mrf.mxu0
        %320 = vdwg.mxu0
        %v321 = vmax.f32 %v316, 0.0
        %322 = vst [vmem:[%s206] sm:$0xff] %v321
        %p323 = scmp.lt.s32.totalorder %s16, 1
        %s324 = scalar_select %p323, %s16, 1
        %s325 = smul.addr %s324, 8
        %s326 = scalar_lea.vmem %s4, %s325
        // Predicated region
        $region41: #{decoder_block.16} parent=35 // pred_check
          %p327 = pneg %p123
        $region42: #{decoder_block.16} parent=35 // pred_check_branch
          %329 = sbr.rel (%p327) target = $region44
        $region43: #{decoder_block.16} parent=35 // pred_region
          _
        $region44: #{decoder_block.16} parent=35 // pred_fallthru
          _
      $region36: #{decoder_block.16} parent=5 // pred_fallthru
        _
      %p330 = scmp.le.s32.totalorder 2, %s11
      // Predicated region
      $region45: #{decoder_block.16} parent=5 // pred_check
        %p331 = pneg %p330
      $region46: #{decoder_block.16} parent=5 // pred_check_branch
        %333 = sbr.rel (%p331) target = $region48
      $region47: #{decoder_block.16} parent=5 // pred_region
        %s334 = ssub.s32 %s11, 2
        // Predicated region
        $region49: #{decoder_block.16} parent=47 // pred_check
          %p335 = pneg %p129
        $region50: #{decoder_block.16} parent=47 // pred_check_branch
          %337 = sbr.rel (%p335) target = $region52
        $region51: #{decoder_block.16} parent=47 // pred_region
          %p338 = scmp.lt.s32.totalorder %s17, 1
          %s339 = scalar_select %p338, %s17, 1
          %s340 = smul.addr %s339, 8
          %s341 = scalar_lea.vmem %s4, %s340
        $region52: #{decoder_block.16} parent=47 // pred_fallthru
          _
      $region48: #{decoder_block.16} parent=5 // pred_fallthru
        _
    $region6: #{decoder_block.16} parent=1 // loop_footer
      %s15 = sadd.s32 1, %s11
    $region7: #{decoder_block.16} parent=1 // loop_footer_branch
      %10 = sbr.rel target = $region3
    $region8: #{decoder_block.16} parent=1 // loop_exit
      _
    %342 = vsyncpa [#allocation3], 1
    %s343 = scalar_lea.sflag [#allocation3], 1
    %344 = vsyncpa %s343, 1

// kernel: decoder_block.13
$region0: #{decoder_block.13}
  #allocation0 [shape = 'u32[]', space=smem, size = 0x4, offset = 0x4, fixed_abs, tag = 'smem constant byte address 0x4 - core index']
  #allocation1 [shape = 'u32[144,128]{1,0:T(1,128)}', space=vmem, size = 0x12000, scoped, tag = 'internal scratch']
  %s0 = inlined_call_operand.vmem [shape: f32[16,64], index: 0, kind: input, shape index: {}]
  %s1 = inlined_call_operand.vmem [shape: bf16[64,64], index: 1, kind: input, shape index: {}]
  %s2 = inlined_call_operand.vmem [shape: f32[1,64], index: 2, kind: input, shape index: {}]
  %s3 = inlined_call_operand.vmem [shape: bf16[64,64], index: 3, kind: input, shape index: {}]
  %s4 = inlined_call_operand.vmem [shape: f32[1,64], index: 4, kind: input, shape index: {}]
  %s5 = inlined_call_operand.vmem [shape: f32[16,64], index: 5, kind: output, shape index: {0}]
  %s6 = inlined_call_operand.vmem [shape: f32[16,64], index: 6, kind: output, shape index: {1}]
  %7 = xla_tuple %s5, %s6
  %s8 = sld [smem:[#allocation0]]
  $region61: #{decoder_block.13} parent=0
    _
  %s10 = ssub.s32 1, %s8
  %s11 = scalar_select 0, %s10, %s8
  loop: start=0, step=1, limit=4
  $region2: #{decoder_block.13} parent=0 // loop_pre_header
    _
  $region3: #{decoder_block.13} parent=0 // loop_header
    %s13 = sphi 0, %s17
    %p14 = scmp.ge.s32.totalorder %s13, 4
    %s23 = sphi 0, %s25
    %s26 = sphi 0, %s23
    %s27 = sphi 0, %s26
    %s43 = sphi 0, %s27
    %s47 = sphi 0, %s47
    %s49 = sphi 0, %s47
    %s50 = sphi 0, %s49
    %s64 = sphi 0, %s50
    %s68 = sphi 0, %s68
    %s70 = sphi 0, %s68
    %s71 = sphi 0, %s70
    %s85 = sphi 0, %s71
    %s89 = sphi 0, %s89
    %s91 = sphi 0, %s89
    %s92 = sphi 0, %s91
    %s106 = sphi 0, %s92
    %s110 = sphi 0, %s110
    %s112 = sphi 0, %s110
    %s113 = sphi 0, %s112
    %s127 = sphi 0, %s113
    %s133 = sphi 0, %s135
    %s136 = sphi 0, %s133
    %s137 = sphi 0, %s136
    %s153 = sphi 0, %s137
    %s159 = sphi 0, %s161
    %s162 = sphi 0, %s159
    %s163 = sphi 0, %s162
    %s179 = sphi 0, %s163
  $region4: #{decoder_block.13} parent=0 // loop_header_branch
    %16 = sbr.rel (%p14) target = $region8
  $region5: #{decoder_block.13} parent=0 // loop_body
    %s18 = ssub.s32 %s13, 1
    %s19 = ssub.s32 %s13, 2
    %s20 = sadd.s32 %s13, 1
    %s21 = ssub.s32 %s13, %s20
    %p22 = scmp.eq.s32.totalorder %s21, 0
    %s24 = sadd.s32 %s23, 1
    %s25 = scalar_select %p22, %s23, %s24
    %p28 = pneg %p22
    %p29 = scmp.eq.s32.totalorder %s13, 1
    %p30 = por %p28, %p29
    %p31 = scmp.ne.s32.totalorder %s23, %s26
    %p32 = scmp.eq.s32.totalorder %s13, 0
    %p33 = por %p31, %p32
    %p34 = scmp.ne.s32.totalorder %s23, %s26
    %p35 = scmp.eq.s32.totalorder %s18, 1
    %p36 = por %p34, %p35
    %p37 = scmp.ne.s32.totalorder %s26, %s27
    %p38 = scmp.eq.s32.totalorder %s18, 0
    %p39 = por %p37, %p38
    %p40 = scmp.ne.s32.totalorder %s26, %s27
    %p41 = scmp.eq.s32.totalorder %s19, 1
    %p42 = por %p40, %p41
    %p44 = scmp.ne.s32.totalorder %s27, %s43
    %p45 = scmp.eq.s32.totalorder %s19, 0
    %p46 = por %p44, %p45
    %s48 = sadd.s32 %s47, 1
    %p51 = scmp.eq.s32.totalorder %s13, 1
    %p52 = scmp.ne.s32.totalorder %s47, %s49
    %p53 = scmp.eq.s32.totalorder %s13, 0
    %p54 = por %p52, %p53
    %p55 = scmp.ne.s32.totalorder %s47, %s49
    %p56 = scmp.eq.s32.totalorder %s18, 1
    %p57 = por %p55, %p56
    %p58 = scmp.ne.s32.totalorder %s49, %s50
    %p59 = scmp.eq.s32.totalorder %s18, 0
    %p60 = por %p58, %p59
    %p61 = scmp.ne.s32.totalorder %s49, %s50
    %p62 = scmp.eq.s32.totalorder %s19, 1
    %p63 = por %p61, %p62
    %p65 = scmp.ne.s32.totalorder %s50, %s64
    %p66 = scmp.eq.s32.totalorder %s19, 0
    %p67 = por %p65, %p66
    %s69 = sadd.s32 %s68, 1
    %p72 = scmp.eq.s32.totalorder %s13, 1
    %p73 = scmp.ne.s32.totalorder %s68, %s70
    %p74 = scmp.eq.s32.totalorder %s13, 0
    %p75 = por %p73, %p74
    %p76 = scmp.ne.s32.totalorder %s68, %s70
    %p77 = scmp.eq.s32.totalorder %s18, 1
    %p78 = por %p76, %p77
    %p79 = scmp.ne.s32.totalorder %s70, %s71
    %p80 = scmp.eq.s32.totalorder %s18, 0
    %p81 = por %p79, %p80
    %p82 = scmp.ne.s32.totalorder %s70, %s71
    %p83 = scmp.eq.s32.totalorder %s19, 1
    %p84 = por %p82, %p83
    %p86 = scmp.ne.s32.totalorder %s71, %s85
    %p87 = scmp.eq.s32.totalorder %s19, 0
    %p88 = por %p86, %p87
    %s90 = sadd.s32 %s89, 1
    %p93 = scmp.eq.s32.totalorder %s13, 1
    %p94 = scmp.ne.s32.totalorder %s89, %s91
    %p95 = scmp.eq.s32.totalorder %s13, 0
    %p96 = por %p94, %p95
    %p97 = scmp.ne.s32.totalorder %s89, %s91
    %p98 = scmp.eq.s32.totalorder %s18, 1
    %p99 = por %p97, %p98
    %p100 = scmp.ne.s32.totalorder %s91, %s92
    %p101 = scmp.eq.s32.totalorder %s18, 0
    %p102 = por %p100, %p101
    %p103 = scmp.ne.s32.totalorder %s91, %s92
    %p104 = scmp.eq.s32.totalorder %s19, 1
    %p105 = por %p103, %p104
    %p107 = scmp.ne.s32.totalorder %s92, %s106
    %p108 = scmp.eq.s32.totalorder %s19, 0
    %p109 = por %p107, %p108
    %s111 = sadd.s32 %s110, 1
    %p114 = scmp.eq.s32.totalorder %s13, 1
    %p115 = scmp.ne.s32.totalorder %s110, %s112
    %p116 = scmp.eq.s32.totalorder %s13, 0
    %p117 = por %p115, %p116
    %p118 = scmp.ne.s32.totalorder %s110, %s112
    %p119 = scmp.eq.s32.totalorder %s18, 1
    %p120 = por %p118, %p119
    %p121 = scmp.ne.s32.totalorder %s112, %s113
    %p122 = scmp.eq.s32.totalorder %s18, 0
    %p123 = por %p121, %p122
    %p124 = scmp.ne.s32.totalorder %s112, %s113
    %p125 = scmp.eq.s32.totalorder %s19, 1
    %p126 = por %p124, %p125
    %p128 = scmp.ne.s32.totalorder %s113, %s127
    %p129 = scmp.eq.s32.totalorder %s19, 0
    %p130 = por %p128, %p129
    %s131 = ssub.s32 %s13, %s20
    %p132 = scmp.eq.s32.totalorder %s131, 0
    %s134 = sadd.s32 %s133, 1
    %s135 = scalar_select %p132, %s133, %s134
    %p138 = pneg %p132
    %p139 = scmp.eq.s32.totalorder %s13, 1
    %p140 = por %p138, %p139
    %p141 = scmp.ne.s32.totalorder %s133, %s136
    %p142 = scmp.eq.s32.totalorder %s13, 0
    %p143 = por %p141, %p142
    %p144 = scmp.ne.s32.totalorder %s133, %s136
    %p145 = scmp.eq.s32.totalorder %s18, 1
    %p146 = por %p144, %p145
    %p147 = scmp.ne.s32.totalorder %s136, %s137
    %p148 = scmp.eq.s32.totalorder %s18, 0
    %p149 = por %p147, %p148
    %p150 = scmp.ne.s32.totalorder %s136, %s137
    %p151 = scmp.eq.s32.totalorder %s19, 1
    %p152 = por %p150, %p151
    %p154 = scmp.ne.s32.totalorder %s137, %s153
    %p155 = scmp.eq.s32.totalorder %s19, 0
    %p156 = por %p154, %p155
    %s157 = ssub.s32 %s13, %s20
    %p158 = scmp.eq.s32.totalorder %s157, 0
    %s160 = sadd.s32 %s159, 1
    %s161 = scalar_select %p158, %s159, %s160
    %p164 = pneg %p158
    %p165 = scmp.eq.s32.totalorder %s13, 1
    %p166 = por %p164, %p165
    %p167 = scmp.ne.s32.totalorder %s159, %s162
    %p168 = scmp.eq.s32.totalorder %s13, 0
    %p169 = por %p167, %p168
    %p170 = scmp.ne.s32.totalorder %s159, %s162
    %p171 = scmp.eq.s32.totalorder %s18, 1
    %p172 = por %p170, %p171
    %p173 = scmp.ne.s32.totalorder %s162, %s163
    %p174 = scmp.eq.s32.totalorder %s18, 0
    %p175 = por %p173, %p174
    %p176 = scmp.ne.s32.totalorder %s162, %s163
    %p177 = scmp.eq.s32.totalorder %s19, 1
    %p178 = por %p176, %p177
    %p180 = scmp.ne.s32.totalorder %s163, %s179
    %p181 = scmp.eq.s32.totalorder %s19, 0
    %p182 = por %p180, %p181
    %p183 = scmp.le.s32.totalorder 1, %s13
    %p184 = scmp.lt.s32.totalorder %s13, 3
    %p185 = pnand %p183, %p184
    %p186 = pneg %p185
    // Predicated region
    $region9: #{decoder_block.13} parent=5 // pred_check
      _
    $region10: #{decoder_block.13} parent=5 // pred_check_branch
      %188 = sbr.rel (%p185) target = $region12
    $region11: #{decoder_block.13} parent=5 // pred_region
      %s189 = ssub.s32 %s13, 1
      // Predicated region
      $region13: #{decoder_block.13} parent=11 // pred_check
        %p190 = pneg %p60
      $region14: #{decoder_block.13} parent=11 // pred_check_branch
        %192 = sbr.rel (%p190) target = $region16
      $region15: #{decoder_block.13} parent=11 // pred_region
        _
      $region16: #{decoder_block.13} parent=11 // pred_fallthru
        _
      // Predicated region
      $region17: #{decoder_block.13} parent=11 // pred_check
        %p193 = pneg %p81
      $region18: #{decoder_block.13} parent=11 // pred_check_branch
        %195 = sbr.rel (%p193) target = $region20
      $region19: #{decoder_block.13} parent=11 // pred_region
        _
      $region20: #{decoder_block.13} parent=11 // pred_fallthru
        _
      // Predicated region
      $region21: #{decoder_block.13} parent=11 // pred_check
        %p196 = pneg %p102
      $region22: #{decoder_block.13} parent=11 // pred_check_branch
        %198 = sbr.rel (%p196) target = $region24
      $region23: #{decoder_block.13} parent=11 // pred_region
        _
      $region24: #{decoder_block.13} parent=11 // pred_fallthru
        _
      // Predicated region
      $region25: #{decoder_block.13} parent=11 // pred_check
        %p199 = pneg %p123
      $region26: #{decoder_block.13} parent=11 // pred_check_branch
        %201 = sbr.rel (%p199) target = $region28
      $region27: #{decoder_block.13} parent=11 // pred_region
        _
      $region28: #{decoder_block.13} parent=11 // pred_fallthru
        _
    $region12: #{decoder_block.13} parent=5 // pred_fallthru
      _
    %p202 = scmp.lt.s32.totalorder %s13, 2
    // Predicated region
    $region29: #{decoder_block.13} parent=5 // pred_check
      %p203 = pneg %p202
    $region30: #{decoder_block.13} parent=5 // pred_check_branch
      %205 = sbr.rel (%p203) target = $region32
    $region31: #{decoder_block.13} parent=5 // pred_region
      // Predicated region
      $region33: #{decoder_block.13} parent=31 // pred_check
        %p206 = pneg %p33
      $region34: #{decoder_block.13} parent=31 // pred_check_branch
        %208 = sbr.rel (%p206) target = $region36
      $region35: #{decoder_block.13} parent=31 // pred_region
        %p209 = scmp.lt.s32.totalorder %s13, 1
        %s210 = scalar_select %p209, %s13, 1
        %s211 = smul.addr %s210, 8
        %s212 = scalar_lea.vmem %s0, %s211
      $region36: #{decoder_block.13} parent=31 // pred_fallthru
        _
    $region32: #{decoder_block.13} parent=5 // pred_fallthru
      _
    %p213 = scmp.le.s32.totalorder 1, %s13
    %p214 = scmp.lt.s32.totalorder %s13, 3
    %p215 = pnand %p213, %p214
    %p216 = pneg %p215
    // Predicated region
    $region37: #{decoder_block.13} parent=5 // pred_check
      _
    $region38: #{decoder_block.13} parent=5 // pred_check_branch
      %218 = sbr.rel (%p215) target = $region40
    $region39: #{decoder_block.13} parent=5 // pred_region
      %s219 = ssub.s32 %s13, 1
      %p220 = scmp.lt.s32.totalorder %s18, 1
      %s221 = scalar_select %p220, %s18, 1
      %s222 = smul.addr %s221, 8
      %s223 = scalar_lea.vmem %s0, %s222
      %p224 = pneg %p39
      %p225 = pneg %p36
      %p226 = pneg %p60
      %p227 = pneg %p57
      %p228 = pneg %p81
      %p229 = pneg %p78
      %p230 = pneg %p102
      %p231 = pneg %p99
      %p232 = pneg %p123
      %p233 = pneg %p120
      %p234 = pneg %p149
      %p235 = pneg %p146
      %p236 = scmp.lt.s32.totalorder %s18, 1
      %s237 = scalar_select %p236, %s18, 1
      %s238 = smul.addr %s237, 8
      %s239 = scalar_lea.vmem %s5, %s238
      %p240 = pneg %p175
      %p241 = pneg %p172
      %p242 = scmp.lt.s32.totalorder %s18, 1
      %s243 = scalar_select %p242, %s18, 1
      %s244 = smul.addr %s243, 8
      %s245 = scalar_lea.vmem %s6, %s244
      %p246 = scmp.lt.s32.totalorder %s18, 1
      %s247 = scalar_select %p246, %s18, 1
      %s248 = smul.addr %s247, 8
      %s249 = scalar_lea.vmem %s0, %s248
      %p250 = scmp.lt.s32.totalorder %s18, 1
      %s251 = scalar_select %p250, %s18, 1
      %s252 = smul.addr %s251, 8
      %s253 = scalar_lea.vmem %s5, %s252
      %p254 = scmp.lt.s32.totalorder %s18, 1
      %s255 = scalar_select %p254, %s18, 1
      %s256 = smul.addr %s255, 8
      %s257 = scalar_lea.vmem %s6, %s256
      %v259 = vld [vmem:[%s249] sm:$0xff]
      %v260 = vpack.c.bf16 %v259, %v259
      %v261 = vld [vmem:[%s1] sm:$0xf]
      %v262 = vld [vmem:[%s1 + $0x4] sm:$0xf]
      %v263 = vld [vmem:[%s1 + $0x8] sm:$0xf]
      %v264 = vld [vmem:[%s1 + $0xc] sm:$0xf]
      %v265 = vld [vmem:[%s1 + $0x10] sm:$0xf]
      %v266 = vld [vmem:[%s1 + $0x14] sm:$0xf]
      %v267 = vld [vmem:[%s1 + $0x18] sm:$0xf]
      %v268 = vld [vmem:[%s1 + $0x1c] sm:$0xf]
      %v269 = vld [vmem:[%s2] sm:$0x1]
      %v271 = vlaneseq
      %v272 = vshrl.u32 %v271, 7
      %v273 = vsub.s32 0, %v272
      %v274 = vrot.slane %v269, %v273
      %v284 = vunpack.c.l.b16 %v261
      %v285 = vunpack.c.l.b16 %v262
      %v286 = vunpack.c.l.b16 %v263
      %v287 = vunpack.c.l.b16 %v264
      %v288 = vunpack.c.l.b16 %v265
      %v289 = vunpack.c.l.b16 %v266
      %v290 = vunpack.c.l.b16 %v267
      %v291 = vunpack.c.l.b16 %v268
      %v292 = vpack.c.b16 %v285, %v284
      %v293 = vpack.c.b16 %v287, %v286
      %v294 = vpack.c.b16 %v289, %v288
      %v295 = vpack.c.b16 %v291, %v290
      %vm300 = vcmask 523264
      %v302 = vsel %vm300, %v260, 0
      %304 = vmatprep.subr.bf16.mxu0 0
      %305 = vmatpush1.bf16.msra.mxu0 0
      %306 = vmatprep.subr.bf16.mxu0 0
      %307 = vmatpush1.bf16.msra.mxu0 0
      %308 = vmatprep.subr.bf16.mxu0 0
      %309 = vmatpush1.bf16.msra.mxu0 0
      %310 = vmatprep.subr.bf16.mxu0 0
      %311 = vmatpush1.bf16.msra.mxu0 0
      %312 = vmatprep.subr.bf16.mxu0 0
      %313 = vmatpush1.bf16.msra.mxu0 %v295
      %314 = vmatprep.subr.bf16.mxu0 0
      %315 = vmatpush1.bf16.msra.mxu0 %v294
      %316 = vmatprep.subr.bf16.mxu0 0
      %317 = vmatpush1.bf16.msra.mxu0 %v293
      %318 = vmatprep.subr.bf16.mxu0 0
      %319 = vmatpush1.bf16.msra.mxu0 %v292
      %320 = vmatprep.subr.bf16.mxu0 0
      %321 = vmatpush2.bf16.msra.mxu0 0
      %322 = vmatprep.subr.bf16.mxu0 0
      %323 = vmatpush2.bf16.msra.mxu0 0
      %324 = vmatprep.subr.bf16.mxu0 0
      %325 = vmatpush2.bf16.msra.mxu0 0
      %326 = vmatprep.subr.bf16.mxu0 0
      %327 = vmatpush2.bf16.msra.mxu0 0
      %328 = vmatprep.subr.bf16.mxu0 0
      %329 = vmatpush2.bf16.msra.mxu0 0
      %330 = vmatprep.subr.bf16.mxu0 0
      %331 = vmatpush2.bf16.msra.mxu0 0
      %332 = vmatprep.subr.bf16.mxu0 0
      %333 = vmatpush2.bf16.msra.mxu0 0
      %334 = vmatprep.subr.bf16.mxu0 0
      %335 = vmatpush2.bf16.msra.mxu0 0
      %336 = vmatprep.mubr.bf16.mxu0 0
      %337 = vmatmul.mubr.bf16.gmra.mxu0 %v302
      %v338 = vpop.f32.mrf.mxu0
      %v339 = vadd.f32 %v274, %v338
      %v340 = vpop.f32.mrf.mxu0
      %v341 = vpop.f32.mrf.mxu0
      %v342 = vpop.f32.mrf.mxu0
      %343 = vdwg.mxu0
      %344 = vst.msk [vmem:[%s253] sm:$0xff] %vm300, %v339
      %v345 = vld [vmem:[%s3] sm:$0xf]
      %v346 = vld [vmem:[%s3 + $0x4] sm:$0xf]
      %v347 = vld [vmem:[%s3 + $0x8] sm:$0xf]
      %v348 = vld [vmem:[%s3 + $0xc] sm:$0xf]
      %v349 = vld [vmem:[%s3 + $0x10] sm:$0xf]
      %v350 = vld [vmem:[%s3 + $0x14] sm:$0xf]
      %v351 = vld [vmem:[%s3 + $0x18] sm:$0xf]
      %v352 = vld [vmem:[%s3 + $0x1c] sm:$0xf]
      %v353 = vld [vmem:[%s4] sm:$0x1]
      %v355 = vlaneseq
      %v356 = vshrl.u32 %v355, 7
      %v357 = vsub.s32 0, %v356
      %v358 = vrot.slane %v353, %v357
      %v368 = vunpack.c.l.b16 %v345
      %v369 = vunpack.c.l.b16 %v346
      %v370 = vunpack.c.l.b16 %v347
      %v371 = vunpack.c.l.b16 %v348
      %v372 = vunpack.c.l.b16 %v349
      %v373 = vunpack.c.l.b16 %v350
      %v374 = vunpack.c.l.b16 %v351
      %v375 = vunpack.c.l.b16 %v352
      %v376 = vpack.c.b16 %v369, %v368
      %v377 = vpack.c.b16 %v371, %v370
      %v378 = vpack.c.b16 %v373, %v372
      %v379 = vpack.c.b16 %v375, %v374
      %384 = vmatprep.subr.bf16.mxu0 0
      %385 = vmatpush1.bf16.msra.mxu0 0
      %386 = vmatprep.subr.bf16.mxu0 0
      %387 = vmatpush1.bf16.msra.mxu0 0
      %388 = vmatprep.subr.bf16.mxu0 0
      %389 = vmatpush1.bf16.msra.mxu0 0
      %390 = vmatprep.subr.bf16.mxu0 0
      %391 = vmatpush1.bf16.msra.mxu0 0
      %392 = vmatprep.subr.bf16.mxu0 0
      %393 = vmatpush1.bf16.msra.mxu0 %v379
      %394 = vmatprep.subr.bf16.mxu0 0
      %395 = vmatpush1.bf16.msra.mxu0 %v378
      %396 = vmatprep.subr.bf16.mxu0 0
      %397 = vmatpush1.bf16.msra.mxu0 %v377
      %398 = vmatprep.subr.bf16.mxu0 0
      %399 = vmatpush1.bf16.msra.mxu0 %v376
      %400 = vmatprep.subr.bf16.mxu0 0
      %401 = vmatpush2.bf16.msra.mxu0 0
      %402 = vmatprep.subr.bf16.mxu0 0
      %403 = vmatpush2.bf16.msra.mxu0 0
      %404 = vmatprep.subr.bf16.mxu0 0
      %405 = vmatpush2.bf16.msra.mxu0 0
      %406 = vmatprep.subr.bf16.mxu0 0
      %407 = vmatpush2.bf16.msra.mxu0 0
      %408 = vmatprep.subr.bf16.mxu0 0
      %409 = vmatpush2.bf16.msra.mxu0 0
      %410 = vmatprep.subr.bf16.mxu0 0
      %411 = vmatpush2.bf16.msra.mxu0 0
      %412 = vmatprep.subr.bf16.mxu0 0
      %413 = vmatpush2.bf16.msra.mxu0 0
      %414 = vmatprep.subr.bf16.mxu0 0
      %415 = vmatpush2.bf16.msra.mxu0 0
      %416 = vmatprep.mubr.bf16.mxu0 0
      %417 = vmatmul.mubr.bf16.gmra.mxu0 %v302
      %v418 = vpop.f32.mrf.mxu0
      %v419 = vadd.f32 %v358, %v418
      %v420 = vpop.f32.mrf.mxu0
      %v421 = vpop.f32.mrf.mxu0
      %v422 = vpop.f32.mrf.mxu0
      %423 = vdwg.mxu0
      %424 = vst.msk [vmem:[%s257] sm:$0xff] %vm300, %v419
      %p425 = scmp.lt.s32.totalorder %s18, 1
      %s426 = scalar_select %p425, %s18, 1
      %s427 = smul.addr %s426, 8
      %s428 = scalar_lea.vmem %s5, %s427
      %p429 = scmp.lt.s32.totalorder %s18, 1
      %s430 = scalar_select %p429, %s18, 1
      %s431 = smul.addr %s430, 8
      %s432 = scalar_lea.vmem %s6, %s431
      // Predicated region
      $region41: #{decoder_block.13} parent=39 // pred_check
        %p433 = pneg %p146
      $region42: #{decoder_block.13} parent=39 // pred_check_branch
        %435 = sbr.rel (%p433) target = $region44
      $region43: #{decoder_block.13} parent=39 // pred_region
        _
      $region44: #{decoder_block.13} parent=39 // pred_fallthru
        _
      // Predicated region
      $region45: #{decoder_block.13} parent=39 // pred_check
        %p436 = pneg %p172
      $region46: #{decoder_block.13} parent=39 // pred_check_branch
        %438 = sbr.rel (%p436) target = $region48
      $region47: #{decoder_block.13} parent=39 // pred_region
        _
      $region48: #{decoder_block.13} parent=39 // pred_fallthru
        _
    $region40: #{decoder_block.13} parent=5 // pred_fallthru
      _
    %p439 = scmp.le.s32.totalorder 2, %s13
    // Predicated region
    $region49: #{decoder_block.13} parent=5 // pred_check
      %p440 = pneg %p439
    $region50: #{decoder_block.13} parent=5 // pred_check_branch
      %442 = sbr.rel (%p440) target = $region52
    $region51: #{decoder_block.13} parent=5 // pred_region
      %s443 = ssub.s32 %s13, 2
      // Predicated region
      $region53: #{decoder_block.13} parent=51 // pred_check
        %p444 = pneg %p152
      $region54: #{decoder_block.13} parent=51 // pred_check_branch
        %446 = sbr.rel (%p444) target = $region56
      $region55: #{decoder_block.13} parent=51 // pred_region
        %p447 = scmp.lt.s32.totalorder %s19, 1
        %s448 = scalar_select %p447, %s19, 1
        %s449 = smul.addr %s448, 8
        %s450 = scalar_lea.vmem %s5, %s449
      $region56: #{decoder_block.13} parent=51 // pred_fallthru
        _
      // Predicated region
      $region57: #{decoder_block.13} parent=51 // pred_check
        %p451 = pneg %p178
      $region58: #{decoder_block.13} parent=51 // pred_check_branch
        %453 = sbr.rel (%p451) target = $region60
      $region59: #{decoder_block.13} parent=51 // pred_region
        %p454 = scmp.lt.s32.totalorder %s19, 1
        %s455 = scalar_select %p454, %s19, 1
        %s456 = smul.addr %s455, 8
        %s457 = scalar_lea.vmem %s6, %s456
      $region60: #{decoder_block.13} parent=51 // pred_fallthru
        _
    $region52: #{decoder_block.13} parent=5 // pred_fallthru
      _
  $region6: #{decoder_block.13} parent=0 // loop_footer
    %s17 = sadd.s32 1, %s13
  $region7: #{decoder_block.13} parent=0 // loop_footer_branch
    %12 = sbr.rel target = $region3
  $region8: #{decoder_block.13} parent=0 // loop_exit
    _

// kernel: decoder_block.14
$region0: #{decoder_block.14}
  #allocation0 [shape = 'u32[]', space=smem, size = 0x4, offset = 0x4, fixed_abs, tag = 'smem constant byte address 0x4 - core index']
  #allocation1 [shape = 'u32[144,128]{1,0:T(1,128)}', space=vmem, size = 0x12000, scoped, tag = 'internal scratch']
  %s0 = inlined_call_operand.vmem [shape: f32[2,8,64], index: 0, kind: input, shape index: {}]
  %s1 = inlined_call_operand.vmem [shape: f32[2,8,64], index: 1, kind: input, shape index: {}]
  %s2 = inlined_call_operand.vmem [shape: f32[2,8,64], index: 2, kind: input, shape index: {}]
  %s3 = inlined_call_operand.vmem [shape: s32[2,1,1,8], index: 3, kind: input, shape index: {}]
  %s4 = inlined_call_operand.vmem [shape: f32[2,8,64], index: 4, kind: output, shape index: {}]
  %s5 = sld [smem:[#allocation0]]
  $region49: #{decoder_block.14} parent=0
    _
  %s7 = ssub.s32 1, %s5
  %s8 = scalar_select 0, %s7, %s5
  loop: start=0, step=1, limit=4
  $region2: #{decoder_block.14} parent=0 // loop_pre_header
    _
  $region3: #{decoder_block.14} parent=0 // loop_header
    %s10 = sphi 0, %s14
    %p11 = scmp.ge.s32.totalorder %s10, 4
    %s20 = sphi 0, %s22
    %s23 = sphi 0, %s20
    %s24 = sphi 0, %s23
    %s40 = sphi 0, %s24
    %s46 = sphi 0, %s48
    %s49 = sphi 0, %s46
    %s50 = sphi 0, %s49
    %s66 = sphi 0, %s50
    %s72 = sphi 0, %s74
    %s75 = sphi 0, %s72
    %s76 = sphi 0, %s75
    %s92 = sphi 0, %s76
    %s98 = sphi 0, %s100
    %s101 = sphi 0, %s98
    %s102 = sphi 0, %s101
    %s118 = sphi 0, %s102
    %s124 = sphi 0, %s126
    %s127 = sphi 0, %s124
    %s128 = sphi 0, %s127
    %s144 = sphi 0, %s128
  $region4: #{decoder_block.14} parent=0 // loop_header_branch
    %13 = sbr.rel (%p11) target = $region8
  $region5: #{decoder_block.14} parent=0 // loop_body
    %s15 = ssub.s32 %s10, 1
    %s16 = ssub.s32 %s10, 2
    %s17 = sadd.s32 %s10, 1
    %s18 = ssub.s32 %s10, %s17
    %p19 = scmp.eq.s32.totalorder %s18, 0
    %s21 = sadd.s32 %s20, 1
    %s22 = scalar_select %p19, %s20, %s21
    %p25 = pneg %p19
    %p26 = scmp.eq.s32.totalorder %s10, 1
    %p27 = por %p25, %p26
    %p28 = scmp.ne.s32.totalorder %s20, %s23
    %p29 = scmp.eq.s32.totalorder %s10, 0
    %p30 = por %p28, %p29
    %p31 = scmp.ne.s32.totalorder %s20, %s23
    %p32 = scmp.eq.s32.totalorder %s15, 1
    %p33 = por %p31, %p32
    %p34 = scmp.ne.s32.totalorder %s23, %s24
    %p35 = scmp.eq.s32.totalorder %s15, 0
    %p36 = por %p34, %p35
    %p37 = scmp.ne.s32.totalorder %s23, %s24
    %p38 = scmp.eq.s32.totalorder %s16, 1
    %p39 = por %p37, %p38
    %p41 = scmp.ne.s32.totalorder %s24, %s40
    %p42 = scmp.eq.s32.totalorder %s16, 0
    %p43 = por %p41, %p42
    %s44 = ssub.s32 %s10, %s17
    %p45 = scmp.eq.s32.totalorder %s44, 0
    %s47 = sadd.s32 %s46, 1
    %s48 = scalar_select %p45, %s46, %s47
    %p51 = pneg %p45
    %p52 = scmp.eq.s32.totalorder %s10, 1
    %p53 = por %p51, %p52
    %p54 = scmp.ne.s32.totalorder %s46, %s49
    %p55 = scmp.eq.s32.totalorder %s10, 0
    %p56 = por %p54, %p55
    %p57 = scmp.ne.s32.totalorder %s46, %s49
    %p58 = scmp.eq.s32.totalorder %s15, 1
    %p59 = por %p57, %p58
    %p60 = scmp.ne.s32.totalorder %s49, %s50
    %p61 = scmp.eq.s32.totalorder %s15, 0
    %p62 = por %p60, %p61
    %p63 = scmp.ne.s32.totalorder %s49, %s50
    %p64 = scmp.eq.s32.totalorder %s16, 1
    %p65 = por %p63, %p64
    %p67 = scmp.ne.s32.totalorder %s50, %s66
    %p68 = scmp.eq.s32.totalorder %s16, 0
    %p69 = por %p67, %p68
    %s70 = ssub.s32 %s10, %s17
    %p71 = scmp.eq.s32.totalorder %s70, 0
    %s73 = sadd.s32 %s72, 1
    %s74 = scalar_select %p71, %s72, %s73
    %p77 = pneg %p71
    %p78 = scmp.eq.s32.totalorder %s10, 1
    %p79 = por %p77, %p78
    %p80 = scmp.ne.s32.totalorder %s72, %s75
    %p81 = scmp.eq.s32.totalorder %s10, 0
    %p82 = por %p80, %p81
    %p83 = scmp.ne.s32.totalorder %s72, %s75
    %p84 = scmp.eq.s32.totalorder %s15, 1
    %p85 = por %p83, %p84
    %p86 = scmp.ne.s32.totalorder %s75, %s76
    %p87 = scmp.eq.s32.totalorder %s15, 0
    %p88 = por %p86, %p87
    %p89 = scmp.ne.s32.totalorder %s75, %s76
    %p90 = scmp.eq.s32.totalorder %s16, 1
    %p91 = por %p89, %p90
    %p93 = scmp.ne.s32.totalorder %s76, %s92
    %p94 = scmp.eq.s32.totalorder %s16, 0
    %p95 = por %p93, %p94
    %s96 = ssub.s32 %s10, %s17
    %p97 = scmp.eq.s32.totalorder %s96, 0
    %s99 = sadd.s32 %s98, 1
    %s100 = scalar_select %p97, %s98, %s99
    %p103 = pneg %p97
    %p104 = scmp.eq.s32.totalorder %s10, 1
    %p105 = por %p103, %p104
    %p106 = scmp.ne.s32.totalorder %s98, %s101
    %p107 = scmp.eq.s32.totalorder %s10, 0
    %p108 = por %p106, %p107
    %p109 = scmp.ne.s32.totalorder %s98, %s101
    %p110 = scmp.eq.s32.totalorder %s15, 1
    %p111 = por %p109, %p110
    %p112 = scmp.ne.s32.totalorder %s101, %s102
    %p113 = scmp.eq.s32.totalorder %s15, 0
    %p114 = por %p112, %p113
    %p115 = scmp.ne.s32.totalorder %s101, %s102
    %p116 = scmp.eq.s32.totalorder %s16, 1
    %p117 = por %p115, %p116
    %p119 = scmp.ne.s32.totalorder %s102, %s118
    %p120 = scmp.eq.s32.totalorder %s16, 0
    %p121 = por %p119, %p120
    %s122 = ssub.s32 %s10, %s17
    %p123 = scmp.eq.s32.totalorder %s122, 0
    %s125 = sadd.s32 %s124, 1
    %s126 = scalar_select %p123, %s124, %s125
    %p129 = pneg %p123
    %p130 = scmp.eq.s32.totalorder %s10, 1
    %p131 = por %p129, %p130
    %p132 = scmp.ne.s32.totalorder %s124, %s127
    %p133 = scmp.eq.s32.totalorder %s10, 0
    %p134 = por %p132, %p133
    %p135 = scmp.ne.s32.totalorder %s124, %s127
    %p136 = scmp.eq.s32.totalorder %s15, 1
    %p137 = por %p135, %p136
    %p138 = scmp.ne.s32.totalorder %s127, %s128
    %p139 = scmp.eq.s32.totalorder %s15, 0
    %p140 = por %p138, %p139
    %p141 = scmp.ne.s32.totalorder %s127, %s128
    %p142 = scmp.eq.s32.totalorder %s16, 1
    %p143 = por %p141, %p142
    %p145 = scmp.ne.s32.totalorder %s128, %s144
    %p146 = scmp.eq.s32.totalorder %s16, 0
    %p147 = por %p145, %p146
    %p148 = scmp.le.s32.totalorder 1, %s10
    %p149 = scmp.lt.s32.totalorder %s10, 3
    %p150 = pnand %p148, %p149
    %p151 = pneg %p150
    // Predicated region
    $region9: #{decoder_block.14} parent=5 // pred_check
      _
    $region10: #{decoder_block.14} parent=5 // pred_check_branch
      %153 = sbr.rel (%p150) target = $region12
    $region11: #{decoder_block.14} parent=5 // pred_region
      %s154 = ssub.s32 %s10, 1
    $region12: #{decoder_block.14} parent=5 // pred_fallthru
      _
    %p155 = scmp.lt.s32.totalorder %s10, 2
    // Predicated region
    $region13: #{decoder_block.14} parent=5 // pred_check
      %p156 = pneg %p155
    $region14: #{decoder_block.14} parent=5 // pred_check_branch
      %158 = sbr.rel (%p156) target = $region16
    $region15: #{decoder_block.14} parent=5 // pred_region
      // Predicated region
      $region17: #{decoder_block.14} parent=15 // pred_check
        %p159 = pneg %p30
      $region18: #{decoder_block.14} parent=15 // pred_check_branch
        %161 = sbr.rel (%p159) target = $region20
      $region19: #{decoder_block.14} parent=15 // pred_region
        %p162 = scmp.lt.s32.totalorder %s10, 1
        %s163 = scalar_select %p162, %s10, 1
        %s164 = smul.addr %s163, 8
        %s165 = scalar_lea.vmem %s0, %s164
      $region20: #{decoder_block.14} parent=15 // pred_fallthru
        _
      // Predicated region
      $region21: #{decoder_block.14} parent=15 // pred_check
        %p166 = pneg %p56
      $region22: #{decoder_block.14} parent=15 // pred_check_branch
        %168 = sbr.rel (%p166) target = $region24
      $region23: #{decoder_block.14} parent=15 // pred_region
        %p169 = scmp.lt.s32.totalorder %s10, 1
        %s170 = scalar_select %p169, %s10, 1
        %s171 = smul.addr %s170, 8
        %s172 = scalar_lea.vmem %s1, %s171
      $region24: #{decoder_block.14} parent=15 // pred_fallthru
        _
      // Predicated region
      $region25: #{decoder_block.14} parent=15 // pred_check
        %p173 = pneg %p82
      $region26: #{decoder_block.14} parent=15 // pred_check_branch
        %175 = sbr.rel (%p173) target = $region28
      $region27: #{decoder_block.14} parent=15 // pred_region
        %p176 = scmp.lt.s32.totalorder %s10, 1
        %s177 = scalar_select %p176, %s10, 1
        %s178 = smul.addr %s177, 8
        %s179 = scalar_lea.vmem %s2, %s178
      $region28: #{decoder_block.14} parent=15 // pred_fallthru
        _
      // Predicated region
      $region29: #{decoder_block.14} parent=15 // pred_check
        %p180 = pneg %p108
      $region30: #{decoder_block.14} parent=15 // pred_check_branch
        %182 = sbr.rel (%p180) target = $region32
      $region31: #{decoder_block.14} parent=15 // pred_region
        %p183 = scmp.lt.s32.totalorder %s10, 1
        %s184 = scalar_select %p183, %s10, 1
        %s185 = scalar_lea.vmem %s3, %s184
      $region32: #{decoder_block.14} parent=15 // pred_fallthru
        _
    $region16: #{decoder_block.14} parent=5 // pred_fallthru
      _
    %p186 = scmp.le.s32.totalorder 1, %s10
    %p187 = scmp.lt.s32.totalorder %s10, 3
    %p188 = pnand %p186, %p187
    %p189 = pneg %p188
    // Predicated region
    $region33: #{decoder_block.14} parent=5 // pred_check
      _
    $region34: #{decoder_block.14} parent=5 // pred_check_branch
      %191 = sbr.rel (%p188) target = $region36
    $region35: #{decoder_block.14} parent=5 // pred_region
      %s192 = ssub.s32 %s10, 1
      %p193 = scmp.lt.s32.totalorder %s15, 1
      %s194 = scalar_select %p193, %s15, 1
      %s195 = smul.addr %s194, 8
      %s196 = scalar_lea.vmem %s0, %s195
      %p197 = pneg %p36
      %p198 = pneg %p33
      %p199 = scmp.lt.s32.totalorder %s15, 1
      %s200 = scalar_select %p199, %s15, 1
      %s201 = smul.addr %s200, 8
      %s202 = scalar_lea.vmem %s1, %s201
      %p203 = pneg %p62
      %p204 = pneg %p59
      %p205 = scmp.lt.s32.totalorder %s15, 1
      %s206 = scalar_select %p205, %s15, 1
      %s207 = smul.addr %s206, 8
      %s208 = scalar_lea.vmem %s2, %s207
      %p209 = pneg %p88
      %p210 = pneg %p85
      %p211 = scmp.lt.s32.totalorder %s15, 1
      %s212 = scalar_select %p211, %s15, 1
      %s213 = scalar_lea.vmem %s3, %s212
      %p214 = pneg %p114
      %p215 = pneg %p111
      %p216 = pneg %p140
      %p217 = pneg %p137
      %p218 = scmp.lt.s32.totalorder %s15, 1
      %s219 = scalar_select %p218, %s15, 1
      %s220 = smul.addr %s219, 8
      %s221 = scalar_lea.vmem %s4, %s220
      %p222 = scmp.lt.s32.totalorder %s15, 1
      %s223 = scalar_select %p222, %s15, 1
      %s224 = smul.addr %s223, 8
      %s225 = scalar_lea.vmem %s0, %s224
      %p226 = scmp.lt.s32.totalorder %s15, 1
      %s227 = scalar_select %p226, %s15, 1
      %s228 = smul.addr %s227, 8
      %s229 = scalar_lea.vmem %s1, %s228
      %p230 = scmp.lt.s32.totalorder %s15, 1
      %s231 = scalar_select %p230, %s15, 1
      %s232 = smul.addr %s231, 8
      %s233 = scalar_lea.vmem %s2, %s232
      %p234 = scmp.lt.s32.totalorder %s15, 1
      %s235 = scalar_select %p234, %s15, 1
      %s236 = scalar_lea.vmem %s3, %s235
      %p237 = scmp.lt.s32.totalorder %s15, 1
      %s238 = scalar_select %p237, %s15, 1
      %s239 = smul.addr %s238, 8
      %s240 = scalar_lea.vmem %s4, %s239
      %v242 = vld [vmem:[%s236] sm:$0x1]
      %vm243 = vcmp.eq.s32.totalorder %v242, 0
      %v244 = vld [vmem:[%s225] sm:$0xff]
      %v245 = vmul.f32 %v244, 0.25
      %v246 = vpack.c.bf16 %v245, %v245
      %v247 = vld [vmem:[%s229] sm:$0xff]
      %v248 = vpack.c.bf16 %v247, %v247
      %v249 = vld [vmem:[%s233] sm:$0xff]
      %v250 = vpack.c.bf16 %v249, %v249
      %vm251 = vcmask 130048
      %v253 = vsel %vm251, %v246, 0
      %v256 = vsel %vm251, %v248, 0
      %258 = vmatprep.subr.bf16.mxu0 0
      %259 = vmatpush1.bf16.xpose.msra.mxu0 0
      %260 = vmatprep.subr.bf16.mxu0 0
      %261 = vmatpush1.bf16.xpose.msra.mxu0 0
      %262 = vmatprep.subr.bf16.mxu0 0
      %263 = vmatpush1.bf16.xpose.msra.mxu0 0
      %264 = vmatprep.subr.bf16.mxu0 0
      %265 = vmatpush1.bf16.xpose.msra.mxu0 0
      %266 = vmatprep.subr.bf16.mxu0 0
      %267 = vmatpush1.bf16.xpose.msra.mxu0 0
      %268 = vmatprep.subr.bf16.mxu0 0
      %269 = vmatpush1.bf16.xpose.msra.mxu0 0
      %270 = vmatprep.subr.bf16.mxu0 0
      %271 = vmatpush1.bf16.xpose.msra.mxu0 0
      %272 = vmatprep.subr.bf16.mxu0 0
      %273 = vmatpush1.bf16.xpose.msra.mxu0 %v256
      %274 = vmatprep.subr.bf16.mxu0 0
      %275 = vmatpush2.bf16.xpose.msra.mxu0 0
      %276 = vmatprep.subr.bf16.mxu0 0
      %277 = vmatpush2.bf16.xpose.msra.mxu0 0
      %278 = vmatprep.subr.bf16.mxu0 0
      %279 = vmatpush2.bf16.xpose.msra.mxu0 0
      %280 = vmatprep.subr.bf16.mxu0 0
      %281 = vmatpush2.bf16.xpose.msra.mxu0 0
      %282 = vmatprep.subr.bf16.mxu0 0
      %283 = vmatpush2.bf16.xpose.msra.mxu0 0
      %284 = vmatprep.subr.bf16.mxu0 0
      %285 = vmatpush2.bf16.xpose.msra.mxu0 0
      %286 = vmatprep.subr.bf16.mxu0 0
      %287 = vmatpush2.bf16.xpose.msra.mxu0 0
      %288 = vmatprep.subr.bf16.mxu0 0
      %289 = vmatpush2.bf16.xpose.msra.mxu0 0
      %290 = vmatprep.mubr.bf16.mxu0 0
      %291 = vmatmul.mubr.bf16.gmra.mxu0 %v253
      %v292 = vpop.f32.mrf.mxu0
      %v293 = vadd.f32 0.0, %v292
      %v294 = vpop.f32.mrf.mxu0
      %v295 = vpop.f32.mrf.mxu0
      %v296 = vpop.f32.mrf.mxu0
      %297 = vdwg.mxu0
      %v298 = vsel %vm243, 1, 0
      %v299 = vlaneseq
      %v300 = vshrl.u32 %v299, 7
      %v301 = vsub.s32 0, %v300
      %v302 = vrot.slane %v298, %v301
      %vm303 = vcmp.eq.s32.totalorder %v302, 1
      %v304 = vsel %vm303, -1e+09, %v293
      %vm305 = vcmask 64512
      %v306 = vsel %vm305, %v304, -inf
      %307 = vmax.xlane.f32.xlu0 %v306
      %v308 = vpop.xlane.xlu0 %307
      %v309 = vsub.f32 %v304, %v308
      %v310 = vmul.f32 %v309, 1.442695
      %v311 = vpow.pop %v310
      %v312 = vsel %vm305, %v311, 0.0
      %313 = vadd.xlane.f32.xlu0 %v312
      %v314 = vpop.xlane.xlu0 %313
      %v315 = vrcp.pop %v314
      %v316 = vpack.c.bf16 %v311, %v311
      %v318 = vsel %vm305, %v316, 0
      %vm320 = vcmask 1043456
      %v322 = vsel %vm320, %v250, 0
      %324 = vmatprep.subr.bf16.mxu0 0
      %325 = vmatpush1.bf16.msra.mxu0 0
      %326 = vmatprep.subr.bf16.mxu0 0
      %327 = vmatpush1.bf16.msra.mxu0 0
      %328 = vmatprep.subr.bf16.mxu0 0
      %329 = vmatpush1.bf16.msra.mxu0 0
      %330 = vmatprep.subr.bf16.mxu0 0
      %331 = vmatpush1.bf16.msra.mxu0 0
      %332 = vmatprep.subr.bf16.mxu0 0
      %333 = vmatpush1.bf16.msra.mxu0 0
      %334 = vmatprep.subr.bf16.mxu0 0
      %335 = vmatpush1.bf16.msra.mxu0 0
      %336 = vmatprep.subr.bf16.mxu0 0
      %337 = vmatpush1.bf16.msra.mxu0 0
      %338 = vmatprep.subr.bf16.mxu0 0
      %339 = vmatpush1.bf16.msra.mxu0 %v322
      %340 = vmatprep.subr.bf16.mxu0 0
      %341 = vmatpush2.bf16.msra.mxu0 0
      %342 = vmatprep.subr.bf16.mxu0 0
      %343 = vmatpush2.bf16.msra.mxu0 0
      %344 = vmatprep.subr.bf16.mxu0 0
      %345 = vmatpush2.bf16.msra.mxu0 0
      %346 = vmatprep.subr.bf16.mxu0 0
      %347 = vmatpush2.bf16.msra.mxu0 0
      %348 = vmatprep.subr.bf16.mxu0 0
      %349 = vmatpush2.bf16.msra.mxu0 0
      %350 = vmatprep.subr.bf16.mxu0 0
      %351 = vmatpush2.bf16.msra.mxu0 0
      %352 = vmatprep.subr.bf16.mxu0 0
      %353 = vmatpush2.bf16.msra.mxu0 0
      %354 = vmatprep.subr.bf16.mxu0 0
      %355 = vmatpush2.bf16.msra.mxu0 0
      %356 = vmatprep.mubr.bf16.mxu0 0
      %357 = vmatmul.mubr.bf16.gmra.mxu0 %v318
      %v358 = vpop.f32.mrf.mxu0
      %v359 = vadd.f32 0.0, %v358
      %v360 = vpop.f32.mrf.mxu0
      %v361 = vpop.f32.mrf.mxu0
      %v362 = vpop.f32.mrf.mxu0
      %363 = vdwg.mxu0
      %v364 = vmul.f32 %v359, %v315
      %365 = vst.msk [vmem:[%s240] sm:$0xff] %vm251, %v364
      %v366 = vld [vmem:[%s225] sm:$0xff]
      %v367 = vmul.f32 %v366, 0.25
      %v368 = vpack.c.bf16 %v367, %v367
      %v369 = vld [vmem:[%s229] sm:$0xff]
      %v370 = vpack.c.bf16 %v369, %v369
      %v371 = vld [vmem:[%s233] sm:$0xff]
      %v372 = vpack.c.bf16 %v371, %v371
      %374 = vrot.lane.b32.xlu0 %v368, 112
      %v375 = vpop.permute.xlu0 %374
      %377 = vrot.lane.b32.xlu0 %v370, 112
      %v378 = vpop.permute.xlu0 %377
      %v380 = vsel %vm251, %v375, 0
      %v383 = vsel %vm251, %v378, 0
      %385 = vmatprep.subr.bf16.mxu0 0
      %386 = vmatpush1.bf16.xpose.msra.mxu0 0
      %387 = vmatprep.subr.bf16.mxu0 0
      %388 = vmatpush1.bf16.xpose.msra.mxu0 0
      %389 = vmatprep.subr.bf16.mxu0 0
      %390 = vmatpush1.bf16.xpose.msra.mxu0 0
      %391 = vmatprep.subr.bf16.mxu0 0
      %392 = vmatpush1.bf16.xpose.msra.mxu0 0
      %393 = vmatprep.subr.bf16.mxu0 0
      %394 = vmatpush1.bf16.xpose.msra.mxu0 0
      %395 = vmatprep.subr.bf16.mxu0 0
      %396 = vmatpush1.bf16.xpose.msra.mxu0 0
      %397 = vmatprep.subr.bf16.mxu0 0
      %398 = vmatpush1.bf16.xpose.msra.mxu0 0
      %399 = vmatprep.subr.bf16.mxu0 0
      %400 = vmatpush1.bf16.xpose.msra.mxu0 %v383
      %401 = vmatprep.subr.bf16.mxu0 0
      %402 = vmatpush2.bf16.xpose.msra.mxu0 0
      %403 = vmatprep.subr.bf16.mxu0 0
      %404 = vmatpush2.bf16.xpose.msra.mxu0 0
      %405 = vmatprep.subr.bf16.mxu0 0
      %406 = vmatpush2.bf16.xpose.msra.mxu0 0
      %407 = vmatprep.subr.bf16.mxu0 0
      %408 = vmatpush2.bf16.xpose.msra.mxu0 0
      %409 = vmatprep.subr.bf16.mxu0 0
      %410 = vmatpush2.bf16.xpose.msra.mxu0 0
      %411 = vmatprep.subr.bf16.mxu0 0
      %412 = vmatpush2.bf16.xpose.msra.mxu0 0
      %413 = vmatprep.subr.bf16.mxu0 0
      %414 = vmatpush2.bf16.xpose.msra.mxu0 0
      %415 = vmatprep.subr.bf16.mxu0 0
      %416 = vmatpush2.bf16.xpose.msra.mxu0 0
      %417 = vmatprep.mubr.bf16.mxu0 0
      %418 = vmatmul.mubr.bf16.gmra.mxu0 %v380
      %v419 = vpop.f32.mrf.mxu0
      %v420 = vadd.f32 0.0, %v419
      %v421 = vpop.f32.mrf.mxu0
      %v422 = vpop.f32.mrf.mxu0
      %v423 = vpop.f32.mrf.mxu0
      %424 = vdwg.mxu0
      %v425 = vsel %vm303, -1e+09, %v420
      %v426 = vsel %vm305, %v425, -inf
      %427 = vmax.xlane.f32.xlu0 %v426
      %v428 = vpop.xlane.xlu0 %427
      %v429 = vsub.f32 %v425, %v428
      %v430 = vmul.f32 %v429, 1.442695
      %v431 = vpow.pop %v430
      %v432 = vsel %vm305, %v431, 0.0
      %433 = vadd.xlane.f32.xlu0 %v432
      %v434 = vpop.xlane.xlu0 %433
      %v435 = vrcp.pop %v434
      %v436 = vpack.c.bf16 %v431, %v431
      %438 = vrot.lane.b32.xlu0 %v372, 112
      %v439 = vpop.permute.xlu0 %438
      %v441 = vsel %vm305, %v436, 0
      %v444 = vsel %vm320, %v439, 0
      %446 = vmatprep.subr.bf16.mxu0 0
      %447 = vmatpush1.bf16.msra.mxu0 0
      %448 = vmatprep.subr.bf16.mxu0 0
      %449 = vmatpush1.bf16.msra.mxu0 0
      %450 = vmatprep.subr.bf16.mxu0 0
      %451 = vmatpush1.bf16.msra.mxu0 0
      %452 = vmatprep.subr.bf16.mxu0 0
      %453 = vmatpush1.bf16.msra.mxu0 0
      %454 = vmatprep.subr.bf16.mxu0 0
      %455 = vmatpush1.bf16.msra.mxu0 0
      %456 = vmatprep.subr.bf16.mxu0 0
      %457 = vmatpush1.bf16.msra.mxu0 0
      %458 = vmatprep.subr.bf16.mxu0 0
      %459 = vmatpush1.bf16.msra.mxu0 0
      %460 = vmatprep.subr.bf16.mxu0 0
      %461 = vmatpush1.bf16.msra.mxu0 %v444
      %462 = vmatprep.subr.bf16.mxu0 0
      %463 = vmatpush2.bf16.msra.mxu0 0
      %464 = vmatprep.subr.bf16.mxu0 0
      %465 = vmatpush2.bf16.msra.mxu0 0
      %466 = vmatprep.subr.bf16.mxu0 0
      %467 = vmatpush2.bf16.msra.mxu0 0
      %468 = vmatprep.subr.bf16.mxu0 0
      %469 = vmatpush2.bf16.msra.mxu0 0
      %470 = vmatprep.subr.bf16.mxu0 0
      %471 = vmatpush2.bf16.msra.mxu0 0
      %472 = vmatprep.subr.bf16.mxu0 0
      %473 = vmatpush2.bf16.msra.mxu0 0
      %474 = vmatprep.subr.bf16.mxu0 0
      %475 = vmatpush2.bf16.msra.mxu0 0
      %476 = vmatprep.subr.bf16.mxu0 0
      %477 = vmatpush2.bf16.msra.mxu0 0
      %478 = vmatprep.mubr.bf16.mxu0 0
      %479 = vmatmul.mubr.bf16.gmra.mxu0 %v441
      %v480 = vpop.f32.mrf.mxu0
      %v481 = vadd.f32 0.0, %v480
      %v482 = vpop.f32.mrf.mxu0
      %v483 = vpop.f32.mrf.mxu0
      %v484 = vpop.f32.mrf.mxu0
      %485 = vdwg.mxu0
      %v486 = vmul.f32 %v481, %v435
      %488 = vrot.lane.b32.xlu0 %v486, 16
      %v489 = vpop.permute.xlu0 %488
      %vm491 = vcmask 261248
      %492 = vst.msk [vmem:[%s240] sm:$0xff] %vm491, %v489
      %v493 = vld [vmem:[%s225] sm:$0xff]
      %v494 = vmul.f32 %v493, 0.25
      %v495 = vpack.c.bf16 %v494, %v494
      %v496 = vld [vmem:[%s229] sm:$0xff]
      %v497 = vpack.c.bf16 %v496, %v496
      %v498 = vld [vmem:[%s233] sm:$0xff]
      %v499 = vpack.c.bf16 %v498, %v498
      %501 = vrot.lane.b32.xlu0 %v495, 96
      %v502 = vpop.permute.xlu0 %501
      %504 = vrot.lane.b32.xlu0 %v497, 96
      %v505 = vpop.permute.xlu0 %504
      %v507 = vsel %vm251, %v502, 0
      %v510 = vsel %vm251, %v505, 0
      %512 = vmatprep.subr.bf16.mxu0 0
      %513 = vmatpush1.bf16.xpose.msra.mxu0 0
      %514 = vmatprep.subr.bf16.mxu0 0
      %515 = vmatpush1.bf16.xpose.msra.mxu0 0
      %516 = vmatprep.subr.bf16.mxu0 0
      %517 = vmatpush1.bf16.xpose.msra.mxu0 0
      %518 = vmatprep.subr.bf16.mxu0 0
      %519 = vmatpush1.bf16.xpose.msra.mxu0 0
      %520 = vmatprep.subr.bf16.mxu0 0
      %521 = vmatpush1.bf16.xpose.msra.mxu0 0
      %522 = vmatprep.subr.bf16.mxu0 0
      %523 = vmatpush1.bf16.xpose.msra.mxu0 0
      %524 = vmatprep.subr.bf16.mxu0 0
      %525 = vmatpush1.bf16.xpose.msra.mxu0 0
      %526 = vmatprep.subr.bf16.mxu0 0
      %527 = vmatpush1.bf16.xpose.msra.mxu0 %v510
      %528 = vmatprep.subr.bf16.mxu0 0
      %529 = vmatpush2.bf16.xpose.msra.mxu0 0
      %530 = vmatprep.subr.bf16.mxu0 0
      %531 = vmatpush2.bf16.xpose.msra.mxu0 0
      %532 = vmatprep.subr.bf16.mxu0 0
      %533 = vmatpush2.bf16.xpose.msra.mxu0 0
      %534 = vmatprep.subr.bf16.mxu0 0
      %535 = vmatpush2.bf16.xpose.msra.mxu0 0
      %536 = vmatprep.subr.bf16.mxu0 0
      %537 = vmatpush2.bf16.xpose.msra.mxu0 0
      %538 = vmatprep.subr.bf16.mxu0 0
      %539 = vmatpush2.bf16.xpose.msra.mxu0 0
      %540 = vmatprep.subr.bf16.mxu0 0
      %541 = vmatpush2.bf16.xpose.msra.mxu0 0
      %542 = vmatprep.subr.bf16.mxu0 0
      %543 = vmatpush2.bf16.xpose.msra.mxu0 0
      %544 = vmatprep.mubr.bf16.mxu0 0
      %545 = vmatmul.mubr.bf16.gmra.mxu0 %v507
      %v546 = vpop.f32.mrf.mxu0
      %v547 = vadd.f32 0.0, %v546
      %v548 = vpop.f32.mrf.mxu0
      %v549 = vpop.f32.mrf.mxu0
      %v550 = vpop.f32.mrf.mxu0
      %551 = vdwg.mxu0
      %v552 = vsel %vm303, -1e+09, %v547
      %v553 = vsel %vm305, %v552, -inf
      %554 = vmax.xlane.f32.xlu0 %v553
      %v555 = vpop.xlane.xlu0 %554
      %v556 = vsub.f32 %v552, %v555
      %v557 = vmul.f32 %v556, 1.442695
      %v558 = vpow.pop %v557
      %v559 = vsel %vm305, %v558, 0.0
      %560 = vadd.xlane.f32.xlu0 %v559
      %v561 = vpop.xlane.xlu0 %560
      %v562 = vrcp.pop %v561
      %v563 = vpack.c.bf16 %v558, %v558
      %565 = vrot.lane.b32.xlu0 %v499, 96
      %v566 = vpop.permute.xlu0 %565
      %v568 = vsel %vm305, %v563, 0
      %v571 = vsel %vm320, %v566, 0
      %573 = vmatprep.subr.bf16.mxu0 0
      %574 = vmatpush1.bf16.msra.mxu0 0
      %575 = vmatprep.subr.bf16.mxu0 0
      %576 = vmatpush1.bf16.msra.mxu0 0
      %577 = vmatprep.subr.bf16.mxu0 0
      %578 = vmatpush1.bf16.msra.mxu0 0
      %579 = vmatprep.subr.bf16.mxu0 0
      %580 = vmatpush1.bf16.msra.mxu0 0
      %581 = vmatprep.subr.bf16.mxu0 0
      %582 = vmatpush1.bf16.msra.mxu0 0
      %583 = vmatprep.subr.bf16.mxu0 0
      %584 = vmatpush1.bf16.msra.mxu0 0
      %585 = vmatprep.subr.bf16.mxu0 0
      %586 = vmatpush1.bf16.msra.mxu0 0
      %587 = vmatprep.subr.bf16.mxu0 0
      %588 = vmatpush1.bf16.msra.mxu0 %v571
      %589 = vmatprep.subr.bf16.mxu0 0
      %590 = vmatpush2.bf16.msra.mxu0 0
      %591 = vmatprep.subr.bf16.mxu0 0
      %592 = vmatpush2.bf16.msra.mxu0 0
      %593 = vmatprep.subr.bf16.mxu0 0
      %594 = vmatpush2.bf16.msra.mxu0 0
      %595 = vmatprep.subr.bf16.mxu0 0
      %596 = vmatpush2.bf16.msra.mxu0 0
      %597 = vmatprep.subr.bf16.mxu0 0
      %598 = vmatpush2.bf16.msra.mxu0 0
      %599 = vmatprep.subr.bf16.mxu0 0
      %600 = vmatpush2.bf16.msra.mxu0 0
      %601 = vmatprep.subr.bf16.mxu0 0
      %602 = vmatpush2.bf16.msra.mxu0 0
      %603 = vmatprep.subr.bf16.mxu0 0
      %604 = vmatpush2.bf16.msra.mxu0 0
      %605 = vmatprep.mubr.bf16.mxu0 0
      %606 = vmatmul.mubr.bf16.gmra.mxu0 %v568
      %v607 = vpop.f32.mrf.mxu0
      %v608 = vadd.f32 0.0, %v607
      %v609 = vpop.f32.mrf.mxu0
      %v610 = vpop.f32.mrf.mxu0
      %v611 = vpop.f32.mrf.mxu0
      %612 = vdwg.mxu0
      %v613 = vmul.f32 %v608, %v562
      %615 = vrot.lane.b32.xlu0 %v613, 32
      %v616 = vpop.permute.xlu0 %615
      %vm618 = vcmask 392448
      %619 = vst.msk [vmem:[%s240] sm:$0xff] %vm618, %v616
      %v620 = vld [vmem:[%s225] sm:$0xff]
      %v621 = vmul.f32 %v620, 0.25
      %v622 = vpack.c.bf16 %v621, %v621
      %v623 = vld [vmem:[%s229] sm:$0xff]
      %v624 = vpack.c.bf16 %v623, %v623
      %v625 = vld [vmem:[%s233] sm:$0xff]
      %v626 = vpack.c.bf16 %v625, %v625
      %628 = vrot.lane.b32.xlu0 %v622, 80
      %v629 = vpop.permute.xlu0 %628
      %631 = vrot.lane.b32.xlu0 %v624, 80
      %v632 = vpop.permute.xlu0 %631
      %v634 = vsel %vm251, %v629, 0
      %v637 = vsel %vm251, %v632, 0
      %639 = vmatprep.subr.bf16.mxu0 0
      %640 = vmatpush1.bf16.xpose.msra.mxu0 0
      %641 = vmatprep.subr.bf16.mxu0 0
      %642 = vmatpush1.bf16.xpose.msra.mxu0 0
      %643 = vmatprep.subr.bf16.mxu0 0
      %644 = vmatpush1.bf16.xpose.msra.mxu0 0
      %645 = vmatprep.subr.bf16.mxu0 0
      %646 = vmatpush1.bf16.xpose.msra.mxu0 0
      %647 = vmatprep.subr.bf16.mxu0 0
      %648 = vmatpush1.bf16.xpose.msra.mxu0 0
      %649 = vmatprep.subr.bf16.mxu0 0
      %650 = vmatpush1.bf16.xpose.msra.mxu0 0
      %651 = vmatprep.subr.bf16.mxu0 0
      %652 = vmatpush1.bf16.xpose.msra.mxu0 0
      %653 = vmatprep.subr.bf16.mxu0 0
      %654 = vmatpush1.bf16.xpose.msra.mxu0 %v637
      %655 = vmatprep.subr.bf16.mxu0 0
      %656 = vmatpush2.bf16.xpose.msra.mxu0 0
      %657 = vmatprep.subr.bf16.mxu0 0
      %658 = vmatpush2.bf16.xpose.msra.mxu0 0
      %659 = vmatprep.subr.bf16.mxu0 0
      %660 = vmatpush2.bf16.xpose.msra.mxu0 0
      %661 = vmatprep.subr.bf16.mxu0 0
      %662 = vmatpush2.bf16.xpose.msra.mxu0 0
      %663 = vmatprep.subr.bf16.mxu0 0
      %664 = vmatpush2.bf16.xpose.msra.mxu0 0
      %665 = vmatprep.subr.bf16.mxu0 0
      %666 = vmatpush2.bf16.xpose.msra.mxu0 0
      %667 = vmatprep.subr.bf16.mxu0 0
      %668 = vmatpush2.bf16.xpose.msra.mxu0 0
      %669 = vmatprep.subr.bf16.mxu0 0
      %670 = vmatpush2.bf16.xpose.msra.mxu0 0
      %671 = vmatprep.mubr.bf16.mxu0 0
      %672 = vmatmul.mubr.bf16.gmra.mxu0 %v634
      %v673 = vpop.f32.mrf.mxu0
      %v674 = vadd.f32 0.0, %v673
      %v675 = vpop.f32.mrf.mxu0
      %v676 = vpop.f32.mrf.mxu0
      %v677 = vpop.f32.mrf.mxu0
      %678 = vdwg.mxu0
      %v679 = vsel %vm303, -1e+09, %v674
      %v680 = vsel %vm305, %v679, -inf
      %681 = vmax.xlane.f32.xlu0 %v680
      %v682 = vpop.xlane.xlu0 %681
      %v683 = vsub.f32 %v679, %v682
      %v684 = vmul.f32 %v683, 1.442695
      %v685 = vpow.pop %v684
      %v686 = vsel %vm305, %v685, 0.0
      %687 = vadd.xlane.f32.xlu0 %v686
      %v688 = vpop.xlane.xlu0 %687
      %v689 = vrcp.pop %v688
      %v690 = vpack.c.bf16 %v685, %v685
      %692 = vrot.lane.b32.xlu0 %v626, 80
      %v693 = vpop.permute.xlu0 %692
      %v695 = vsel %vm305, %v690, 0
      %v698 = vsel %vm320, %v693, 0
      %700 = vmatprep.subr.bf16.mxu0 0
      %701 = vmatpush1.bf16.msra.mxu0 0
      %702 = vmatprep.subr.bf16.mxu0 0
      %703 = vmatpush1.bf16.msra.mxu0 0
      %704 = vmatprep.subr.bf16.mxu0 0
      %705 = vmatpush1.bf16.msra.mxu0 0
      %706 = vmatprep.subr.bf16.mxu0 0
      %707 = vmatpush1.bf16.msra.mxu0 0
      %708 = vmatprep.subr.bf16.mxu0 0
      %709 = vmatpush1.bf16.msra.mxu0 0
      %710 = vmatprep.subr.bf16.mxu0 0
      %711 = vmatpush1.bf16.msra.mxu0 0
      %712 = vmatprep.subr.bf16.mxu0 0
      %713 = vmatpush1.bf16.msra.mxu0 0
      %714 = vmatprep.subr.bf16.mxu0 0
      %715 = vmatpush1.bf16.msra.mxu0 %v698
      %716 = vmatprep.subr.bf16.mxu0 0
      %717 = vmatpush2.bf16.msra.mxu0 0
      %718 = vmatprep.subr.bf16.mxu0 0
      %719 = vmatpush2.bf16.msra.mxu0 0
      %720 = vmatprep.subr.bf16.mxu0 0
      %721 = vmatpush2.bf16.msra.mxu0 0
      %722 = vmatprep.subr.bf16.mxu0 0
      %723 = vmatpush2.bf16.msra.mxu0 0
      %724 = vmatprep.subr.bf16.mxu0 0
      %725 = vmatpush2.bf16.msra.mxu0 0
      %726 = vmatprep.subr.bf16.mxu0 0
      %727 = vmatpush2.bf16.msra.mxu0 0
      %728 = vmatprep.subr.bf16.mxu0 0
      %729 = vmatpush2.bf16.msra.mxu0 0
      %730 = vmatprep.subr.bf16.mxu0 0
      %731 = vmatpush2.bf16.msra.mxu0 0
      %732 = vmatprep.mubr.bf16.mxu0 0
      %733 = vmatmul.mubr.bf16.gmra.mxu0 %v695
      %v734 = vpop.f32.mrf.mxu0
      %v735 = vadd.f32 0.0, %v734
      %v736 = vpop.f32.mrf.mxu0
      %v737 = vpop.f32.mrf.mxu0
      %v738 = vpop.f32.mrf.mxu0
      %739 = vdwg.mxu0
      %v740 = vmul.f32 %v735, %v689
      %742 = vrot.lane.b32.xlu0 %v740, 48
      %v743 = vpop.permute.xlu0 %742
      %vm745 = vcmask 523648
      %746 = vst.msk [vmem:[%s240] sm:$0xff] %vm745, %v743
      %p747 = scmp.lt.s32.totalorder %s15, 1
      %s748 = scalar_select %p747, %s15, 1
      %s749 = smul.addr %s748, 8
      %s750 = scalar_lea.vmem %s4, %s749
      // Predicated region
      $region37: #{decoder_block.14} parent=35 // pred_check
        %p751 = pneg %p137
      $region38: #{decoder_block.14} parent=35 // pred_check_branch
        %753 = sbr.rel (%p751) target = $region40
      $region39: #{decoder_block.14} parent=35 // pred_region
        _
      $region40: #{decoder_block.14} parent=35 // pred_fallthru
        _
    $region36: #{decoder_block.14} parent=5 // pred_fallthru
      _
    %p754 = scmp.le.s32.totalorder 2, %s10
    // Predicated region
    $region41: #{decoder_block.14} parent=5 // pred_check
      %p755 = pneg %p754
    $region42: #{decoder_block.14} parent=5 // pred_check_branch
      %757 = sbr.rel (%p755) target = $region44
    $region43: #{decoder_block.14} parent=5 // pred_region
      %s758 = ssub.s32 %s10, 2
      // Predicated region
      $region45: #{decoder_block.14} parent=43 // pred_check
        %p759 = pneg %p143
      $region46: #{decoder_block.14} parent=43 // pred_check_branch
        %761 = sbr.rel (%p759) target = $region48
      $region47: #{decoder_block.14} parent=43 // pred_region
        %p762 = scmp.lt.s32.totalorder %s16, 1
        %s763 = scalar_select %p762, %s16, 1
        %s764 = smul.addr %s763, 8
        %s765 = scalar_lea.vmem %s4, %s764
      $region48: #{decoder_block.14} parent=43 // pred_fallthru
        _
    $region44: #{decoder_block.14} parent=5 // pred_fallthru
      _
  $region6: #{decoder_block.14} parent=0 // loop_footer
    %s14 = sadd.s32 1, %s10
  $region7: #{decoder_block.14} parent=0 // loop_footer_branch
    %9 = sbr.rel target = $region3
  $region8: #{decoder_block.14} parent=0 // loop_exit
    _

// kernel: decoder_block.17
$region0: #{decoder_block.17}
  #allocation0 [shape = 'u32[]', space=smem, size = 0x4, offset = 0x4, fixed_abs, tag = 'smem constant byte address 0x4 - core index']
  #allocation1 [shape = 'u32[144,128]{1,0:T(1,128)}', space=vmem, size = 0x12000, scoped, tag = 'internal scratch']
  %s0 = inlined_call_operand.vmem [shape: f32[16,128], index: 0, kind: input, shape index: {}]
  %s1 = inlined_call_operand.vmem [shape: bf16[128,64], index: 1, kind: input, shape index: {}]
  %s2 = inlined_call_operand.vmem [shape: f32[1,64], index: 2, kind: input, shape index: {}]
  %s3 = inlined_call_operand.vmem [shape: f32[16,64], index: 3, kind: input, shape index: {}]
  %s4 = inlined_call_operand.hbm [shape: f32[16,64], index: 4, kind: output, shape index: {}]
  %s5 = sld [smem:[#allocation0]]
  $region49: #{decoder_block.17} parent=0
    _
  %s7 = ssub.s32 1, %s5
  %s8 = scalar_select 0, %s7, %s5
  $region1: #{decoder_block.17} parent=0
    #allocation2 [shape = 'u8[8192]{0}', space=vmem, size = 0x2000, scoped, tag = 'output window, operand 0']
    #allocation3 [shape = 's32[2]{0}', space=sflag, size = 0x8, scoped, tag = 'scoped memory for decoder_block.17']
    %9 = vsyncpa [#allocation3], 0
    %s10 = scalar_lea.sflag [#allocation3], 1
    %11 = vsyncpa %s10, 0
    loop: start=0, step=1, limit=4
    $region2: #{decoder_block.17} parent=1 // loop_pre_header
      _
    $region3: #{decoder_block.17} parent=1 // loop_header
      %s13 = sphi 0, %s17
      %p14 = scmp.ge.s32.totalorder %s13, 4
      %s23 = sphi 0, %s25
      %s26 = sphi 0, %s23
      %s27 = sphi 0, %s26
      %s43 = sphi 0, %s27
      %s47 = sphi 0, %s47
      %s49 = sphi 0, %s47
      %s50 = sphi 0, %s49
      %s64 = sphi 0, %s50
      %s68 = sphi 0, %s68
      %s70 = sphi 0, %s68
      %s71 = sphi 0, %s70
      %s85 = sphi 0, %s71
      %s91 = sphi 0, %s93
      %s94 = sphi 0, %s91
      %s95 = sphi 0, %s94
      %s111 = sphi 0, %s95
      %s117 = sphi 0, %s119
      %s120 = sphi 0, %s117
      %s121 = sphi 0, %s120
      %s137 = sphi 0, %s121
    $region4: #{decoder_block.17} parent=1 // loop_header_branch
      %16 = sbr.rel (%p14) target = $region8
    $region5: #{decoder_block.17} parent=1 // loop_body
      %s18 = ssub.s32 %s13, 1
      %s19 = ssub.s32 %s13, 2
      %s20 = sadd.s32 %s13, 1
      %s21 = ssub.s32 %s13, %s20
      %p22 = scmp.eq.s32.totalorder %s21, 0
      %s24 = sadd.s32 %s23, 1
      %s25 = scalar_select %p22, %s23, %s24
      %p28 = pneg %p22
      %p29 = scmp.eq.s32.totalorder %s13, 1
      %p30 = por %p28, %p29
      %p31 = scmp.ne.s32.totalorder %s23, %s26
      %p32 = scmp.eq.s32.totalorder %s13, 0
      %p33 = por %p31, %p32
      %p34 = scmp.ne.s32.totalorder %s23, %s26
      %p35 = scmp.eq.s32.totalorder %s18, 1
      %p36 = por %p34, %p35
      %p37 = scmp.ne.s32.totalorder %s26, %s27
      %p38 = scmp.eq.s32.totalorder %s18, 0
      %p39 = por %p37, %p38
      %p40 = scmp.ne.s32.totalorder %s26, %s27
      %p41 = scmp.eq.s32.totalorder %s19, 1
      %p42 = por %p40, %p41
      %p44 = scmp.ne.s32.totalorder %s27, %s43
      %p45 = scmp.eq.s32.totalorder %s19, 0
      %p46 = por %p44, %p45
      %s48 = sadd.s32 %s47, 1
      %p51 = scmp.eq.s32.totalorder %s13, 1
      %p52 = scmp.ne.s32.totalorder %s47, %s49
      %p53 = scmp.eq.s32.totalorder %s13, 0
      %p54 = por %p52, %p53
      %p55 = scmp.ne.s32.totalorder %s47, %s49
      %p56 = scmp.eq.s32.totalorder %s18, 1
      %p57 = por %p55, %p56
      %p58 = scmp.ne.s32.totalorder %s49, %s50
      %p59 = scmp.eq.s32.totalorder %s18, 0
      %p60 = por %p58, %p59
      %p61 = scmp.ne.s32.totalorder %s49, %s50
      %p62 = scmp.eq.s32.totalorder %s19, 1
      %p63 = por %p61, %p62
      %p65 = scmp.ne.s32.totalorder %s50, %s64
      %p66 = scmp.eq.s32.totalorder %s19, 0
      %p67 = por %p65, %p66
      %s69 = sadd.s32 %s68, 1
      %p72 = scmp.eq.s32.totalorder %s13, 1
      %p73 = scmp.ne.s32.totalorder %s68, %s70
      %p74 = scmp.eq.s32.totalorder %s13, 0
      %p75 = por %p73, %p74
      %p76 = scmp.ne.s32.totalorder %s68, %s70
      %p77 = scmp.eq.s32.totalorder %s18, 1
      %p78 = por %p76, %p77
      %p79 = scmp.ne.s32.totalorder %s70, %s71
      %p80 = scmp.eq.s32.totalorder %s18, 0
      %p81 = por %p79, %p80
      %p82 = scmp.ne.s32.totalorder %s70, %s71
      %p83 = scmp.eq.s32.totalorder %s19, 1
      %p84 = por %p82, %p83
      %p86 = scmp.ne.s32.totalorder %s71, %s85
      %p87 = scmp.eq.s32.totalorder %s19, 0
      %p88 = por %p86, %p87
      %s89 = ssub.s32 %s13, %s20
      %p90 = scmp.eq.s32.totalorder %s89, 0
      %s92 = sadd.s32 %s91, 1
      %s93 = scalar_select %p90, %s91, %s92
      %p96 = pneg %p90
      %p97 = scmp.eq.s32.totalorder %s13, 1
      %p98 = por %p96, %p97
      %p99 = scmp.ne.s32.totalorder %s91, %s94
      %p100 = scmp.eq.s32.totalorder %s13, 0
      %p101 = por %p99, %p100
      %p102 = scmp.ne.s32.totalorder %s91, %s94
      %p103 = scmp.eq.s32.totalorder %s18, 1
      %p104 = por %p102, %p103
      %p105 = scmp.ne.s32.totalorder %s94, %s95
      %p106 = scmp.eq.s32.totalorder %s18, 0
      %p107 = por %p105, %p106
      %p108 = scmp.ne.s32.totalorder %s94, %s95
      %p109 = scmp.eq.s32.totalorder %s19, 1
      %p110 = por %p108, %p109
      %p112 = scmp.ne.s32.totalorder %s95, %s111
      %p113 = scmp.eq.s32.totalorder %s19, 0
      %p114 = por %p112, %p113
      %s115 = ssub.s32 %s13, %s20
      %p116 = scmp.eq.s32.totalorder %s115, 0
      %s118 = sadd.s32 %s117, 1
      %s119 = scalar_select %p116, %s117, %s118
      %p122 = pneg %p116
      %p123 = scmp.eq.s32.totalorder %s13, 1
      %p124 = por %p122, %p123
      %p125 = scmp.ne.s32.totalorder %s117, %s120
      %p126 = scmp.eq.s32.totalorder %s13, 0
      %p127 = por %p125, %p126
      %p128 = scmp.ne.s32.totalorder %s117, %s120
      %p129 = scmp.eq.s32.totalorder %s18, 1
      %p130 = por %p128, %p129
      %p131 = scmp.ne.s32.totalorder %s120, %s121
      %p132 = scmp.eq.s32.totalorder %s18, 0
      %p133 = por %p131, %p132
      %p134 = scmp.ne.s32.totalorder %s120, %s121
      %p135 = scmp.eq.s32.totalorder %s19, 1
      %p136 = por %p134, %p135
      %p138 = scmp.ne.s32.totalorder %s121, %s137
      %p139 = scmp.eq.s32.totalorder %s19, 0
      %p140 = por %p138, %p139
      %p141 = scmp.le.s32.totalorder 1, %s13
      %p142 = scmp.lt.s32.totalorder %s13, 3
      %p143 = pnand %p141, %p142
      %p144 = pneg %p143
      // Predicated region
      $region9: #{decoder_block.17} parent=5 // pred_check
        _
      $region10: #{decoder_block.17} parent=5 // pred_check_branch
        %146 = sbr.rel (%p143) target = $region12
      $region11: #{decoder_block.17} parent=5 // pred_region
        %s147 = ssub.s32 %s13, 1
        // Predicated region
        $region13: #{decoder_block.17} parent=11 // pred_check
          %p148 = pneg %p60
        $region14: #{decoder_block.17} parent=11 // pred_check_branch
          %150 = sbr.rel (%p148) target = $region16
        $region15: #{decoder_block.17} parent=11 // pred_region
          _
        $region16: #{decoder_block.17} parent=11 // pred_fallthru
          _
        // Predicated region
        $region17: #{decoder_block.17} parent=11 // pred_check
          %p151 = pneg %p81
        $region18: #{decoder_block.17} parent=11 // pred_check_branch
          %153 = sbr.rel (%p151) target = $region20
        $region19: #{decoder_block.17} parent=11 // pred_region
          _
        $region20: #{decoder_block.17} parent=11 // pred_fallthru
          _
      $region12: #{decoder_block.17} parent=5 // pred_fallthru
        _
      %p154 = scmp.lt.s32.totalorder %s13, 2
      // Predicated region
      $region21: #{decoder_block.17} parent=5 // pred_check
        %p155 = pneg %p154
      $region22: #{decoder_block.17} parent=5 // pred_check_branch
        %157 = sbr.rel (%p155) target = $region24
      $region23: #{decoder_block.17} parent=5 // pred_region
        // Predicated region
        $region25: #{decoder_block.17} parent=23 // pred_check
          %p158 = pneg %p33
        $region26: #{decoder_block.17} parent=23 // pred_check_branch
          %160 = sbr.rel (%p158) target = $region28
        $region27: #{decoder_block.17} parent=23 // pred_region
          %p161 = scmp.lt.s32.totalorder %s13, 1
          %s162 = scalar_select %p161, %s13, 1
          %s163 = smul.addr %s162, 8
          %s164 = scalar_lea.vmem %s0, %s163
        $region28: #{decoder_block.17} parent=23 // pred_fallthru
          _
        // Predicated region
        $region29: #{decoder_block.17} parent=23 // pred_check
          %p165 = pneg %p101
        $region30: #{decoder_block.17} parent=23 // pred_check_branch
          %167 = sbr.rel (%p165) target = $region32
        $region31: #{decoder_block.17} parent=23 // pred_region
          %p168 = scmp.lt.s32.totalorder %s13, 1
          %s169 = scalar_select %p168, %s13, 1
          %s170 = smul.addr %s169, 8
          %s171 = scalar_lea.vmem %s3, %s170
        $region32: #{decoder_block.17} parent=23 // pred_fallthru
          _
      $region24: #{decoder_block.17} parent=5 // pred_fallthru
        _
      %p172 = scmp.le.s32.totalorder 1, %s13
      %p173 = scmp.lt.s32.totalorder %s13, 3
      %p174 = pnand %p172, %p173
      %p175 = pneg %p174
      // Predicated region
      $region33: #{decoder_block.17} parent=5 // pred_check
        _
      $region34: #{decoder_block.17} parent=5 // pred_check_branch
        %177 = sbr.rel (%p174) target = $region36
      $region35: #{decoder_block.17} parent=5 // pred_region
        %s178 = ssub.s32 %s13, 1
        %p179 = scmp.lt.s32.totalorder %s18, 1
        %s180 = scalar_select %p179, %s18, 1
        %s181 = smul.addr %s180, 8
        %s182 = scalar_lea.vmem %s0, %s181
        %p183 = pneg %p39
        %p184 = pneg %p36
        %p185 = pneg %p60
        %p186 = pneg %p57
        %p187 = pneg %p81
        %p188 = pneg %p78
        %p189 = scmp.lt.s32.totalorder %s18, 1
        %s190 = scalar_select %p189, %s18, 1
        %s191 = smul.addr %s190, 8
        %s192 = scalar_lea.vmem %s3, %s191
        %p193 = pneg %p107
        %p194 = pneg %p104
        %p195 = pneg %p133
        %p196 = pneg %p130
        %s197 = sand.u32 %s120, 1
        %s198 = scalar_lea.sflag [#allocation3], %s197
        %s199 = sand.u32 %s120, 1
        %s200 = smul.addr %s199, 8
        %s201 = scalar_lea.vmem [#allocation2], %s200
        %p202 = scmp.lt.s32.totalorder %s18, 1
        %s203 = scalar_select %p202, %s18, 1
        %s204 = smul.addr %s203, 8
        %s205 = scalar_lea.vmem %s0, %s204
        %p206 = scmp.lt.s32.totalorder %s18, 1
        %s207 = scalar_select %p206, %s18, 1
        %s208 = smul.addr %s207, 8
        %s209 = scalar_lea.vmem %s3, %s208
        %v211 = vld [vmem:[%s205] sm:$0xff]
        %v212 = vpack.c.bf16 %v211, %v211
        %v213 = vld [vmem:[%s1] sm:$0xf]
        %v214 = vld [vmem:[%s1 + $0x4] sm:$0xf]
        %v215 = vld [vmem:[%s1 + $0x8] sm:$0xf]
        %v216 = vld [vmem:[%s1 + $0xc] sm:$0xf]
        %v217 = vld [vmem:[%s1 + $0x10] sm:$0xf]
        %v218 = vld [vmem:[%s1 + $0x14] sm:$0xf]
        %v219 = vld [vmem:[%s1 + $0x18] sm:$0xf]
        %v220 = vld [vmem:[%s1 + $0x1c] sm:$0xf]
        %v221 = vld [vmem:[%s1 + $0x20] sm:$0xf]
        %v222 = vld [vmem:[%s1 + $0x24] sm:$0xf]
        %v223 = vld [vmem:[%s1 + $0x28] sm:$0xf]
        %v224 = vld [vmem:[%s1 + $0x2c] sm:$0xf]
        %v225 = vld [vmem:[%s1 + $0x30] sm:$0xf]
        %v226 = vld [vmem:[%s1 + $0x34] sm:$0xf]
        %v227 = vld [vmem:[%s1 + $0x38] sm:$0xf]
        %v228 = vld [vmem:[%s1 + $0x3c] sm:$0xf]
        %v229 = vld [vmem:[%s2] sm:$0x1]
        %v231 = vlaneseq
        %v232 = vshrl.u32 %v231, 7
        %v233 = vsub.s32 0, %v232
        %v234 = vrot.slane %v229, %v233
        %v252 = vunpack.c.l.b16 %v213
        %v253 = vunpack.c.l.b16 %v214
        %v254 = vunpack.c.l.b16 %v215
        %v255 = vunpack.c.l.b16 %v216
        %v256 = vunpack.c.l.b16 %v217
        %v257 = vunpack.c.l.b16 %v218
        %v258 = vunpack.c.l.b16 %v219
        %v259 = vunpack.c.l.b16 %v220
        %v260 = vunpack.c.l.b16 %v221
        %v261 = vunpack.c.l.b16 %v222
        %v262 = vunpack.c.l.b16 %v223
        %v263 = vunpack.c.l.b16 %v224
        %v264 = vunpack.c.l.b16 %v225
        %v265 = vunpack.c.l.b16 %v226
        %v266 = vunpack.c.l.b16 %v227
        %v267 = vunpack.c.l.b16 %v228
        %v268 = vpack.c.b16 %v253, %v252
        %v269 = vpack.c.b16 %v255, %v254
        %v270 = vpack.c.b16 %v257, %v256
        %v271 = vpack.c.b16 %v259, %v258
        %v272 = vpack.c.b16 %v261, %v260
        %v273 = vpack.c.b16 %v263, %v262
        %v274 = vpack.c.b16 %v265, %v264
        %v275 = vpack.c.b16 %v267, %v266
        %284 = vmatprep.subr.bf16.mxu0 0
        %285 = vmatpush1.bf16.msra.mxu0 %v275
        %286 = vmatprep.subr.bf16.mxu0 0
        %287 = vmatpush1.bf16.msra.mxu0 %v274
        %288 = vmatprep.subr.bf16.mxu0 0
        %289 = vmatpush1.bf16.msra.mxu0 %v273
        %290 = vmatprep.subr.bf16.mxu0 0
        %291 = vmatpush1.bf16.msra.mxu0 %v272
        %292 = vmatprep.subr.bf16.mxu0 0
        %293 = vmatpush1.bf16.msra.mxu0 %v271
        %294 = vmatprep.subr.bf16.mxu0 0
        %295 = vmatpush1.bf16.msra.mxu0 %v270
        %296 = vmatprep.subr.bf16.mxu0 0
        %297 = vmatpush1.bf16.msra.mxu0 %v269
        %298 = vmatprep.subr.bf16.mxu0 0
        %299 = vmatpush1.bf16.msra.mxu0 %v268
        %300 = vmatprep.subr.bf16.mxu0 0
        %301 = vmatpush2.bf16.msra.mxu0 0
        %302 = vmatprep.subr.bf16.mxu0 0
        %303 = vmatpush2.bf16.msra.mxu0 0
        %304 = vmatprep.subr.bf16.mxu0 0
        %305 = vmatpush2.bf16.msra.mxu0 0
        %306 = vmatprep.subr.bf16.mxu0 0
        %307 = vmatpush2.bf16.msra.mxu0 0
        %308 = vmatprep.subr.bf16.mxu0 0
        %309 = vmatpush2.bf16.msra.mxu0 0
        %310 = vmatprep.subr.bf16.mxu0 0
        %311 = vmatpush2.bf16.msra.mxu0 0
        %312 = vmatprep.subr.bf16.mxu0 0
        %313 = vmatpush2.bf16.msra.mxu0 0
        %314 = vmatprep.subr.bf16.mxu0 0
        %315 = vmatpush2.bf16.msra.mxu0 0
        %316 = vmatprep.mubr.bf16.mxu0 0
        %317 = vmatmul.mubr.bf16.gmra.mxu0 %v212
        %v318 = vpop.f32.mrf.mxu0
        %v319 = vadd.f32 %v234, %v318
        %v320 = vpop.f32.mrf.mxu0
        %v321 = vpop.f32.mrf.mxu0
        %v322 = vpop.f32.mrf.mxu0
        %323 = vdwg.mxu0
        %v324 = vld [vmem:[%s209] sm:$0xff]
        %v325 = vadd.f32 %v319, %v324
        %vm326 = vcmask 523264
        %327 = vst.msk [vmem:[%s201] sm:$0xff] %vm326, %v325
        %s328 = sand.u32 %s120, 1
        %s329 = scalar_lea.sflag [#allocation3], %s328
        %s330 = sand.u32 %s120, 1
        %s331 = smul.addr %s330, 8
        %s332 = scalar_lea.vmem [#allocation2], %s331
        // Predicated region
        $region37: #{decoder_block.17} parent=35 // pred_check
          %p333 = pneg %p130
        $region38: #{decoder_block.17} parent=35 // pred_check_branch
          %335 = sbr.rel (%p333) target = $region40
        $region39: #{decoder_block.17} parent=35 // pred_region
          %s337 = ssub.s32 128, 128
          %338 = vsyncadd %s329, %s337
          %s339 = smul.addr %s18, 128
          %s340 = scalar_lea.hbm %s4, %s339
          %s342 = sshll.u32 %s332, 4
          %s343 = int_to_ptr.vmem [resolvable:$true] %s342
          %345 = dma.vmem_to_hbm [thread:$0]  %s343, 128, %s340, %s329
        $region40: #{decoder_block.17} parent=35 // pred_fallthru
          _
      $region36: #{decoder_block.17} parent=5 // pred_fallthru
        _
      %p346 = scmp.le.s32.totalorder 2, %s13
      // Predicated region
      $region41: #{decoder_block.17} parent=5 // pred_check
        %p347 = pneg %p346
      $region42: #{decoder_block.17} parent=5 // pred_check_branch
        %349 = sbr.rel (%p347) target = $region44
      $region43: #{decoder_block.17} parent=5 // pred_region
        %s350 = ssub.s32 %s13, 2
        // Predicated region
        $region45: #{decoder_block.17} parent=43 // pred_check
          %p351 = pneg %p136
        $region46: #{decoder_block.17} parent=43 // pred_check_branch
          %353 = sbr.rel (%p351) target = $region48
        $region47: #{decoder_block.17} parent=43 // pred_region
          %s354 = sand.u32 %s121, 1
          %s355 = scalar_lea.sflag [#allocation3], %s354
          %s356 = sand.u32 %s121, 1
          %s357 = smul.addr %s356, 8
          %s358 = scalar_lea.vmem [#allocation2], %s357
          %359 = dma.done %s355, 128
        $region48: #{decoder_block.17} parent=43 // pred_fallthru
          _
      $region44: #{decoder_block.17} parent=5 // pred_fallthru
        _
    $region6: #{decoder_block.17} parent=1 // loop_footer
      %s17 = sadd.s32 1, %s13
    $region7: #{decoder_block.17} parent=1 // loop_footer_branch
      %12 = sbr.rel target = $region3
    $region8: #{decoder_block.17} parent=1 // loop_exit
      _
    %360 = vsyncpa [#allocation3], 1
    %s361 = scalar_lea.sflag [#allocation3], 1
    %362 = vsyncpa %s361, 1

</llo_original>
